<compile_context>
chip_gen: v5e
topology: v5e:2x2
jax: 0.10.0
libtpu: 0.0.40
codegen_flags: <defaults>
</compile_context>

<pallas_src>
import functools

import jax
import jax.numpy as jnp
import numpy as np
from jax.experimental import pallas as pl
from jax.experimental.pallas import tpu as pltpu

EPS = 1e-5
H1_CHUNK = 512  # hidden-dim chunk for the pipelined MLP head


# ----------------------------------------------------------------------------
# Kernel 1: fused Conv2d(5x5, pad2) + folded-BN bias + ReLU + MaxPool(2,2)
# Inputs are the 4 pooling-phase im2col operands (built by XLA in the wrapper).
# One grid step handles a block of images folded into the matmul column dim.
# ----------------------------------------------------------------------------
def _conv_bn_relu_pool_kernel(cols_ref, w_ref, b_ref, o_ref):
    # cols_ref: (4, K*K*Cin, S_blk)   w_ref: (Cout, K*K*Cin)   b_ref: (Cout, 1)
    w = w_ref[...]
    # 2x2 max-pool == elementwise max over the 4 stride-2 conv phases.
    m = jnp.dot(w, cols_ref[0], preferred_element_type=jnp.float32)
    for p in range(1, 4):
        m = jnp.maximum(m, jnp.dot(w, cols_ref[p], preferred_element_type=jnp.float32))
    # per-channel bias (BN folded) + ReLU; exact since bias is phase-independent
    o_ref[...] = jnp.maximum(m + b_ref[...], 0.0).astype(o_ref.dtype)


def _pick_batch_block(n, cols_per_img):
    """Batch block size: column width must be lane-aligned (mult of 128) unless
    it equals the full array; prefer >= 2 grid steps (megacore) and ~2K-wide
    column blocks."""
    cands = [bb for bb in range(1, n + 1)
             if n % bb == 0 and (bb * cols_per_img) % 128 == 0]
    if not cands:
        return n  # full batch -> block equals full dim, always legal

    def score(bb):
        return (0 if n // bb >= 2 else 1, abs(bb * cols_per_img - 2048))

    return min(cands, key=score)


def conv_bn_relu_pool(cols, w2d, bias, *, n_batch, cols_per_img):
    # cols: (4, K*K*Cin, n_batch*cols_per_img), columns ordered (b, i, j)
    _, kkc, total_s = cols.shape
    cout = w2d.shape[0]
    bb = _pick_batch_block(n_batch, cols_per_img)
    sb = bb * cols_per_img
    return pl.pallas_call(
        _conv_bn_relu_pool_kernel,
        out_shape=jax.ShapeDtypeStruct((cout, total_s), jnp.float32),
        grid=(n_batch // bb,),
        in_specs=[
            pl.BlockSpec((4, kkc, sb), lambda n: (0, 0, n)),
            pl.BlockSpec((cout, kkc), lambda n: (0, 0)),
            pl.BlockSpec((cout, 1), lambda n: (0, 0)),
        ],
        out_specs=pl.BlockSpec((cout, sb), lambda n: (0, n)),
        compiler_params=pltpu.CompilerParams(dimension_semantics=("parallel",)),
    )(cols, w2d, bias.reshape(cout, 1))


def _im2col_pooled_phases(x_nchw, K=5, pad=2):
    """XLA-side patch extraction: the 4 pooling-phase im2col operands for a
    5x5 'same' conv followed by 2x2/2 max-pool.
    Returns (4, K*K*Cin, N*Hh*Wh); rows ordered (ky, kx, ci), cols (b, i, j)."""
    N, Cin, H, W = x_nchw.shape
    Hh, Wh = H // 2, W // 2
    xp = jnp.pad(x_nchw, ((0, 0), (0, 0), (pad, pad), (pad, pad)))
    phases = []
    for di in range(2):
        for dj in range(2):
            slabs = []
            for ky in range(K):
                for kx in range(K):
                    r0, c0 = di + ky, dj + kx
                    slab = xp[:, :, r0::2, c0::2][:, :, :Hh, :Wh]  # (N,Cin,Hh,Wh)
                    slabs.append(slab)
            cols = jnp.stack(slabs, axis=0)            # (K*K, N, Cin, Hh, Wh)
            cols = cols.transpose(0, 2, 1, 3, 4)       # (K*K, Cin, N, Hh, Wh)
            phases.append(cols.reshape(K * K * Cin, N * Hh * Wh))
    return jnp.stack(phases, axis=0)                   # (4, K*K*Cin, N*Hh*Wh)


# ----------------------------------------------------------------------------
# Kernel 2: MLP head Linear(1024->2000) + ReLU + Linear(2000->10),
# pipelined over 512-wide chunks of the hidden dimension; the (N, 10) output
# stays resident in VMEM and accumulates across grid steps.
# ----------------------------------------------------------------------------
def _mlp_kernel(x_ref, w1_ref, b1_ref, w2_ref, b2_ref, o_ref):
    k = pl.program_id(0)

    @pl.when(k == 0)
    def _():
        o_ref[...] = jnp.zeros_like(o_ref)

    h = jnp.dot(x_ref[...], w1_ref[...], preferred_element_type=jnp.float32) + b1_ref[...]
    h = jnp.maximum(h, 0.0)
    o_ref[...] += jnp.dot(h, w2_ref[...], preferred_element_type=jnp.float32)

    @pl.when(k == pl.num_programs(0) - 1)
    def _():
        o_ref[...] += b2_ref[...]


def mlp(x, w1p, b1p, w2p, b2, *, chunk=H1_CHUNK):
    N, D = x.shape
    H1p = w1p.shape[1]
    O = w2p.shape[1]
    assert H1p % chunk == 0 and w2p.shape[0] == H1p and b1p.shape[0] == H1p
    return pl.pallas_call(
        _mlp_kernel,
        out_shape=jax.ShapeDtypeStruct((N, O), jnp.float32),
        grid=(H1p // chunk,),
        in_specs=[
            pl.BlockSpec((N, D), lambda k: (0, 0)),
            pl.BlockSpec((D, chunk), lambda k: (0, k)),
            pl.BlockSpec((1, chunk), lambda k: (0, k)),
            pl.BlockSpec((chunk, O), lambda k: (k, 0)),
            pl.BlockSpec((1, O), lambda k: (0, 0)),
        ],
        out_specs=pl.BlockSpec((N, O), lambda k: (0, 0)),
        compiler_params=pltpu.CompilerParams(dimension_semantics=("arbitrary",)),
    )(x, w1p, b1p.reshape(1, H1p), w2p, b2.reshape(1, O))


# ----------------------------------------------------------------------------
# One-time weight prep: fold BN into conv weights, reshape to (Cout, K*K*Cin),
# zero-pad the FC weights to a chunk-aligned hidden size.
# ----------------------------------------------------------------------------
def _fold_conv_bn(w_oihw, conv_b, gamma, beta, mean, var):
    cout = w_oihw.shape[0]
    scale = gamma / jnp.sqrt(var + EPS)
    # (O, I, Kh, Kw) -> (O, Kh, Kw, I) -> (O, K*K*I); column order (ky, kx, ci)
    w2d = jnp.transpose(w_oihw, (0, 2, 3, 1)).reshape(cout, -1)
    w2d = w2d * scale[:, None]                       # BN scale folded into weights
    bias = (conv_b - mean) * scale + beta
    return w2d.astype(jnp.float32), bias.astype(jnp.float32)


def prepare_params(p):
    c1w, c1b = _fold_conv_bn(p["conv1_w"], p["conv1_b"], p["bn1_gamma"],
                             p["bn1_beta"], p["bn1_mean"], p["bn1_var"])
    c2w, c2b = _fold_conv_bn(p["conv2_w"], p["conv2_b"], p["bn2_gamma"],
                             p["bn2_beta"], p["bn2_mean"], p["bn2_var"])
    H1, D = p["fc1_w"].shape                         # (2000, 1024)
    O = p["fc2_w"].shape[0]                          # 10
    H1p = ((H1 + H1_CHUNK - 1) // H1_CHUNK) * H1_CHUNK   # 2048
    fc1_w = jnp.zeros((D, H1p), jnp.float32).at[:, :H1].set(p["fc1_w"].T)
    fc1_b = jnp.zeros((H1p,), jnp.float32).at[:H1].set(p["fc1_b"])
    fc2_w = jnp.zeros((H1p, O), jnp.float32).at[:H1, :].set(p["fc2_w"].T)
    return {"conv1_w": c1w, "conv1_b": c1b, "conv2_w": c2w, "conv2_b": c2b,
            "fc1_w": fc1_w, "fc1_b": fc1_b, "fc2_w": fc2_w, "fc2_b": p["fc2_b"]}


def net_forward(pp, x_nchw):
    N = x_nchw.shape[0]
    # stage 1: 32x32x3 -> pooled 16x16x6
    cols1 = _im2col_pooled_phases(x_nchw)                               # (4, 75, N*256)
    h1 = conv_bn_relu_pool(cols1, pp["conv1_w"], pp["conv1_b"],
                           n_batch=N, cols_per_img=256)                 # (6, N*256)
    x2 = h1.reshape(6, N, 16, 16).transpose(1, 0, 2, 3)                 # (N, 6, 16, 16)
    # stage 2: 16x16x6 -> pooled 8x8x16
    cols2 = _im2col_pooled_phases(x2)                                   # (4, 150, N*64)
    h2 = conv_bn_relu_pool(cols2, pp["conv2_w"], pp["conv2_b"],
                           n_batch=N, cols_per_img=64)                  # (16, N*64)
    # flatten in PyTorch's (c, h, w) order, then the pipelined MLP head
    flat = h2.reshape(16, N, 64).transpose(1, 0, 2).reshape(N, 16 * 8 * 8)
    return mlp(flat, pp["fc1_w"], pp["fc1_b"], pp["fc2_w"], pp["fc2_b"])


# ----------------------------------------------------------------------------
# Deterministic PyTorch-shaped parameter init and a pure-JAX reference.
# ----------------------------------------------------------------------------
def init_params(key):
    ks = jax.random.split(key, 16)

    def unif(k, shape, fan_in):
        bound = 1.0 / np.sqrt(fan_in)
        return jax.random.uniform(k, shape, jnp.float32, -bound, bound)

    p = {}
    p["conv1_w"] = unif(ks[0], (6, 3, 5, 5), 3 * 25)
    p["conv1_b"] = unif(ks[1], (6,), 3 * 25)
    p["bn1_gamma"] = 1.0 + 0.1 * jax.random.normal(ks[2], (6,), jnp.float32)
    p["bn1_beta"] = 0.1 * jax.random.normal(ks[3], (6,), jnp.float32)
    p["bn1_mean"] = 0.1 * jax.random.normal(ks[4], (6,), jnp.float32)
    p["bn1_var"] = 1.0 + 0.1 * jnp.abs(jax.random.normal(ks[5], (6,), jnp.float32))

    p["conv2_w"] = unif(ks[6], (16, 6, 5, 5), 6 * 25)
    p["conv2_b"] = unif(ks[7], (16,), 6 * 25)
    p["bn2_gamma"] = 1.0 + 0.1 * jax.random.normal(ks[8], (16,), jnp.float32)
    p["bn2_beta"] = 0.1 * jax.random.normal(ks[9], (16,), jnp.float32)
    p["bn2_mean"] = 0.1 * jax.random.normal(ks[10], (16,), jnp.float32)
    p["bn2_var"] = 1.0 + 0.1 * jnp.abs(jax.random.normal(ks[11], (16,), jnp.float32))

    p["fc1_w"] = unif(ks[12], (2000, 1024), 1024)
    p["fc1_b"] = unif(ks[13], (2000,), 1024)
    p["fc2_w"] = unif(ks[14], (10, 2000), 2000)
    p["fc2_b"] = unif(ks[15], (10,), 2000)
    return p


def reference_forward(p, x_nchw):
    def conv(x, w, b):
        y = jax.lax.conv_general_dilated(
            x, w, (1, 1), ((2, 2), (2, 2)),
            dimension_numbers=("NCHW", "OIHW", "NCHW"))
        return y + b[None, :, None, None]

    def bn(x, g, bt, m, v):
        s = g / jnp.sqrt(v + EPS)
        return x * s[None, :, None, None] + (bt - m * s)[None, :, None, None]

    def pool(x):
        return jax.lax.reduce_window(x, -jnp.inf, jax.lax.max,
                                     (1, 1, 2, 2), (1, 1, 2, 2), "VALID")

    h = pool(jnp.maximum(bn(conv(x_nchw, p["conv1_w"], p["conv1_b"]),
                            p["bn1_gamma"], p["bn1_beta"], p["bn1_mean"], p["bn1_var"]), 0.0))
    h = pool(jnp.maximum(bn(conv(h, p["conv2_w"], p["conv2_b"]),
                            p["bn2_gamma"], p["bn2_beta"], p["bn2_mean"], p["bn2_var"]), 0.0))
    flat = h.reshape(x_nchw.shape[0], -1)
    h = jnp.maximum(flat @ p["fc1_w"].T + p["fc1_b"], 0.0)
    return h @ p["fc2_w"].T + p["fc2_b"]


if __name__ == "__main__":
    # 32x32 spatial size is forced by Linear(in_features=1024) after two 2x2 pools.
    x = jax.random.normal(jax.random.PRNGKey(0), (2, 3, 32, 32), jnp.float32)
    params = init_params(jax.random.PRNGKey(1))
    prepared = prepare_params(params)   # one-time weight prep (BN fold, FC padding)

    fwd = jax.jit(net_forward)
    out = jax.block_until_ready(fwd(prepared, x))
    assert out.shape == (2, 10) and out.dtype == jnp.float32

    ref = jax.block_until_ready(reference_forward(params, x))
    np.testing.assert_allclose(np.asarray(out), np.asarray(ref), rtol=1e-3, atol=1e-3)

    print("KERNEL_OK")
</pallas_src>

<mosaic_0001>
module attributes {stable_mosaic.version = 11 : i64} {
  func.func @_conv_bn_relu_pool_kernel(%arg0: i32, %arg1: memref<4x75x256xf32, #tpu.memory_space<vmem>>, %arg2: memref<6x75xf32, #tpu.memory_space<vmem>>, %arg3: memref<6x1xf32, #tpu.memory_space<vmem>>, %arg4: memref<6x256xf32, #tpu.memory_space<vmem>>) attributes {dimension_semantics = [#tpu.dimension_semantics<parallel>], iteration_bounds = array<i64: 2>, scalar_prefetch = 0 : i64, scratch_operands = 0 : i64, tpu.core_type = #tpu.core_type<tc>, window_params = [{transform_indices = @transform_0, window_bounds = array<i64: 4, 75, 256>}, {pipeline_mode = #tpu.pipeline_mode<synchronous>, transform_indices = @transform_1, window_bounds = array<i64: 6, 75>}, {pipeline_mode = #tpu.pipeline_mode<synchronous>, transform_indices = @transform_2, window_bounds = array<i64: 6, 1>}, {transform_indices = @transform_3, window_bounds = array<i64: 6, 256>}]} {
    %c0 = arith.constant 0 : index
    %c0_0 = arith.constant 0 : index
    %0 = vector.load %arg2[%c0, %c0_0] : memref<6x75xf32, #tpu.memory_space<vmem>>, vector<6x75xf32>
    %c0_1 = arith.constant 0 : index
    %c0_2 = arith.constant 0 : index
    %c0_3 = arith.constant 0 : index
    %1 = vector.load %arg1[%c0_1, %c0_2, %c0_3] : memref<4x75x256xf32, #tpu.memory_space<vmem>>, vector<1x75x256xf32>
    %2 = vector.shape_cast %1 : vector<1x75x256xf32> to vector<75x256xf32>
    %cst = arith.constant dense<0.000000e+00> : vector<6x256xf32>
    %3 = tpu.matmul %0, %2, %cst {dimension_numbers = #tpu.dot_dimension_numbers<[1], [0], [0], [1], [0, 0, 1, 1], [], []>} : vector<6x75xf32>, vector<75x256xf32>, vector<6x256xf32> -> vector<6x256xf32>
    %c1 = arith.constant 1 : index
    %c0_4 = arith.constant 0 : index
    %c0_5 = arith.constant 0 : index
    %4 = vector.load %arg1[%c1, %c0_4, %c0_5] : memref<4x75x256xf32, #tpu.memory_space<vmem>>, vector<1x75x256xf32>
    %5 = vector.shape_cast %4 : vector<1x75x256xf32> to vector<75x256xf32>
    %cst_6 = arith.constant dense<0.000000e+00> : vector<6x256xf32>
    %6 = tpu.matmul %0, %5, %cst_6 {dimension_numbers = #tpu.dot_dimension_numbers<[1], [0], [0], [1], [0, 0, 1, 1], [], []>} : vector<6x75xf32>, vector<75x256xf32>, vector<6x256xf32> -> vector<6x256xf32>
    %7 = arith.maximumf %3, %6 : vector<6x256xf32>
    %c2 = arith.constant 2 : index
    %c0_7 = arith.constant 0 : index
    %c0_8 = arith.constant 0 : index
    %8 = vector.load %arg1[%c2, %c0_7, %c0_8] : memref<4x75x256xf32, #tpu.memory_space<vmem>>, vector<1x75x256xf32>
    %9 = vector.shape_cast %8 : vector<1x75x256xf32> to vector<75x256xf32>
    %cst_9 = arith.constant dense<0.000000e+00> : vector<6x256xf32>
    %10 = tpu.matmul %0, %9, %cst_9 {dimension_numbers = #tpu.dot_dimension_numbers<[1], [0], [0], [1], [0, 0, 1, 1], [], []>} : vector<6x75xf32>, vector<75x256xf32>, vector<6x256xf32> -> vector<6x256xf32>
    %11 = arith.maximumf %7, %10 : vector<6x256xf32>
    %c3 = arith.constant 3 : index
    %c0_10 = arith.constant 0 : index
    %c0_11 = arith.constant 0 : index
    %12 = vector.load %arg1[%c3, %c0_10, %c0_11] : memref<4x75x256xf32, #tpu.memory_space<vmem>>, vector<1x75x256xf32>
    %13 = vector.shape_cast %12 : vector<1x75x256xf32> to vector<75x256xf32>
    %cst_12 = arith.constant dense<0.000000e+00> : vector<6x256xf32>
    %14 = tpu.matmul %0, %13, %cst_12 {dimension_numbers = #tpu.dot_dimension_numbers<[1], [0], [0], [1], [0, 0, 1, 1], [], []>} : vector<6x75xf32>, vector<75x256xf32>, vector<6x256xf32> -> vector<6x256xf32>
    %15 = arith.maximumf %11, %14 : vector<6x256xf32>
    %c0_13 = arith.constant 0 : index
    %c0_14 = arith.constant 0 : index
    %16 = vector.load %arg3[%c0_13, %c0_14] : memref<6x1xf32, #tpu.memory_space<vmem>>, vector<6x1xf32>
    %17 = vector.broadcast %16 : vector<6x1xf32> to vector<6x256xf32>
    %18 = arith.addf %15, %17 : vector<6x256xf32>
    %cst_15 = arith.constant 0.000000e+00 : f32
    %19 = vector.broadcast %cst_15 : f32 to vector<6x256xf32>
    %20 = arith.maximumf %18, %19 : vector<6x256xf32>
    %c0_16 = arith.constant 0 : index
    %c0_17 = arith.constant 0 : index
    %21 = vector.load %arg4[%c0_16, %c0_17] : memref<6x256xf32, #tpu.memory_space<vmem>>, vector<6x256xf32>
    tpu.vector_store %arg4[%c0_16, %c0_17], %20 {strides = array<i32>} : memref<6x256xf32, #tpu.memory_space<vmem>>, vector<6x256xf32>,
    return
  }
  func.func @transform_0(%arg0: i32) -> (i32, i32, i32) {
    %c0_i32 = arith.constant 0 : i32
    %c0_i32_0 = arith.constant 0 : i32
    %c0_i32_1 = arith.constant 0 : i32
    return %c0_i32, %c0_i32_0, %arg0 : i32, i32, i32
  }
  func.func @transform_1(%arg0: i32) -> (i32, i32) {
    %c0_i32 = arith.constant 0 : i32
    %c0_i32_0 = arith.constant 0 : i32
    %c0_i32_1 = arith.constant 0 : i32
    return %c0_i32, %c0_i32_0 : i32, i32
  }
  func.func @transform_2(%arg0: i32) -> (i32, i32) {
    %c0_i32 = arith.constant 0 : i32
    %c0_i32_0 = arith.constant 0 : i32
    %c0_i32_1 = arith.constant 0 : i32
    return %c0_i32, %c0_i32_0 : i32, i32
  }
  func.func @transform_3(%arg0: i32) -> (i32, i32) {
    %c0_i32 = arith.constant 0 : i32
    %c0_i32_0 = arith.constant 0 : i32
    return %c0_i32, %arg0 : i32, i32
  }
}

module attributes {stable_mosaic.version = 11 : i64} {
  func.func @_conv_bn_relu_pool_kernel(%arg0: i32, %arg1: memref<4x150x128xf32, #tpu.memory_space<vmem>>, %arg2: memref<16x150xf32, #tpu.memory_space<vmem>>, %arg3: memref<16x1xf32, #tpu.memory_space<vmem>>, %arg4: memref<16x128xf32, #tpu.memory_space<vmem>>) attributes {dimension_semantics = [#tpu.dimension_semantics<parallel>], iteration_bounds = array<i64: 1>, scalar_prefetch = 0 : i64, scratch_operands = 0 : i64, tpu.core_type = #tpu.core_type<tc>, window_params = [{transform_indices = @transform_0, window_bounds = array<i64: 4, 150, 128>}, {pipeline_mode = #tpu.pipeline_mode<synchronous>, transform_indices = @transform_1, window_bounds = array<i64: 16, 150>}, {pipeline_mode = #tpu.pipeline_mode<synchronous>, transform_indices = @transform_2, window_bounds = array<i64: 16, 1>}, {transform_indices = @transform_3, window_bounds = array<i64: 16, 128>}]} {
    %c0 = arith.constant 0 : index
    %c0_0 = arith.constant 0 : index
    %0 = vector.load %arg2[%c0, %c0_0] : memref<16x150xf32, #tpu.memory_space<vmem>>, vector<16x150xf32>
    %c0_1 = arith.constant 0 : index
    %c0_2 = arith.constant 0 : index
    %c0_3 = arith.constant 0 : index
    %1 = vector.load %arg1[%c0_1, %c0_2, %c0_3] : memref<4x150x128xf32, #tpu.memory_space<vmem>>, vector<1x150x128xf32>
    %2 = vector.shape_cast %1 : vector<1x150x128xf32> to vector<150x128xf32>
    %cst = arith.constant dense<0.000000e+00> : vector<16x128xf32>
    %3 = tpu.matmul %0, %2, %cst {dimension_numbers = #tpu.dot_dimension_numbers<[1], [0], [0], [1], [0, 0, 1, 1], [], []>} : vector<16x150xf32>, vector<150x128xf32>, vector<16x128xf32> -> vector<16x128xf32>
    %c1 = arith.constant 1 : index
    %c0_4 = arith.constant 0 : index
    %c0_5 = arith.constant 0 : index
    %4 = vector.load %arg1[%c1, %c0_4, %c0_5] : memref<4x150x128xf32, #tpu.memory_space<vmem>>, vector<1x150x128xf32>
    %5 = vector.shape_cast %4 : vector<1x150x128xf32> to vector<150x128xf32>
    %cst_6 = arith.constant dense<0.000000e+00> : vector<16x128xf32>
    %6 = tpu.matmul %0, %5, %cst_6 {dimension_numbers = #tpu.dot_dimension_numbers<[1], [0], [0], [1], [0, 0, 1, 1], [], []>} : vector<16x150xf32>, vector<150x128xf32>, vector<16x128xf32> -> vector<16x128xf32>
    %7 = arith.maximumf %3, %6 : vector<16x128xf32>
    %c2 = arith.constant 2 : index
    %c0_7 = arith.constant 0 : index
    %c0_8 = arith.constant 0 : index
    %8 = vector.load %arg1[%c2, %c0_7, %c0_8] : memref<4x150x128xf32, #tpu.memory_space<vmem>>, vector<1x150x128xf32>
    %9 = vector.shape_cast %8 : vector<1x150x128xf32> to vector<150x128xf32>
    %cst_9 = arith.constant dense<0.000000e+00> : vector<16x128xf32>
    %10 = tpu.matmul %0, %9, %cst_9 {dimension_numbers = #tpu.dot_dimension_numbers<[1], [0], [0], [1], [0, 0, 1, 1], [], []>} : vector<16x150xf32>, vector<150x128xf32>, vector<16x128xf32> -> vector<16x128xf32>
    %11 = arith.maximumf %7, %10 : vector<16x128xf32>
    %c3 = arith.constant 3 : index
    %c0_10 = arith.constant 0 : index
    %c0_11 = arith.constant 0 : index
    %12 = vector.load %arg1[%c3, %c0_10, %c0_11] : memref<4x150x128xf32, #tpu.memory_space<vmem>>, vector<1x150x128xf32>
    %13 = vector.shape_cast %12 : vector<1x150x128xf32> to vector<150x128xf32>
    %cst_12 = arith.constant dense<0.000000e+00> : vector<16x128xf32>
    %14 = tpu.matmul %0, %13, %cst_12 {dimension_numbers = #tpu.dot_dimension_numbers<[1], [0], [0], [1], [0, 0, 1, 1], [], []>} : vector<16x150xf32>, vector<150x128xf32>, vector<16x128xf32> -> vector<16x128xf32>
    %15 = arith.maximumf %11, %14 : vector<16x128xf32>
    %c0_13 = arith.constant 0 : index
    %c0_14 = arith.constant 0 : index
    %16 = vector.load %arg3[%c0_13, %c0_14] : memref<16x1xf32, #tpu.memory_space<vmem>>, vector<16x1xf32>
    %17 = vector.broadcast %16 : vector<16x1xf32> to vector<16x128xf32>
    %18 = arith.addf %15, %17 : vector<16x128xf32>
    %cst_15 = arith.constant 0.000000e+00 : f32
    %19 = vector.broadcast %cst_15 : f32 to vector<16x128xf32>
    %20 = arith.maximumf %18, %19 : vector<16x128xf32>
    %c0_16 = arith.constant 0 : index
    %c0_17 = arith.constant 0 : index
    %21 = vector.load %arg4[%c0_16, %c0_17] : memref<16x128xf32, #tpu.memory_space<vmem>>, vector<16x128xf32>
    tpu.vector_store %arg4[%c0_16, %c0_17], %20 {strides = array<i32>} : memref<16x128xf32, #tpu.memory_space<vmem>>, vector<16x128xf32>,
    return
  }
  func.func @transform_0(%arg0: i32) -> (i32, i32, i32) {
    %c0_i32 = arith.constant 0 : i32
    %c0_i32_0 = arith.constant 0 : i32
    %c0_i32_1 = arith.constant 0 : i32
    return %c0_i32, %c0_i32_0, %arg0 : i32, i32, i32
  }
  func.func @transform_1(%arg0: i32) -> (i32, i32) {
    %c0_i32 = arith.constant 0 : i32
    %c0_i32_0 = arith.constant 0 : i32
    %c0_i32_1 = arith.constant 0 : i32
    return %c0_i32, %c0_i32_0 : i32, i32
  }
  func.func @transform_2(%arg0: i32) -> (i32, i32) {
    %c0_i32 = arith.constant 0 : i32
    %c0_i32_0 = arith.constant 0 : i32
    %c0_i32_1 = arith.constant 0 : i32
    return %c0_i32, %c0_i32_0 : i32, i32
  }
  func.func @transform_3(%arg0: i32) -> (i32, i32) {
    %c0_i32 = arith.constant 0 : i32
    %c0_i32_0 = arith.constant 0 : i32
    return %c0_i32, %arg0 : i32, i32
  }
}

module attributes {stable_mosaic.version = 11 : i64} {
  func.func @_mlp_kernel(%arg0: i32, %arg1: memref<2x1024xf32, #tpu.memory_space<vmem>>, %arg2: memref<1024x512xf32, #tpu.memory_space<vmem>>, %arg3: memref<1x512xf32, #tpu.memory_space<vmem>>, %arg4: memref<512x10xf32, #tpu.memory_space<vmem>>, %arg5: memref<1x10xf32, #tpu.memory_space<vmem>>, %arg6: memref<2x10xf32, #tpu.memory_space<vmem>>) attributes {dimension_semantics = [#tpu.dimension_semantics<arbitrary>], iteration_bounds = array<i64: 4>, scalar_prefetch = 0 : i64, scratch_operands = 0 : i64, tpu.core_type = #tpu.core_type<tc>, window_params = [{pipeline_mode = #tpu.pipeline_mode<synchronous>, transform_indices = @transform_0, window_bounds = array<i64: 2, 1024>}, {transform_indices = @transform_1, window_bounds = array<i64: 1024, 512>}, {transform_indices = @transform_2, window_bounds = array<i64: 1, 512>}, {transform_indices = @transform_3, window_bounds = array<i64: 512, 10>}, {pipeline_mode = #tpu.pipeline_mode<synchronous>, transform_indices = @transform_4, window_bounds = array<i64: 1, 10>}, {pipeline_mode = #tpu.pipeline_mode<synchronous>, transform_indices = @transform_5, window_bounds = array<i64: 2, 10>}]} {
    %c0_i32 = arith.constant 0 : i32
    %0 = arith.cmpi eq, %arg0, %c0_i32 : i32
    %1 = arith.extui %0 : i1 to i32
    %c0_i32_0 = arith.constant 0 : i32
    %2 = arith.cmpi ne, %1, %c0_i32_0 : i32
    scf.if %2 {
      %cst_15 = arith.constant 0.000000e+00 : f32
      %19 = vector.broadcast %cst_15 : f32 to vector<2x10xf32>
      %c0_16 = arith.constant 0 : index
      %c0_17 = arith.constant 0 : index
      %20 = vector.load %arg6[%c0_16, %c0_17] : memref<2x10xf32, #tpu.memory_space<vmem>>, vector<2x10xf32>
      tpu.vector_store %arg6[%c0_16, %c0_17], %19 {strides = array<i32>} : memref<2x10xf32, #tpu.memory_space<vmem>>, vector<2x10xf32>,
    } else {
    }
    %c0 = arith.constant 0 : index
    %c0_1 = arith.constant 0 : index
    %3 = vector.load %arg1[%c0, %c0_1] : memref<2x1024xf32, #tpu.memory_space<vmem>>, vector<2x1024xf32>
    %c0_2 = arith.constant 0 : index
    %c0_3 = arith.constant 0 : index
    %4 = vector.load %arg2[%c0_2, %c0_3] : memref<1024x512xf32, #tpu.memory_space<vmem>>, vector<1024x512xf32>
    %cst = arith.constant dense<0.000000e+00> : vector<2x512xf32>
    %5 = tpu.matmul %3, %4, %cst {dimension_numbers = #tpu.dot_dimension_numbers<[1], [0], [0], [1], [0, 0, 1, 1], [], []>} : vector<2x1024xf32>, vector<1024x512xf32>, vector<2x512xf32> -> vector<2x512xf32>
    %c0_4 = arith.constant 0 : index
    %c0_5 = arith.constant 0 : index
    %6 = vector.load %arg3[%c0_4, %c0_5] : memref<1x512xf32, #tpu.memory_space<vmem>>, vector<1x512xf32>
    %7 = vector.broadcast %6 : vector<1x512xf32> to vector<2x512xf32>
    %8 = arith.addf %5, %7 : vector<2x512xf32>
    %cst_6 = arith.constant 0.000000e+00 : f32
    %9 = vector.broadcast %cst_6 : f32 to vector<2x512xf32>
    %10 = arith.maximumf %8, %9 : vector<2x512xf32>
    %c0_7 = arith.constant 0 : index
    %c0_8 = arith.constant 0 : index
    %11 = vector.load %arg6[%c0_7, %c0_8] : memref<2x10xf32, #tpu.memory_space<vmem>>, vector<2x10xf32>
    %c0_9 = arith.constant 0 : index
    %c0_10 = arith.constant 0 : index
    %12 = vector.load %arg4[%c0_9, %c0_10] : memref<512x10xf32, #tpu.memory_space<vmem>>, vector<512x10xf32>
    %cst_11 = arith.constant dense<0.000000e+00> : vector<2x10xf32>
    %13 = tpu.matmul %10, %12, %cst_11 {dimension_numbers = #tpu.dot_dimension_numbers<[1], [0], [0], [1], [0, 0, 1, 1], [], []>} : vector<2x512xf32>, vector<512x10xf32>, vector<2x10xf32> -> vector<2x10xf32>
    %14 = arith.addf %11, %13 : vector<2x10xf32>
    %c0_12 = arith.constant 0 : index
    %c0_13 = arith.constant 0 : index
    %15 = vector.load %arg6[%c0_12, %c0_13] : memref<2x10xf32, #tpu.memory_space<vmem>>, vector<2x10xf32>
    tpu.vector_store %arg6[%c0_12, %c0_13], %14 {strides = array<i32>} : memref<2x10xf32, #tpu.memory_space<vmem>>, vector<2x10xf32>,
    %c3_i32 = arith.constant 3 : i32
    %16 = arith.cmpi eq, %arg0, %c3_i32 : i32
    %17 = arith.extui %16 : i1 to i32
    %c0_i32_14 = arith.constant 0 : i32
    %18 = arith.cmpi ne, %17, %c0_i32_14 : i32
    scf.if %18 {
      %c0_15 = arith.constant 0 : index
      %c0_16 = arith.constant 0 : index
      %19 = vector.load %arg6[%c0_15, %c0_16] : memref<2x10xf32, #tpu.memory_space<vmem>>, vector<2x10xf32>
      %c0_17 = arith.constant 0 : index
      %c0_18 = arith.constant 0 : index
      %20 = vector.load %arg5[%c0_17, %c0_18] : memref<1x10xf32, #tpu.memory_space<vmem>>, vector<1x10xf32>
      %21 = vector.broadcast %20 : vector<1x10xf32> to vector<2x10xf32>
      %22 = arith.addf %19, %21 : vector<2x10xf32>
      %c0_19 = arith.constant 0 : index
      %c0_20 = arith.constant 0 : index
      %23 = vector.load %arg6[%c0_19, %c0_20] : memref<2x10xf32, #tpu.memory_space<vmem>>, vector<2x10xf32>
      tpu.vector_store %arg6[%c0_19, %c0_20], %22 {strides = array<i32>} : memref<2x10xf32, #tpu.memory_space<vmem>>, vector<2x10xf32>,
    } else {
    }
    return
  }
  func.func @transform_0(%arg0: i32) -> (i32, i32) {
    %c0_i32 = arith.constant 0 : i32
    %c0_i32_0 = arith.constant 0 : i32
    %c0_i32_1 = arith.constant 0 : i32
    return %c0_i32, %c0_i32_0 : i32, i32
  }
  func.func @transform_1(%arg0: i32) -> (i32, i32) {
    %c0_i32 = arith.constant 0 : i32
    %c0_i32_0 = arith.constant 0 : i32
    return %c0_i32, %arg0 : i32, i32
  }
  func.func @transform_2(%arg0: i32) -> (i32, i32) {
    %c0_i32 = arith.constant 0 : i32
    %c0_i32_0 = arith.constant 0 : i32
    return %c0_i32, %arg0 : i32, i32
  }
  func.func @transform_3(%arg0: i32) -> (i32, i32) {
    %c0_i32 = arith.constant 0 : i32
    %c0_i32_0 = arith.constant 0 : i32
    return %arg0, %c0_i32 : i32, i32
  }
  func.func @transform_4(%arg0: i32) -> (i32, i32) {
    %c0_i32 = arith.constant 0 : i32
    %c0_i32_0 = arith.constant 0 : i32
    %c0_i32_1 = arith.constant 0 : i32
    return %c0_i32, %c0_i32_0 : i32, i32
  }
  func.func @transform_5(%arg0: i32) -> (i32, i32) {
    %c0_i32 = arith.constant 0 : i32
    %c0_i32_0 = arith.constant 0 : i32
    %c0_i32_1 = arith.constant 0 : i32
    return %c0_i32, %c0_i32_0 : i32, i32
  }
}

</mosaic_0001>

<llo_original>
// kernel: net_forward.3
$region0: #{net_forward.3}
  #allocation0 [shape = 'u32[]', space=smem, size = 0x4, offset = 0x4, fixed_abs, tag = 'smem constant byte address 0x4 - core index']
  #allocation1 [shape = 'u32[72,128]{1,0:T(1,128)}', space=vmem, size = 0x9000, scoped, tag = 'internal scratch']
  %s0 = inlined_call_operand.vmem [shape: f32[4,75,512], index: 0, kind: input, shape index: {}]
  %s1 = inlined_call_operand.vmem [shape: f32[6,75], index: 1, kind: input, shape index: {}]
  %s2 = inlined_call_operand.vmem [shape: f32[6,1], index: 2, kind: input, shape index: {}]
  %s3 = inlined_call_operand.vmem [shape: f32[6,512], index: 3, kind: output, shape index: {}]
  %s4 = sld [smem:[#allocation0]]
  $region68: #{net_forward.3} parent=0
    _
  %s6 = ssub.s32 1, %s4
  %s7 = scalar_select 0, %s6, %s4
  $region1: #{net_forward.3} parent=0
    #allocation2 [shape = 'u8[655360]{0}', space=vmem, size = 0xa0000, scoped, tag = 'input window, operand 0']
    loop: start=0, step=1, limit=4
    $region2: #{net_forward.3} parent=1 // loop_pre_header
      _
    $region3: #{net_forward.3} parent=1 // loop_header
      %s9 = sphi 0, %s13
      %p10 = scmp.ge.s32.totalorder %s9, 4
      %s19 = sphi 0, %s21
      %s22 = sphi 0, %s19
      %s23 = sphi 0, %s22
      %s39 = sphi 0, %s23
      %s43 = sphi 0, %s43
      %s45 = sphi 0, %s43
      %s46 = sphi 0, %s45
      %s60 = sphi 0, %s46
      %s64 = sphi 0, %s64
      %s66 = sphi 0, %s64
      %s67 = sphi 0, %s66
      %s81 = sphi 0, %s67
      %s87 = sphi 0, %s89
      %s90 = sphi 0, %s87
      %s91 = sphi 0, %s90
      %s107 = sphi 0, %s91
    $region4: #{net_forward.3} parent=1 // loop_header_branch
      %12 = sbr.rel (%p10) target = $region8
    $region5: #{net_forward.3} parent=1 // loop_body
      %s14 = ssub.s32 %s9, 1
      %s15 = ssub.s32 %s9, 2
      %s16 = sadd.s32 %s9, 1
      %s17 = ssub.s32 %s9, %s16
      %p18 = scmp.eq.s32.totalorder %s17, 0
      %s20 = sadd.s32 %s19, 1
      %s21 = scalar_select %p18, %s19, %s20
      %p24 = pneg %p18
      %p25 = scmp.eq.s32.totalorder %s9, 1
      %p26 = por %p24, %p25
      %p27 = scmp.ne.s32.totalorder %s19, %s22
      %p28 = scmp.eq.s32.totalorder %s9, 0
      %p29 = por %p27, %p28
      %p30 = scmp.ne.s32.totalorder %s19, %s22
      %p31 = scmp.eq.s32.totalorder %s14, 1
      %p32 = por %p30, %p31
      %p33 = scmp.ne.s32.totalorder %s22, %s23
      %p34 = scmp.eq.s32.totalorder %s14, 0
      %p35 = por %p33, %p34
      %p36 = scmp.ne.s32.totalorder %s22, %s23
      %p37 = scmp.eq.s32.totalorder %s15, 1
      %p38 = por %p36, %p37
      %p40 = scmp.ne.s32.totalorder %s23, %s39
      %p41 = scmp.eq.s32.totalorder %s15, 0
      %p42 = por %p40, %p41
      %s44 = sadd.s32 %s43, 1
      %p47 = scmp.eq.s32.totalorder %s9, 1
      %p48 = scmp.ne.s32.totalorder %s43, %s45
      %p49 = scmp.eq.s32.totalorder %s9, 0
      %p50 = por %p48, %p49
      %p51 = scmp.ne.s32.totalorder %s43, %s45
      %p52 = scmp.eq.s32.totalorder %s14, 1
      %p53 = por %p51, %p52
      %p54 = scmp.ne.s32.totalorder %s45, %s46
      %p55 = scmp.eq.s32.totalorder %s14, 0
      %p56 = por %p54, %p55
      %p57 = scmp.ne.s32.totalorder %s45, %s46
      %p58 = scmp.eq.s32.totalorder %s15, 1
      %p59 = por %p57, %p58
      %p61 = scmp.ne.s32.totalorder %s46, %s60
      %p62 = scmp.eq.s32.totalorder %s15, 0
      %p63 = por %p61, %p62
      %s65 = sadd.s32 %s64, 1
      %p68 = scmp.eq.s32.totalorder %s9, 1
      %p69 = scmp.ne.s32.totalorder %s64, %s66
      %p70 = scmp.eq.s32.totalorder %s9, 0
      %p71 = por %p69, %p70
      %p72 = scmp.ne.s32.totalorder %s64, %s66
      %p73 = scmp.eq.s32.totalorder %s14, 1
      %p74 = por %p72, %p73
      %p75 = scmp.ne.s32.totalorder %s66, %s67
      %p76 = scmp.eq.s32.totalorder %s14, 0
      %p77 = por %p75, %p76
      %p78 = scmp.ne.s32.totalorder %s66, %s67
      %p79 = scmp.eq.s32.totalorder %s15, 1
      %p80 = por %p78, %p79
      %p82 = scmp.ne.s32.totalorder %s67, %s81
      %p83 = scmp.eq.s32.totalorder %s15, 0
      %p84 = por %p82, %p83
      %s85 = ssub.s32 %s9, %s16
      %p86 = scmp.eq.s32.totalorder %s85, 0
      %s88 = sadd.s32 %s87, 1
      %s89 = scalar_select %p86, %s87, %s88
      %p92 = pneg %p86
      %p93 = scmp.eq.s32.totalorder %s9, 1
      %p94 = por %p92, %p93
      %p95 = scmp.ne.s32.totalorder %s87, %s90
      %p96 = scmp.eq.s32.totalorder %s9, 0
      %p97 = por %p95, %p96
      %p98 = scmp.ne.s32.totalorder %s87, %s90
      %p99 = scmp.eq.s32.totalorder %s14, 1
      %p100 = por %p98, %p99
      %p101 = scmp.ne.s32.totalorder %s90, %s91
      %p102 = scmp.eq.s32.totalorder %s14, 0
      %p103 = por %p101, %p102
      %p104 = scmp.ne.s32.totalorder %s90, %s91
      %p105 = scmp.eq.s32.totalorder %s15, 1
      %p106 = por %p104, %p105
      %p108 = scmp.ne.s32.totalorder %s91, %s107
      %p109 = scmp.eq.s32.totalorder %s15, 0
      %p110 = por %p108, %p109
      %p111 = scmp.le.s32.totalorder 1, %s9
      %p112 = scmp.lt.s32.totalorder %s9, 3
      %p113 = pnand %p111, %p112
      %p114 = pneg %p113
      // Predicated region
      $region9: #{net_forward.3} parent=5 // pred_check
        _
      $region10: #{net_forward.3} parent=5 // pred_check_branch
        %116 = sbr.rel (%p113) target = $region12
      $region11: #{net_forward.3} parent=5 // pred_region
        %s117 = ssub.s32 %s9, 1
        // Predicated region
        $region13: #{net_forward.3} parent=11 // pred_check
          %p118 = pneg %p56
        $region14: #{net_forward.3} parent=11 // pred_check_branch
          %120 = sbr.rel (%p118) target = $region16
        $region15: #{net_forward.3} parent=11 // pred_region
          _
        $region16: #{net_forward.3} parent=11 // pred_fallthru
          _
        // Predicated region
        $region17: #{net_forward.3} parent=11 // pred_check
          %p121 = pneg %p77
        $region18: #{net_forward.3} parent=11 // pred_check_branch
          %123 = sbr.rel (%p121) target = $region20
        $region19: #{net_forward.3} parent=11 // pred_region
          _
        $region20: #{net_forward.3} parent=11 // pred_fallthru
          _
      $region12: #{net_forward.3} parent=5 // pred_fallthru
        _
      %p124 = scmp.lt.s32.totalorder %s9, 2
      // Predicated region
      $region21: #{net_forward.3} parent=5 // pred_check
        %p125 = pneg %p124
      $region22: #{net_forward.3} parent=5 // pred_check_branch
        %127 = sbr.rel (%p125) target = $region24
      $region23: #{net_forward.3} parent=5 // pred_region
        // Predicated region
        $region25: #{net_forward.3} parent=23 // pred_check
          %p128 = pneg %p29
        $region26: #{net_forward.3} parent=23 // pred_check_branch
          %130 = sbr.rel (%p128) target = $region28
        $region27: #{net_forward.3} parent=23 // pred_region
          %s131 = sand.u32 %s19, 1
          %s132 = sand.u32 %s19, 1
          %s133 = smul.addr %s132, 640
          %s134 = scalar_lea.vmem [#allocation2], %s133
          %s135 = smul.u32 2, %s9
          %s136 = smul.addr %s135, 8
          %s137 = scalar_lea.vmem %s0, %s136
          // Predicated region
          $region29: #{net_forward.3} parent=27 // pred_check
            _
          $region30: #{net_forward.3} parent=27 // pred_check_branch
            %139 = sbr.rel (0) target = $region32
          $region31: #{net_forward.3} parent=27 // pred_region
            // Predicated region
            $region33: #{net_forward.3} parent=31 // pred_check
              _
            $region34: #{net_forward.3} parent=31 // pred_check_branch
              %141 = sbr.rel (0) target = $region36
            $region35: #{net_forward.3} parent=31 // pred_region
              loop: start=0, step=1, limit=1
              $region37: #{net_forward.3} parent=35 // loop_pre_header
                _
              $region38: #{net_forward.3} parent=35 // loop_header
                %s143 = sphi 0, %s147
                %p144 = scmp.ge.s32.totalorder %s143, 1
                %s148 = sphi %s137, %s137
                %s149 = sphi %s134, %s134
              $region39: #{net_forward.3} parent=35 // loop_header_branch
                %146 = sbr.rel (%p144) target = $region43
              $region40: #{net_forward.3} parent=35 // loop_body
                %v150 = vld [vmem:[%s148] sm:$0xff]
                %151 = vst [vmem:[%s149] sm:$0xff] %v150
                %v152 = vld [vmem:[%s148 + $0x8] sm:$0xff]
                %153 = vst [vmem:[%s149 + $0x8] sm:$0xff] %v152
                %v154 = vld [vmem:[%s148 + $0x20] sm:$0xff]
                %155 = vst [vmem:[%s149 + $0x10] sm:$0xff] %v154
                %v156 = vld [vmem:[%s148 + $0x28] sm:$0xff]
                %157 = vst [vmem:[%s149 + $0x18] sm:$0xff] %v156
                %v158 = vld [vmem:[%s148 + $0x40] sm:$0xff]
                %159 = vst [vmem:[%s149 + $0x20] sm:$0xff] %v158
                %v160 = vld [vmem:[%s148 + $0x48] sm:$0xff]
                %161 = vst [vmem:[%s149 + $0x28] sm:$0xff] %v160
                %v162 = vld [vmem:[%s148 + $0x60] sm:$0xff]
                %163 = vst [vmem:[%s149 + $0x30] sm:$0xff] %v162
                %v164 = vld [vmem:[%s148 + $0x68] sm:$0xff]
                %165 = vst [vmem:[%s149 + $0x38] sm:$0xff] %v164
                %v166 = vld [vmem:[%s148 + $0x80] sm:$0xff]
                %167 = vst [vmem:[%s149 + $0x40] sm:$0xff] %v166
                %v168 = vld [vmem:[%s148 + $0x88] sm:$0xff]
                %169 = vst [vmem:[%s149 + $0x48] sm:$0xff] %v168
                %v170 = vld [vmem:[%s148 + $0xa0] sm:$0xff]
                %171 = vst [vmem:[%s149 + $0x50] sm:$0xff] %v170
                %v172 = vld [vmem:[%s148 + $0xa8] sm:$0xff]
                %173 = vst [vmem:[%s149 + $0x58] sm:$0xff] %v172
                %v174 = vld [vmem:[%s148 + $0xc0] sm:$0xff]
                %175 = vst [vmem:[%s149 + $0x60] sm:$0xff] %v174
                %v176 = vld [vmem:[%s148 + $0xc8] sm:$0xff]
                %177 = vst [vmem:[%s149 + $0x68] sm:$0xff] %v176
                %v178 = vld [vmem:[%s148 + $0xe0] sm:$0xff]
                %179 = vst [vmem:[%s149 + $0x70] sm:$0xff] %v178
                %v180 = vld [vmem:[%s148 + $0xe8] sm:$0xff]
                %181 = vst [vmem:[%s149 + $0x78] sm:$0xff] %v180
                %v182 = vld [vmem:[%s148 + $0x100] sm:$0xff]
                %183 = vst [vmem:[%s149 + $0x80] sm:$0xff] %v182
                %v184 = vld [vmem:[%s148 + $0x108] sm:$0xff]
                %185 = vst [vmem:[%s149 + $0x88] sm:$0xff] %v184
                %v186 = vld [vmem:[%s148 + $0x120] sm:$0xff]
                %187 = vst [vmem:[%s149 + $0x90] sm:$0xff] %v186
                %v188 = vld [vmem:[%s148 + $0x128] sm:$0xff]
                %189 = vst [vmem:[%s149 + $0x98] sm:$0xff] %v188
                %v190 = vld [vmem:[%s148 + $0x140] sm:$0xff]
                %191 = vst [vmem:[%s149 + $0xa0] sm:$0xff] %v190
                %v192 = vld [vmem:[%s148 + $0x148] sm:$0xff]
                %193 = vst [vmem:[%s149 + $0xa8] sm:$0xff] %v192
                %v194 = vld [vmem:[%s148 + $0x160] sm:$0xff]
                %195 = vst [vmem:[%s149 + $0xb0] sm:$0xff] %v194
                %v196 = vld [vmem:[%s148 + $0x168] sm:$0xff]
                %197 = vst [vmem:[%s149 + $0xb8] sm:$0xff] %v196
                %v198 = vld [vmem:[%s148 + $0x180] sm:$0xff]
                %199 = vst [vmem:[%s149 + $0xc0] sm:$0xff] %v198
                %v200 = vld [vmem:[%s148 + $0x188] sm:$0xff]
                %201 = vst [vmem:[%s149 + $0xc8] sm:$0xff] %v200
                %v202 = vld [vmem:[%s148 + $0x1a0] sm:$0xff]
                %203 = vst [vmem:[%s149 + $0xd0] sm:$0xff] %v202
                %v204 = vld [vmem:[%s148 + $0x1a8] sm:$0xff]
                %205 = vst [vmem:[%s149 + $0xd8] sm:$0xff] %v204
                %v206 = vld [vmem:[%s148 + $0x1c0] sm:$0xff]
                %207 = vst [vmem:[%s149 + $0xe0] sm:$0xff] %v206
                %v208 = vld [vmem:[%s148 + $0x1c8] sm:$0xff]
                %209 = vst [vmem:[%s149 + $0xe8] sm:$0xff] %v208
                %v210 = vld [vmem:[%s148 + $0x1e0] sm:$0xff]
                %211 = vst [vmem:[%s149 + $0xf0] sm:$0xff] %v210
                %v212 = vld [vmem:[%s148 + $0x1e8] sm:$0xff]
                %213 = vst [vmem:[%s149 + $0xf8] sm:$0xff] %v212
                %v214 = vld [vmem:[%s148 + $0x200] sm:$0xff]
                %215 = vst [vmem:[%s149 + $0x100] sm:$0xff] %v214
                %v216 = vld [vmem:[%s148 + $0x208] sm:$0xff]
                %217 = vst [vmem:[%s149 + $0x108] sm:$0xff] %v216
                %v218 = vld [vmem:[%s148 + $0x220] sm:$0xff]
                %219 = vst [vmem:[%s149 + $0x110] sm:$0xff] %v218
                %v220 = vld [vmem:[%s148 + $0x228] sm:$0xff]
                %221 = vst [vmem:[%s149 + $0x118] sm:$0xff] %v220
                %v222 = vld [vmem:[%s148 + $0x240] sm:$0xff]
                %223 = vst [vmem:[%s149 + $0x120] sm:$0xff] %v222
                %v224 = vld [vmem:[%s148 + $0x248] sm:$0xff]
                %225 = vst [vmem:[%s149 + $0x128] sm:$0xff] %v224
                %v226 = vld [vmem:[%s148 + $0x260] sm:$0xff]
                %227 = vst [vmem:[%s149 + $0x130] sm:$0xff] %v226
                %v228 = vld [vmem:[%s148 + $0x268] sm:$0xff]
                %229 = vst [vmem:[%s149 + $0x138] sm:$0xff] %v228
                %v230 = vld [vmem:[%s148 + $0x280] sm:$0xff]
                %231 = vst [vmem:[%s149 + $0x140] sm:$0xff] %v230
                %v232 = vld [vmem:[%s148 + $0x288] sm:$0xff]
                %233 = vst [vmem:[%s149 + $0x148] sm:$0xff] %v232
                %v234 = vld [vmem:[%s148 + $0x2a0] sm:$0xff]
                %235 = vst [vmem:[%s149 + $0x150] sm:$0xff] %v234
                %v236 = vld [vmem:[%s148 + $0x2a8] sm:$0xff]
                %237 = vst [vmem:[%s149 + $0x158] sm:$0xff] %v236
                %v238 = vld [vmem:[%s148 + $0x2c0] sm:$0xff]
                %239 = vst [vmem:[%s149 + $0x160] sm:$0xff] %v238
                %v240 = vld [vmem:[%s148 + $0x2c8] sm:$0xff]
                %241 = vst [vmem:[%s149 + $0x168] sm:$0xff] %v240
                %v242 = vld [vmem:[%s148 + $0x2e0] sm:$0xff]
                %243 = vst [vmem:[%s149 + $0x170] sm:$0xff] %v242
                %v244 = vld [vmem:[%s148 + $0x2e8] sm:$0xff]
                %245 = vst [vmem:[%s149 + $0x178] sm:$0xff] %v244
                %v246 = vld [vmem:[%s148 + $0x300] sm:$0xff]
                %247 = vst [vmem:[%s149 + $0x180] sm:$0xff] %v246
                %v248 = vld [vmem:[%s148 + $0x308] sm:$0xff]
                %249 = vst [vmem:[%s149 + $0x188] sm:$0xff] %v248
                %v250 = vld [vmem:[%s148 + $0x320] sm:$0xff]
                %251 = vst [vmem:[%s149 + $0x190] sm:$0xff] %v250
                %v252 = vld [vmem:[%s148 + $0x328] sm:$0xff]
                %253 = vst [vmem:[%s149 + $0x198] sm:$0xff] %v252
                %v254 = vld [vmem:[%s148 + $0x340] sm:$0xff]
                %255 = vst [vmem:[%s149 + $0x1a0] sm:$0xff] %v254
                %v256 = vld [vmem:[%s148 + $0x348] sm:$0xff]
                %257 = vst [vmem:[%s149 + $0x1a8] sm:$0xff] %v256
                %v258 = vld [vmem:[%s148 + $0x360] sm:$0xff]
                %259 = vst [vmem:[%s149 + $0x1b0] sm:$0xff] %v258
                %v260 = vld [vmem:[%s148 + $0x368] sm:$0xff]
                %261 = vst [vmem:[%s149 + $0x1b8] sm:$0xff] %v260
                %v262 = vld [vmem:[%s148 + $0x380] sm:$0xff]
                %263 = vst [vmem:[%s149 + $0x1c0] sm:$0xff] %v262
                %v264 = vld [vmem:[%s148 + $0x388] sm:$0xff]
                %265 = vst [vmem:[%s149 + $0x1c8] sm:$0xff] %v264
                %v266 = vld [vmem:[%s148 + $0x3a0] sm:$0xff]
                %267 = vst [vmem:[%s149 + $0x1d0] sm:$0xff] %v266
                %v268 = vld [vmem:[%s148 + $0x3a8] sm:$0xff]
                %269 = vst [vmem:[%s149 + $0x1d8] sm:$0xff] %v268
                %v270 = vld [vmem:[%s148 + $0x3c0] sm:$0xff]
                %271 = vst [vmem:[%s149 + $0x1e0] sm:$0xff] %v270
                %v272 = vld [vmem:[%s148 + $0x3c8] sm:$0xff]
                %273 = vst [vmem:[%s149 + $0x1e8] sm:$0xff] %v272
                %v274 = vld [vmem:[%s148 + $0x3e0] sm:$0xff]
                %275 = vst [vmem:[%s149 + $0x1f0] sm:$0xff] %v274
                %v276 = vld [vmem:[%s148 + $0x3e8] sm:$0xff]
                %277 = vst [vmem:[%s149 + $0x1f8] sm:$0xff] %v276
                %v278 = vld [vmem:[%s148 + $0x400] sm:$0xff]
                %279 = vst [vmem:[%s149 + $0x200] sm:$0xff] %v278
                %v280 = vld [vmem:[%s148 + $0x408] sm:$0xff]
                %281 = vst [vmem:[%s149 + $0x208] sm:$0xff] %v280
                %v282 = vld [vmem:[%s148 + $0x420] sm:$0xff]
                %283 = vst [vmem:[%s149 + $0x210] sm:$0xff] %v282
                %v284 = vld [vmem:[%s148 + $0x428] sm:$0xff]
                %285 = vst [vmem:[%s149 + $0x218] sm:$0xff] %v284
                %v286 = vld [vmem:[%s148 + $0x440] sm:$0xff]
                %287 = vst [vmem:[%s149 + $0x220] sm:$0xff] %v286
                %v288 = vld [vmem:[%s148 + $0x448] sm:$0xff]
                %289 = vst [vmem:[%s149 + $0x228] sm:$0xff] %v288
                %v290 = vld [vmem:[%s148 + $0x460] sm:$0xff]
                %291 = vst [vmem:[%s149 + $0x230] sm:$0xff] %v290
                %v292 = vld [vmem:[%s148 + $0x468] sm:$0xff]
                %293 = vst [vmem:[%s149 + $0x238] sm:$0xff] %v292
                %v294 = vld [vmem:[%s148 + $0x480] sm:$0xff]
                %295 = vst [vmem:[%s149 + $0x240] sm:$0xff] %v294
                %v296 = vld [vmem:[%s148 + $0x488] sm:$0xff]
                %297 = vst [vmem:[%s149 + $0x248] sm:$0xff] %v296
                %v298 = vld [vmem:[%s148 + $0x4a0] sm:$0xff]
                %299 = vst [vmem:[%s149 + $0x250] sm:$0xff] %v298
                %v300 = vld [vmem:[%s148 + $0x4a8] sm:$0xff]
                %301 = vst [vmem:[%s149 + $0x258] sm:$0xff] %v300
                %v302 = vld [vmem:[%s148 + $0x4c0] sm:$0xff]
                %303 = vst [vmem:[%s149 + $0x260] sm:$0xff] %v302
                %v304 = vld [vmem:[%s148 + $0x4c8] sm:$0xff]
                %305 = vst [vmem:[%s149 + $0x268] sm:$0xff] %v304
                %v306 = vld [vmem:[%s148 + $0x4e0] sm:$0xff]
                %307 = vst [vmem:[%s149 + $0x270] sm:$0xff] %v306
                %v308 = vld [vmem:[%s148 + $0x4e8] sm:$0xff]
                %309 = vst [vmem:[%s149 + $0x278] sm:$0xff] %v308
              $region41: #{net_forward.3} parent=35 // loop_footer
                %s147 = sadd.s32 1, %s143
              $region42: #{net_forward.3} parent=35 // loop_footer_branch
                %142 = sbr.rel target = $region38
              $region43: #{net_forward.3} parent=35 // loop_exit
                _
            $region36: #{net_forward.3} parent=31 // pred_fallthru
              _
            // Predicated region
            $region44: #{net_forward.3} parent=31 // pred_check
              _
            $region45: #{net_forward.3} parent=31 // pred_check_branch
              %311 = sbr.rel target = $region47
            $region46: #{net_forward.3} parent=31 // pred_region
              _
            $region47: #{net_forward.3} parent=31 // pred_fallthru
              _
          $region32: #{net_forward.3} parent=27 // pred_fallthru
            _
          %312 = vnop
        $region28: #{net_forward.3} parent=23 // pred_fallthru
          _
      $region24: #{net_forward.3} parent=5 // pred_fallthru
        _
      %p313 = scmp.le.s32.totalorder 1, %s9
      %p314 = scmp.lt.s32.totalorder %s9, 3
      %p315 = pnand %p313, %p314
      %p316 = pneg %p315
      // Predicated region
      $region48: #{net_forward.3} parent=5 // pred_check
        _
      $region49: #{net_forward.3} parent=5 // pred_check_branch
        %318 = sbr.rel (%p315) target = $region51
      $region50: #{net_forward.3} parent=5 // pred_region
        %s319 = ssub.s32 %s9, 1
        %s320 = sand.u32 %s22, 1
        %s321 = sand.u32 %s22, 1
        %s322 = smul.addr %s321, 640
        %s323 = scalar_lea.vmem [#allocation2], %s322
        // Predicated region
        $region52: #{net_forward.3} parent=50 // pred_check
          %p324 = pneg %p35
        $region53: #{net_forward.3} parent=50 // pred_check_branch
          %326 = sbr.rel (%p324) target = $region55
        $region54: #{net_forward.3} parent=50 // pred_region
          _
        $region55: #{net_forward.3} parent=50 // pred_fallthru
          _
        %s327 = sand.u32 %s22, 1
        %s328 = sand.u32 %s22, 1
        %s329 = smul.addr %s328, 640
        %s330 = scalar_lea.vmem [#allocation2], %s329
        %p331 = pneg %p35
        %p332 = pneg %p32
        %p333 = pneg %p56
        %p334 = pneg %p53
        %p335 = pneg %p77
        %p336 = pneg %p74
        %p337 = pneg %p103
        %p338 = pneg %p100
        %s339 = smul.u32 2, %s14
        %p340 = scmp.lt.s32.totalorder %s339, 3
        %s341 = scalar_select %p340, %s339, 3
        %s342 = smul.addr %s341, 8
        %s343 = scalar_lea.vmem %s3, %s342
        %s344 = smul.u32 2, %s14
        %s345 = smul.u32 2, %s14
        %p346 = scmp.lt.s32.totalorder %s345, 3
        %s347 = scalar_select %p346, %s345, 3
        %s348 = smul.addr %s347, 8
        %s349 = scalar_lea.vmem %s3, %s348
        %s350 = smul.u32 2, %s14
        %v351 = vld [vmem:[%s1] sm:$0x3f]
        %v352 = vld [vmem:[%s323] sm:$0xff]
        %v353 = vld [vmem:[%s323 + $0x8] sm:$0xff]
        %v354 = vld [vmem:[%s323 + $0x10] sm:$0xff]
        %v355 = vld [vmem:[%s323 + $0x18] sm:$0xff]
        %v356 = vld [vmem:[%s323 + $0x20] sm:$0xff]
        %v357 = vld [vmem:[%s323 + $0x28] sm:$0xff]
        %v358 = vld [vmem:[%s323 + $0x30] sm:$0xff]
        %v359 = vld [vmem:[%s323 + $0x38] sm:$0xff]
        %v360 = vld [vmem:[%s323 + $0x40] sm:$0xff]
        %v361 = vld [vmem:[%s323 + $0x48] sm:$0xff]
        %v362 = vld [vmem:[%s323 + $0x50] sm:$0xff]
        %v363 = vld [vmem:[%s323 + $0x58] sm:$0xff]
        %v364 = vld [vmem:[%s323 + $0x60] sm:$0xff]
        %v365 = vld [vmem:[%s323 + $0x68] sm:$0xff]
        %v366 = vld [vmem:[%s323 + $0x70] sm:$0xff]
        %v367 = vld [vmem:[%s323 + $0x78] sm:$0xff]
        %v368 = vld [vmem:[%s323 + $0x80] sm:$0xff]
        %v369 = vld [vmem:[%s323 + $0x88] sm:$0xff]
        %v370 = vld [vmem:[%s323 + $0x90] sm:$0x7]
        %v371 = vld [vmem:[%s323 + $0x98] sm:$0x7]
        %vm372 = vcmask 613376
        %v374 = vsel %vm372, %v351, 0
        %vm376 = vcmask 1042432
        %v378 = vsel %vm376, %v370, 0
        %v381 = vsel %vm376, %v371, 0
        %383 = vmatpush.msra.mxu0 0.0
        %384 = vmatpush.msra.mxu0 0.0
        %385 = vmatpush.msra.mxu0 0.0
        %386 = vmatpush.msra.mxu0 0.0
        %387 = vmatpush.msra.mxu0 0.0
        %388 = vmatpush.msra.mxu0 0.0
        %389 = vmatpush.msra.mxu0 %v378
        %390 = vmatpush.msra.mxu0 %v368
        %391 = vmatpush.msra.mxu0 %v366
        %392 = vmatpush.msra.mxu0 %v364
        %393 = vmatpush.msra.mxu0 %v362
        %394 = vmatpush.msra.mxu0 %v360
        %395 = vmatpush.msra.mxu0 %v358
        %396 = vmatpush.msra.mxu0 %v356
        %397 = vmatpush.msra.mxu0 %v354
        %398 = vmatpush.msra.mxu0 %v352
        %399 = vmatmul.f32.gmra.mxu0 %v374
        %v400 = vpop.f32.mrf.mxu0
        %v401 = vadd.f32 0.0, %v400
        %402 = vdwg.mxu0
        %403 = vmatpush.msra.mxu0 0.0
        %404 = vmatpush.msra.mxu0 0.0
        %405 = vmatpush.msra.mxu0 0.0
        %406 = vmatpush.msra.mxu0 0.0
        %407 = vmatpush.msra.mxu0 0.0
        %408 = vmatpush.msra.mxu0 0.0
        %409 = vmatpush.msra.mxu0 %v381
        %410 = vmatpush.msra.mxu0 %v369
        %411 = vmatpush.msra.mxu0 %v367
        %412 = vmatpush.msra.mxu0 %v365
        %413 = vmatpush.msra.mxu0 %v363
        %414 = vmatpush.msra.mxu0 %v361
        %415 = vmatpush.msra.mxu0 %v359
        %416 = vmatpush.msra.mxu0 %v357
        %417 = vmatpush.msra.mxu0 %v355
        %418 = vmatpush.msra.mxu0 %v353
        %419 = vmatmul.f32.gmra.mxu0 %v374
        %v420 = vpop.f32.mrf.mxu0
        %v421 = vadd.f32 0.0, %v420
        %422 = vdwg.mxu0
        %s423 = scalar_lea.vmem %s323, 160 [#allocation2]
        %v424 = vld [vmem:[%s423] sm:$0xff]
        %v425 = vld [vmem:[%s423 + $0x8] sm:$0xff]
        %v426 = vld [vmem:[%s423 + $0x10] sm:$0xff]
        %v427 = vld [vmem:[%s423 + $0x18] sm:$0xff]
        %v428 = vld [vmem:[%s423 + $0x20] sm:$0xff]
        %v429 = vld [vmem:[%s423 + $0x28] sm:$0xff]
        %v430 = vld [vmem:[%s423 + $0x30] sm:$0xff]
        %v431 = vld [vmem:[%s423 + $0x38] sm:$0xff]
        %v432 = vld [vmem:[%s423 + $0x40] sm:$0xff]
        %v433 = vld [vmem:[%s423 + $0x48] sm:$0xff]
        %v434 = vld [vmem:[%s423 + $0x50] sm:$0xff]
        %v435 = vld [vmem:[%s423 + $0x58] sm:$0xff]
        %v436 = vld [vmem:[%s423 + $0x60] sm:$0xff]
        %v437 = vld [vmem:[%s423 + $0x68] sm:$0xff]
        %v438 = vld [vmem:[%s423 + $0x70] sm:$0xff]
        %v439 = vld [vmem:[%s423 + $0x78] sm:$0xff]
        %v440 = vld [vmem:[%s423 + $0x80] sm:$0xff]
        %v441 = vld [vmem:[%s423 + $0x88] sm:$0xff]
        %v442 = vld [vmem:[%s423 + $0x90] sm:$0x7]
        %v443 = vld [vmem:[%s423 + $0x98] sm:$0x7]
        %v445 = vsel %vm376, %v442, 0
        %v448 = vsel %vm376, %v443, 0
        %450 = vmatpush.msra.mxu0 0.0
        %451 = vmatpush.msra.mxu0 0.0
        %452 = vmatpush.msra.mxu0 0.0
        %453 = vmatpush.msra.mxu0 0.0
        %454 = vmatpush.msra.mxu0 0.0
        %455 = vmatpush.msra.mxu0 0.0
        %456 = vmatpush.msra.mxu0 %v445
        %457 = vmatpush.msra.mxu0 %v440
        %458 = vmatpush.msra.mxu0 %v438
        %459 = vmatpush.msra.mxu0 %v436
        %460 = vmatpush.msra.mxu0 %v434
        %461 = vmatpush.msra.mxu0 %v432
        %462 = vmatpush.msra.mxu0 %v430
        %463 = vmatpush.msra.mxu0 %v428
        %464 = vmatpush.msra.mxu0 %v426
        %465 = vmatpush.msra.mxu0 %v424
        %466 = vmatmul.f32.gmra.mxu0 %v374
        %v467 = vpop.f32.mrf.mxu0
        %v468 = vadd.f32 0.0, %v467
        %469 = vdwg.mxu0
        %470 = vmatpush.msra.mxu0 0.0
        %471 = vmatpush.msra.mxu0 0.0
        %472 = vmatpush.msra.mxu0 0.0
        %473 = vmatpush.msra.mxu0 0.0
        %474 = vmatpush.msra.mxu0 0.0
        %475 = vmatpush.msra.mxu0 0.0
        %476 = vmatpush.msra.mxu0 %v448
        %477 = vmatpush.msra.mxu0 %v441
        %478 = vmatpush.msra.mxu0 %v439
        %479 = vmatpush.msra.mxu0 %v437
        %480 = vmatpush.msra.mxu0 %v435
        %481 = vmatpush.msra.mxu0 %v433
        %482 = vmatpush.msra.mxu0 %v431
        %483 = vmatpush.msra.mxu0 %v429
        %484 = vmatpush.msra.mxu0 %v427
        %485 = vmatpush.msra.mxu0 %v425
        %486 = vmatmul.f32.gmra.mxu0 %v374
        %v487 = vpop.f32.mrf.mxu0
        %v488 = vadd.f32 0.0, %v487
        %489 = vdwg.mxu0
        %v490 = vmax.f32 %v401, %v468
        %v491 = vmax.f32 %v421, %v488
        %s492 = scalar_lea.vmem %s323, 320 [#allocation2]
        %v493 = vld [vmem:[%s492] sm:$0xff]
        %v494 = vld [vmem:[%s492 + $0x8] sm:$0xff]
        %v495 = vld [vmem:[%s492 + $0x10] sm:$0xff]
        %v496 = vld [vmem:[%s492 + $0x18] sm:$0xff]
        %v497 = vld [vmem:[%s492 + $0x20] sm:$0xff]
        %v498 = vld [vmem:[%s492 + $0x28] sm:$0xff]
        %v499 = vld [vmem:[%s492 + $0x30] sm:$0xff]
        %v500 = vld [vmem:[%s492 + $0x38] sm:$0xff]
        %v501 = vld [vmem:[%s492 + $0x40] sm:$0xff]
        %v502 = vld [vmem:[%s492 + $0x48] sm:$0xff]
        %v503 = vld [vmem:[%s492 + $0x50] sm:$0xff]
        %v504 = vld [vmem:[%s492 + $0x58] sm:$0xff]
        %v505 = vld [vmem:[%s492 + $0x60] sm:$0xff]
        %v506 = vld [vmem:[%s492 + $0x68] sm:$0xff]
        %v507 = vld [vmem:[%s492 + $0x70] sm:$0xff]
        %v508 = vld [vmem:[%s492 + $0x78] sm:$0xff]
        %v509 = vld [vmem:[%s492 + $0x80] sm:$0xff]
        %v510 = vld [vmem:[%s492 + $0x88] sm:$0xff]
        %v511 = vld [vmem:[%s492 + $0x90] sm:$0x7]
        %v512 = vld [vmem:[%s492 + $0x98] sm:$0x7]
        %v514 = vsel %vm376, %v511, 0
        %v517 = vsel %vm376, %v512, 0
        %519 = vmatpush.msra.mxu0 0.0
        %520 = vmatpush.msra.mxu0 0.0
        %521 = vmatpush.msra.mxu0 0.0
        %522 = vmatpush.msra.mxu0 0.0
        %523 = vmatpush.msra.mxu0 0.0
        %524 = vmatpush.msra.mxu0 0.0
        %525 = vmatpush.msra.mxu0 %v514
        %526 = vmatpush.msra.mxu0 %v509
        %527 = vmatpush.msra.mxu0 %v507
        %528 = vmatpush.msra.mxu0 %v505
        %529 = vmatpush.msra.mxu0 %v503
        %530 = vmatpush.msra.mxu0 %v501
        %531 = vmatpush.msra.mxu0 %v499
        %532 = vmatpush.msra.mxu0 %v497
        %533 = vmatpush.msra.mxu0 %v495
        %534 = vmatpush.msra.mxu0 %v493
        %535 = vmatmul.f32.gmra.mxu0 %v374
        %v536 = vpop.f32.mrf.mxu0
        %v537 = vadd.f32 0.0, %v536
        %538 = vdwg.mxu0
        %539 = vmatpush.msra.mxu0 0.0
        %540 = vmatpush.msra.mxu0 0.0
        %541 = vmatpush.msra.mxu0 0.0
        %542 = vmatpush.msra.mxu0 0.0
        %543 = vmatpush.msra.mxu0 0.0
        %544 = vmatpush.msra.mxu0 0.0
        %545 = vmatpush.msra.mxu0 %v517
        %546 = vmatpush.msra.mxu0 %v510
        %547 = vmatpush.msra.mxu0 %v508
        %548 = vmatpush.msra.mxu0 %v506
        %549 = vmatpush.msra.mxu0 %v504
        %550 = vmatpush.msra.mxu0 %v502
        %551 = vmatpush.msra.mxu0 %v500
        %552 = vmatpush.msra.mxu0 %v498
        %553 = vmatpush.msra.mxu0 %v496
        %554 = vmatpush.msra.mxu0 %v494
        %555 = vmatmul.f32.gmra.mxu0 %v374
        %v556 = vpop.f32.mrf.mxu0
        %v557 = vadd.f32 0.0, %v556
        %558 = vdwg.mxu0
        %v559 = vmax.f32 %v490, %v537
        %v560 = vmax.f32 %v491, %v557
        %s561 = scalar_lea.vmem %s323, 480 [#allocation2]
        %v562 = vld [vmem:[%s561] sm:$0xff]
        %v563 = vld [vmem:[%s561 + $0x8] sm:$0xff]
        %v564 = vld [vmem:[%s561 + $0x10] sm:$0xff]
        %v565 = vld [vmem:[%s561 + $0x18] sm:$0xff]
        %v566 = vld [vmem:[%s561 + $0x20] sm:$0xff]
        %v567 = vld [vmem:[%s561 + $0x28] sm:$0xff]
        %v568 = vld [vmem:[%s561 + $0x30] sm:$0xff]
        %v569 = vld [vmem:[%s561 + $0x38] sm:$0xff]
        %v570 = vld [vmem:[%s561 + $0x40] sm:$0xff]
        %v571 = vld [vmem:[%s561 + $0x48] sm:$0xff]
        %v572 = vld [vmem:[%s561 + $0x50] sm:$0xff]
        %v573 = vld [vmem:[%s561 + $0x58] sm:$0xff]
        %v574 = vld [vmem:[%s561 + $0x60] sm:$0xff]
        %v575 = vld [vmem:[%s561 + $0x68] sm:$0xff]
        %v576 = vld [vmem:[%s561 + $0x70] sm:$0xff]
        %v577 = vld [vmem:[%s561 + $0x78] sm:$0xff]
        %v578 = vld [vmem:[%s561 + $0x80] sm:$0xff]
        %v579 = vld [vmem:[%s561 + $0x88] sm:$0xff]
        %v580 = vld [vmem:[%s561 + $0x90] sm:$0x7]
        %v581 = vld [vmem:[%s561 + $0x98] sm:$0x7]
        %v583 = vsel %vm376, %v580, 0
        %v586 = vsel %vm376, %v581, 0
        %588 = vmatpush.msra.mxu0 0.0
        %589 = vmatpush.msra.mxu0 0.0
        %590 = vmatpush.msra.mxu0 0.0
        %591 = vmatpush.msra.mxu0 0.0
        %592 = vmatpush.msra.mxu0 0.0
        %593 = vmatpush.msra.mxu0 0.0
        %594 = vmatpush.msra.mxu0 %v583
        %595 = vmatpush.msra.mxu0 %v578
        %596 = vmatpush.msra.mxu0 %v576
        %597 = vmatpush.msra.mxu0 %v574
        %598 = vmatpush.msra.mxu0 %v572
        %599 = vmatpush.msra.mxu0 %v570
        %600 = vmatpush.msra.mxu0 %v568
        %601 = vmatpush.msra.mxu0 %v566
        %602 = vmatpush.msra.mxu0 %v564
        %603 = vmatpush.msra.mxu0 %v562
        %604 = vmatmul.f32.gmra.mxu0 %v374
        %v605 = vpop.f32.mrf.mxu0
        %v606 = vadd.f32 0.0, %v605
        %607 = vdwg.mxu0
        %608 = vmatpush.msra.mxu0 0.0
        %609 = vmatpush.msra.mxu0 0.0
        %610 = vmatpush.msra.mxu0 0.0
        %611 = vmatpush.msra.mxu0 0.0
        %612 = vmatpush.msra.mxu0 0.0
        %613 = vmatpush.msra.mxu0 0.0
        %614 = vmatpush.msra.mxu0 %v586
        %615 = vmatpush.msra.mxu0 %v579
        %616 = vmatpush.msra.mxu0 %v577
        %617 = vmatpush.msra.mxu0 %v575
        %618 = vmatpush.msra.mxu0 %v573
        %619 = vmatpush.msra.mxu0 %v571
        %620 = vmatpush.msra.mxu0 %v569
        %621 = vmatpush.msra.mxu0 %v567
        %622 = vmatpush.msra.mxu0 %v565
        %623 = vmatpush.msra.mxu0 %v563
        %624 = vmatmul.f32.gmra.mxu0 %v374
        %v625 = vpop.f32.mrf.mxu0
        %v626 = vadd.f32 0.0, %v625
        %627 = vdwg.mxu0
        %v628 = vmax.f32 %v559, %v606
        %v629 = vmax.f32 %v560, %v626
        %v630 = vld [vmem:[%s2] sm:$0x3f]
        %632 = vset.pattern.permute.xlu0 0
        %633 = vperm.xlu0 %632, %v630
        %v634 = vpop.permute.xlu0 %633
        %v636 = vadd.f32 %v628, %v634
        %v637 = vadd.f32 %v629, %v634
        %v638 = vmax.f32 %v636, 0.0
        %v639 = vmax.f32 %v637, 0.0
        %640 = vst [vmem:[%s349] sm:$0x3f] %v638
        %641 = vst [vmem:[%s349 + $0x8] sm:$0x3f] %v639
        %s642 = smul.u32 2, %s14
        %p643 = scmp.lt.s32.totalorder %s642, 3
        %s644 = scalar_select %p643, %s642, 3
        %s645 = smul.addr %s644, 8
        %s646 = scalar_lea.vmem %s3, %s645
        // Predicated region
        $region56: #{net_forward.3} parent=50 // pred_check
          %p647 = pneg %p100
        $region57: #{net_forward.3} parent=50 // pred_check_branch
          %649 = sbr.rel (%p647) target = $region59
        $region58: #{net_forward.3} parent=50 // pred_region
          %s650 = smul.u32 2, %s14
        $region59: #{net_forward.3} parent=50 // pred_fallthru
          _
      $region51: #{net_forward.3} parent=5 // pred_fallthru
        _
      %p651 = scmp.le.s32.totalorder 2, %s9
      // Predicated region
      $region60: #{net_forward.3} parent=5 // pred_check
        %p652 = pneg %p651
      $region61: #{net_forward.3} parent=5 // pred_check_branch
        %654 = sbr.rel (%p652) target = $region63
      $region62: #{net_forward.3} parent=5 // pred_region
        %s655 = ssub.s32 %s9, 2
        // Predicated region
        $region64: #{net_forward.3} parent=62 // pred_check
          %p656 = pneg %p106
        $region65: #{net_forward.3} parent=62 // pred_check_branch
          %658 = sbr.rel (%p656) target = $region67
        $region66: #{net_forward.3} parent=62 // pred_region
          %s659 = smul.u32 2, %s15
          %p660 = scmp.lt.s32.totalorder %s659, 3
          %s661 = scalar_select %p660, %s659, 3
          %s662 = smul.addr %s661, 8
          %s663 = scalar_lea.vmem %s3, %s662
        $region67: #{net_forward.3} parent=62 // pred_fallthru
          _
      $region63: #{net_forward.3} parent=5 // pred_fallthru
        _
    $region6: #{net_forward.3} parent=1 // loop_footer
      %s13 = sadd.s32 1, %s9
    $region7: #{net_forward.3} parent=1 // loop_footer_branch
      %8 = sbr.rel target = $region3
    $region8: #{net_forward.3} parent=1 // loop_exit
      _

// kernel: net_forward.4
$region0: #{net_forward.4}
  #allocation0 [shape = 'u32[]', space=smem, size = 0x4, offset = 0x4, fixed_abs, tag = 'smem constant byte address 0x4 - core index']
  #allocation1 [shape = 'u32[72,128]{1,0:T(1,128)}', space=vmem, size = 0x9000, scoped, tag = 'internal scratch']
  %s0 = inlined_call_operand.vmem [shape: f32[4,150,128], index: 0, kind: input, shape index: {}]
  %s1 = inlined_call_operand.vmem [shape: f32[16,150], index: 1, kind: input, shape index: {}]
  %s2 = inlined_call_operand.vmem [shape: f32[16,1], index: 2, kind: input, shape index: {}]
  %s3 = inlined_call_operand.vmem [shape: f32[16,128], index: 3, kind: output, shape index: {}]
  %s4 = sld [smem:[#allocation0]]
  $region22: #{net_forward.4} parent=0
    _
  %s6 = ssub.s32 1, %s4
  %s7 = scalar_select 0, %s6, %s4
  // Predicated region
  $region2: #{net_forward.4} parent=0 // pred_check
    _
  $region3: #{net_forward.4} parent=0 // pred_check_branch
    %9 = sbr.rel (0) target = $region5
  $region4: #{net_forward.4} parent=0 // pred_region
    _
  $region5: #{net_forward.4} parent=0 // pred_fallthru
    _
  // Predicated region
  $region6: #{net_forward.4} parent=0 // pred_check
    _
  $region7: #{net_forward.4} parent=0 // pred_check_branch
    %11 = sbr.rel (0) target = $region9
  $region8: #{net_forward.4} parent=0 // pred_region
    _
  $region9: #{net_forward.4} parent=0 // pred_fallthru
    _
  // Predicated region
  $region10: #{net_forward.4} parent=0 // pred_check
    _
  $region11: #{net_forward.4} parent=0 // pred_check_branch
    %13 = sbr.rel (0) target = $region13
  $region12: #{net_forward.4} parent=0 // pred_region
    _
  $region13: #{net_forward.4} parent=0 // pred_fallthru
    _
  %v14 = vld [vmem:[%s1] sm:$0xff]
  %v15 = vld [vmem:[%s1 + $0x8] sm:$0xff]
  %v16 = vld [vmem:[%s1 + $0x10] sm:$0xff]
  %v17 = vld [vmem:[%s1 + $0x18] sm:$0xff]
  %v18 = vld [vmem:[%s0] sm:$0xff]
  %v19 = vld [vmem:[%s0 + $0x8] sm:$0xff]
  %v20 = vld [vmem:[%s0 + $0x10] sm:$0xff]
  %v21 = vld [vmem:[%s0 + $0x18] sm:$0xff]
  %v22 = vld [vmem:[%s0 + $0x20] sm:$0xff]
  %v23 = vld [vmem:[%s0 + $0x28] sm:$0xff]
  %v24 = vld [vmem:[%s0 + $0x30] sm:$0xff]
  %v25 = vld [vmem:[%s0 + $0x38] sm:$0xff]
  %v26 = vld [vmem:[%s0 + $0x40] sm:$0xff]
  %v27 = vld [vmem:[%s0 + $0x48] sm:$0xff]
  %v28 = vld [vmem:[%s0 + $0x50] sm:$0xff]
  %v29 = vld [vmem:[%s0 + $0x58] sm:$0xff]
  %v30 = vld [vmem:[%s0 + $0x60] sm:$0xff]
  %v31 = vld [vmem:[%s0 + $0x68] sm:$0xff]
  %v32 = vld [vmem:[%s0 + $0x70] sm:$0xff]
  %v33 = vld [vmem:[%s0 + $0x78] sm:$0xff]
  %v34 = vld [vmem:[%s0 + $0x80] sm:$0xff]
  %v35 = vld [vmem:[%s0 + $0x88] sm:$0xff]
  %v36 = vld [vmem:[%s0 + $0x90] sm:$0x3f]
  %vm37 = vcmask 179200
  %v39 = vsel %vm37, %v15, 0
  %v42 = vsel %vm37, %v17, 0
  %vm44 = vcmask 1045504
  %v46 = vsel %vm44, %v36, 0
  %48 = vmatpush.msra.mxu0 %v33
  %49 = vmatpush.msra.mxu0 %v32
  %50 = vmatpush.msra.mxu0 %v31
  %51 = vmatpush.msra.mxu0 %v30
  %52 = vmatpush.msra.mxu0 %v29
  %53 = vmatpush.msra.mxu0 %v28
  %54 = vmatpush.msra.mxu0 %v27
  %55 = vmatpush.msra.mxu0 %v26
  %56 = vmatpush.msra.mxu0 %v25
  %57 = vmatpush.msra.mxu0 %v24
  %58 = vmatpush.msra.mxu0 %v23
  %59 = vmatpush.msra.mxu0 %v22
  %60 = vmatpush.msra.mxu0 %v21
  %61 = vmatpush.msra.mxu0 %v20
  %62 = vmatpush.msra.mxu0 %v19
  %63 = vmatpush.msra.mxu0 %v18
  %64 = vmatmul.f32.gmra.mxu0 %v14
  %v65 = vpop.f32.mrf.mxu0
  %v66 = vadd.f32 0.0, %v65
  %67 = vmatmul.f32.gmra.mxu0 %v16
  %v68 = vpop.f32.mrf.mxu0
  %v69 = vadd.f32 0.0, %v68
  %70 = vdwg.mxu0
  %71 = vmatpush.msra.mxu0 0.0
  %72 = vmatpush.msra.mxu0 0.0
  %73 = vmatpush.msra.mxu0 0.0
  %74 = vmatpush.msra.mxu0 0.0
  %75 = vmatpush.msra.mxu0 0.0
  %76 = vmatpush.msra.mxu0 0.0
  %77 = vmatpush.msra.mxu0 0.0
  %78 = vmatpush.msra.mxu0 0.0
  %79 = vmatpush.msra.mxu0 0.0
  %80 = vmatpush.msra.mxu0 0.0
  %81 = vmatpush.msra.mxu0 0.0
  %82 = vmatpush.msra.mxu0 0.0
  %83 = vmatpush.msra.mxu0 0.0
  %84 = vmatpush.msra.mxu0 %v46
  %85 = vmatpush.msra.mxu0 %v35
  %86 = vmatpush.msra.mxu0 %v34
  %87 = vmatmul.f32.gmra.mxu0 %v39
  %v88 = vpop.f32.mrf.mxu0
  %v89 = vadd.f32 %v66, %v88
  %90 = vmatmul.f32.gmra.mxu0 %v42
  %v91 = vpop.f32.mrf.mxu0
  %v92 = vadd.f32 %v69, %v91
  %93 = vdwg.mxu0
  %s94 = scalar_lea.vmem %s0, 152
  %v95 = vld [vmem:[%s94] sm:$0xff]
  %v96 = vld [vmem:[%s94 + $0x8] sm:$0xff]
  %v97 = vld [vmem:[%s94 + $0x10] sm:$0xff]
  %v98 = vld [vmem:[%s94 + $0x18] sm:$0xff]
  %v99 = vld [vmem:[%s94 + $0x20] sm:$0xff]
  %v100 = vld [vmem:[%s94 + $0x28] sm:$0xff]
  %v101 = vld [vmem:[%s94 + $0x30] sm:$0xff]
  %v102 = vld [vmem:[%s94 + $0x38] sm:$0xff]
  %v103 = vld [vmem:[%s94 + $0x40] sm:$0xff]
  %v104 = vld [vmem:[%s94 + $0x48] sm:$0xff]
  %v105 = vld [vmem:[%s94 + $0x50] sm:$0xff]
  %v106 = vld [vmem:[%s94 + $0x58] sm:$0xff]
  %v107 = vld [vmem:[%s94 + $0x60] sm:$0xff]
  %v108 = vld [vmem:[%s94 + $0x68] sm:$0xff]
  %v109 = vld [vmem:[%s94 + $0x70] sm:$0xff]
  %v110 = vld [vmem:[%s94 + $0x78] sm:$0xff]
  %v111 = vld [vmem:[%s94 + $0x80] sm:$0xff]
  %v112 = vld [vmem:[%s94 + $0x88] sm:$0xff]
  %v113 = vld [vmem:[%s94 + $0x90] sm:$0x3f]
  %v115 = vsel %vm44, %v113, 0
  %117 = vmatpush.msra.mxu0 %v110
  %118 = vmatpush.msra.mxu0 %v109
  %119 = vmatpush.msra.mxu0 %v108
  %120 = vmatpush.msra.mxu0 %v107
  %121 = vmatpush.msra.mxu0 %v106
  %122 = vmatpush.msra.mxu0 %v105
  %123 = vmatpush.msra.mxu0 %v104
  %124 = vmatpush.msra.mxu0 %v103
  %125 = vmatpush.msra.mxu0 %v102
  %126 = vmatpush.msra.mxu0 %v101
  %127 = vmatpush.msra.mxu0 %v100
  %128 = vmatpush.msra.mxu0 %v99
  %129 = vmatpush.msra.mxu0 %v98
  %130 = vmatpush.msra.mxu0 %v97
  %131 = vmatpush.msra.mxu0 %v96
  %132 = vmatpush.msra.mxu0 %v95
  %133 = vmatmul.f32.gmra.mxu0 %v14
  %v134 = vpop.f32.mrf.mxu0
  %v135 = vadd.f32 0.0, %v134
  %136 = vmatmul.f32.gmra.mxu0 %v16
  %v137 = vpop.f32.mrf.mxu0
  %v138 = vadd.f32 0.0, %v137
  %139 = vdwg.mxu0
  %140 = vmatpush.msra.mxu0 0.0
  %141 = vmatpush.msra.mxu0 0.0
  %142 = vmatpush.msra.mxu0 0.0
  %143 = vmatpush.msra.mxu0 0.0
  %144 = vmatpush.msra.mxu0 0.0
  %145 = vmatpush.msra.mxu0 0.0
  %146 = vmatpush.msra.mxu0 0.0
  %147 = vmatpush.msra.mxu0 0.0
  %148 = vmatpush.msra.mxu0 0.0
  %149 = vmatpush.msra.mxu0 0.0
  %150 = vmatpush.msra.mxu0 0.0
  %151 = vmatpush.msra.mxu0 0.0
  %152 = vmatpush.msra.mxu0 0.0
  %153 = vmatpush.msra.mxu0 %v115
  %154 = vmatpush.msra.mxu0 %v112
  %155 = vmatpush.msra.mxu0 %v111
  %156 = vmatmul.f32.gmra.mxu0 %v39
  %v157 = vpop.f32.mrf.mxu0
  %v158 = vadd.f32 %v135, %v157
  %159 = vmatmul.f32.gmra.mxu0 %v42
  %v160 = vpop.f32.mrf.mxu0
  %v161 = vadd.f32 %v138, %v160
  %162 = vdwg.mxu0
  %v163 = vmax.f32 %v89, %v158
  %v164 = vmax.f32 %v92, %v161
  %s165 = scalar_lea.vmem %s0, 304
  %v166 = vld [vmem:[%s165] sm:$0xff]
  %v167 = vld [vmem:[%s165 + $0x8] sm:$0xff]
  %v168 = vld [vmem:[%s165 + $0x10] sm:$0xff]
  %v169 = vld [vmem:[%s165 + $0x18] sm:$0xff]
  %v170 = vld [vmem:[%s165 + $0x20] sm:$0xff]
  %v171 = vld [vmem:[%s165 + $0x28] sm:$0xff]
  %v172 = vld [vmem:[%s165 + $0x30] sm:$0xff]
  %v173 = vld [vmem:[%s165 + $0x38] sm:$0xff]
  %v174 = vld [vmem:[%s165 + $0x40] sm:$0xff]
  %v175 = vld [vmem:[%s165 + $0x48] sm:$0xff]
  %v176 = vld [vmem:[%s165 + $0x50] sm:$0xff]
  %v177 = vld [vmem:[%s165 + $0x58] sm:$0xff]
  %v178 = vld [vmem:[%s165 + $0x60] sm:$0xff]
  %v179 = vld [vmem:[%s165 + $0x68] sm:$0xff]
  %v180 = vld [vmem:[%s165 + $0x70] sm:$0xff]
  %v181 = vld [vmem:[%s165 + $0x78] sm:$0xff]
  %v182 = vld [vmem:[%s165 + $0x80] sm:$0xff]
  %v183 = vld [vmem:[%s165 + $0x88] sm:$0xff]
  %v184 = vld [vmem:[%s165 + $0x90] sm:$0x3f]
  %v186 = vsel %vm44, %v184, 0
  %188 = vmatpush.msra.mxu0 %v181
  %189 = vmatpush.msra.mxu0 %v180
  %190 = vmatpush.msra.mxu0 %v179
  %191 = vmatpush.msra.mxu0 %v178
  %192 = vmatpush.msra.mxu0 %v177
  %193 = vmatpush.msra.mxu0 %v176
  %194 = vmatpush.msra.mxu0 %v175
  %195 = vmatpush.msra.mxu0 %v174
  %196 = vmatpush.msra.mxu0 %v173
  %197 = vmatpush.msra.mxu0 %v172
  %198 = vmatpush.msra.mxu0 %v171
  %199 = vmatpush.msra.mxu0 %v170
  %200 = vmatpush.msra.mxu0 %v169
  %201 = vmatpush.msra.mxu0 %v168
  %202 = vmatpush.msra.mxu0 %v167
  %203 = vmatpush.msra.mxu0 %v166
  %204 = vmatmul.f32.gmra.mxu0 %v14
  %v205 = vpop.f32.mrf.mxu0
  %v206 = vadd.f32 0.0, %v205
  %207 = vmatmul.f32.gmra.mxu0 %v16
  %v208 = vpop.f32.mrf.mxu0
  %v209 = vadd.f32 0.0, %v208
  %210 = vdwg.mxu0
  %211 = vmatpush.msra.mxu0 0.0
  %212 = vmatpush.msra.mxu0 0.0
  %213 = vmatpush.msra.mxu0 0.0
  %214 = vmatpush.msra.mxu0 0.0
  %215 = vmatpush.msra.mxu0 0.0
  %216 = vmatpush.msra.mxu0 0.0
  %217 = vmatpush.msra.mxu0 0.0
  %218 = vmatpush.msra.mxu0 0.0
  %219 = vmatpush.msra.mxu0 0.0
  %220 = vmatpush.msra.mxu0 0.0
  %221 = vmatpush.msra.mxu0 0.0
  %222 = vmatpush.msra.mxu0 0.0
  %223 = vmatpush.msra.mxu0 0.0
  %224 = vmatpush.msra.mxu0 %v186
  %225 = vmatpush.msra.mxu0 %v183
  %226 = vmatpush.msra.mxu0 %v182
  %227 = vmatmul.f32.gmra.mxu0 %v39
  %v228 = vpop.f32.mrf.mxu0
  %v229 = vadd.f32 %v206, %v228
  %230 = vmatmul.f32.gmra.mxu0 %v42
  %v231 = vpop.f32.mrf.mxu0
  %v232 = vadd.f32 %v209, %v231
  %233 = vdwg.mxu0
  %v234 = vmax.f32 %v163, %v229
  %v235 = vmax.f32 %v164, %v232
  %s236 = scalar_lea.vmem %s0, 456
  %v237 = vld [vmem:[%s236] sm:$0xff]
  %v238 = vld [vmem:[%s236 + $0x8] sm:$0xff]
  %v239 = vld [vmem:[%s236 + $0x10] sm:$0xff]
  %v240 = vld [vmem:[%s236 + $0x18] sm:$0xff]
  %v241 = vld [vmem:[%s236 + $0x20] sm:$0xff]
  %v242 = vld [vmem:[%s236 + $0x28] sm:$0xff]
  %v243 = vld [vmem:[%s236 + $0x30] sm:$0xff]
  %v244 = vld [vmem:[%s236 + $0x38] sm:$0xff]
  %v245 = vld [vmem:[%s236 + $0x40] sm:$0xff]
  %v246 = vld [vmem:[%s236 + $0x48] sm:$0xff]
  %v247 = vld [vmem:[%s236 + $0x50] sm:$0xff]
  %v248 = vld [vmem:[%s236 + $0x58] sm:$0xff]
  %v249 = vld [vmem:[%s236 + $0x60] sm:$0xff]
  %v250 = vld [vmem:[%s236 + $0x68] sm:$0xff]
  %v251 = vld [vmem:[%s236 + $0x70] sm:$0xff]
  %v252 = vld [vmem:[%s236 + $0x78] sm:$0xff]
  %v253 = vld [vmem:[%s236 + $0x80] sm:$0xff]
  %v254 = vld [vmem:[%s236 + $0x88] sm:$0xff]
  %v255 = vld [vmem:[%s236 + $0x90] sm:$0x3f]
  %v257 = vsel %vm44, %v255, 0
  %259 = vmatpush.msra.mxu0 %v252
  %260 = vmatpush.msra.mxu0 %v251
  %261 = vmatpush.msra.mxu0 %v250
  %262 = vmatpush.msra.mxu0 %v249
  %263 = vmatpush.msra.mxu0 %v248
  %264 = vmatpush.msra.mxu0 %v247
  %265 = vmatpush.msra.mxu0 %v246
  %266 = vmatpush.msra.mxu0 %v245
  %267 = vmatpush.msra.mxu0 %v244
  %268 = vmatpush.msra.mxu0 %v243
  %269 = vmatpush.msra.mxu0 %v242
  %270 = vmatpush.msra.mxu0 %v241
  %271 = vmatpush.msra.mxu0 %v240
  %272 = vmatpush.msra.mxu0 %v239
  %273 = vmatpush.msra.mxu0 %v238
  %274 = vmatpush.msra.mxu0 %v237
  %275 = vmatmul.f32.gmra.mxu0 %v14
  %v276 = vpop.f32.mrf.mxu0
  %v277 = vadd.f32 0.0, %v276
  %278 = vmatmul.f32.gmra.mxu0 %v16
  %v279 = vpop.f32.mrf.mxu0
  %v280 = vadd.f32 0.0, %v279
  %281 = vdwg.mxu0
  %282 = vmatpush.msra.mxu0 0.0
  %283 = vmatpush.msra.mxu0 0.0
  %284 = vmatpush.msra.mxu0 0.0
  %285 = vmatpush.msra.mxu0 0.0
  %286 = vmatpush.msra.mxu0 0.0
  %287 = vmatpush.msra.mxu0 0.0
  %288 = vmatpush.msra.mxu0 0.0
  %289 = vmatpush.msra.mxu0 0.0
  %290 = vmatpush.msra.mxu0 0.0
  %291 = vmatpush.msra.mxu0 0.0
  %292 = vmatpush.msra.mxu0 0.0
  %293 = vmatpush.msra.mxu0 0.0
  %294 = vmatpush.msra.mxu0 0.0
  %295 = vmatpush.msra.mxu0 %v257
  %296 = vmatpush.msra.mxu0 %v254
  %297 = vmatpush.msra.mxu0 %v253
  %298 = vmatmul.f32.gmra.mxu0 %v39
  %v299 = vpop.f32.mrf.mxu0
  %v300 = vadd.f32 %v277, %v299
  %301 = vmatmul.f32.gmra.mxu0 %v42
  %v302 = vpop.f32.mrf.mxu0
  %v303 = vadd.f32 %v280, %v302
  %304 = vdwg.mxu0
  %v305 = vmax.f32 %v234, %v300
  %v306 = vmax.f32 %v235, %v303
  %v307 = vld [vmem:[%s2] sm:$0xff]
  %v308 = vld [vmem:[%s2 + $0x8] sm:$0xff]
  %310 = vset.pattern.permute.xlu0 0
  %311 = vperm.xlu0 %310, %v307
  %v312 = vpop.permute.xlu0 %311
  %315 = vset.pattern.permute.xlu0 0
  %316 = vperm.xlu0 %315, %v308
  %v317 = vpop.permute.xlu0 %316
  %v319 = vadd.f32 %v305, %v312
  %v320 = vadd.f32 %v306, %v317
  %v321 = vmax.f32 %v319, 0.0
  %v322 = vmax.f32 %v320, 0.0
  %323 = vst [vmem:[%s3] sm:$0xff] %v321
  %324 = vst [vmem:[%s3 + $0x8] sm:$0xff] %v322
  // Predicated region
  $region14: #{net_forward.4} parent=0 // pred_check
    _
  $region15: #{net_forward.4} parent=0 // pred_check_branch
    %326 = sbr.rel (0) target = $region17
  $region16: #{net_forward.4} parent=0 // pred_region
    _
  $region17: #{net_forward.4} parent=0 // pred_fallthru
    _
  // Predicated region
  $region18: #{net_forward.4} parent=0 // pred_check
    _
  $region19: #{net_forward.4} parent=0 // pred_check_branch
    %328 = sbr.rel (0) target = $region21
  $region20: #{net_forward.4} parent=0 // pred_region
    _
  $region21: #{net_forward.4} parent=0 // pred_fallthru
    _

// kernel: net_forward.5
$region0: #{net_forward.5}
  #allocation0 [shape = 'u32[]', space=smem, size = 0x4, offset = 0x4, fixed_abs, tag = 'smem constant byte address 0x4 - core index']
  #allocation1 [shape = 'u32[72,128]{1,0:T(1,128)}', space=vmem, size = 0x9000, scoped, tag = 'internal scratch']
  %s0 = inlined_call_operand.vmem [shape: f32[2,1024], index: 0, kind: input, shape index: {}]
  %s1 = inlined_call_operand.vmem [shape: f32[1024,2048], index: 1, kind: input, shape index: {}]
  %s2 = inlined_call_operand.vmem [shape: f32[1,2048], index: 2, kind: input, shape index: {}]
  %s3 = inlined_call_operand.vmem [shape: f32[2048,10], index: 3, kind: input, shape index: {}]
  %s4 = inlined_call_operand.vmem [shape: f32[1,10], index: 4, kind: input, shape index: {}]
  %s5 = inlined_call_operand.hbm [shape: f32[2,10], index: 5, kind: output, shape index: {}]
  %s6 = sld [smem:[#allocation0]]
  $region84: #{net_forward.5} parent=0
    _
  %s8 = ssub.s32 1, %s6
  %s9 = scalar_select 0, %s8, %s6
  $region1: #{net_forward.5} parent=0
    #allocation2 [shape = 'u8[4194304]{0}', space=vmem, size = 0x400000, scoped, tag = 'input window, operand 1']
    #allocation3 [shape = 'u8[1024]{0}', space=vmem, size = 0x400, scoped, tag = 'output window, operand 0, single buffered']
    #allocation4 [shape = 's32[2]{0}', space=sflag, size = 0x8, scoped, tag = 'scoped memory for net_forward.5']
    %10 = vsyncpa [#allocation4], 0
    loop: start=0, step=1, limit=6
    $region2: #{net_forward.5} parent=1 // loop_pre_header
      _
    $region3: #{net_forward.5} parent=1 // loop_header
      %s12 = sphi 0, %s16
      %p13 = scmp.ge.s32.totalorder %s12, 6
      %s20 = sphi 0, %s20
      %s22 = sphi 0, %s20
      %s23 = sphi 0, %s22
      %s37 = sphi 0, %s23
      %s43 = sphi 0, %s45
      %s46 = sphi 0, %s43
      %s47 = sphi 0, %s46
      %s63 = sphi 0, %s47
      %s69 = sphi 0, %s71
      %s72 = sphi 0, %s69
      %s73 = sphi 0, %s72
      %s89 = sphi 0, %s73
      %s95 = sphi 0, %s97
      %s98 = sphi 0, %s95
      %s99 = sphi 0, %s98
      %s115 = sphi 0, %s99
      %s119 = sphi 0, %s119
      %s121 = sphi 0, %s119
      %s122 = sphi 0, %s121
      %s136 = sphi 0, %s122
      %s140 = sphi 0, %s140
      %s142 = sphi 0, %s140
      %s143 = sphi 0, %s142
      %s157 = sphi 0, %s143
    $region4: #{net_forward.5} parent=1 // loop_header_branch
      %15 = sbr.rel (%p13) target = $region8
    $region5: #{net_forward.5} parent=1 // loop_body
      %s17 = ssub.s32 %s12, 1
      %s18 = ssub.s32 %s12, 2
      %s19 = sadd.s32 %s12, 1
      %s21 = sadd.s32 %s20, 1
      %p24 = scmp.eq.s32.totalorder %s12, 3
      %p25 = scmp.ne.s32.totalorder %s20, %s22
      %p26 = scmp.eq.s32.totalorder %s12, 0
      %p27 = por %p25, %p26
      %p28 = scmp.ne.s32.totalorder %s20, %s22
      %p29 = scmp.eq.s32.totalorder %s17, 3
      %p30 = por %p28, %p29
      %p31 = scmp.ne.s32.totalorder %s22, %s23
      %p32 = scmp.eq.s32.totalorder %s17, 0
      %p33 = por %p31, %p32
      %p34 = scmp.ne.s32.totalorder %s22, %s23
      %p35 = scmp.eq.s32.totalorder %s18, 3
      %p36 = por %p34, %p35
      %p38 = scmp.ne.s32.totalorder %s23, %s37
      %p39 = scmp.eq.s32.totalorder %s18, 0
      %p40 = por %p38, %p39
      %s41 = ssub.s32 %s12, %s19
      %p42 = scmp.eq.s32.totalorder %s41, 0
      %s44 = sadd.s32 %s43, 1
      %s45 = scalar_select %p42, %s43, %s44
      %p48 = pneg %p42
      %p49 = scmp.eq.s32.totalorder %s12, 3
      %p50 = por %p48, %p49
      %p51 = scmp.ne.s32.totalorder %s43, %s46
      %p52 = scmp.eq.s32.totalorder %s12, 0
      %p53 = por %p51, %p52
      %p54 = scmp.ne.s32.totalorder %s43, %s46
      %p55 = scmp.eq.s32.totalorder %s17, 3
      %p56 = por %p54, %p55
      %p57 = scmp.ne.s32.totalorder %s46, %s47
      %p58 = scmp.eq.s32.totalorder %s17, 0
      %p59 = por %p57, %p58
      %p60 = scmp.ne.s32.totalorder %s46, %s47
      %p61 = scmp.eq.s32.totalorder %s18, 3
      %p62 = por %p60, %p61
      %p64 = scmp.ne.s32.totalorder %s47, %s63
      %p65 = scmp.eq.s32.totalorder %s18, 0
      %p66 = por %p64, %p65
      %s67 = ssub.s32 %s12, %s19
      %p68 = scmp.eq.s32.totalorder %s67, 0
      %s70 = sadd.s32 %s69, 1
      %s71 = scalar_select %p68, %s69, %s70
      %p74 = pneg %p68
      %p75 = scmp.eq.s32.totalorder %s12, 3
      %p76 = por %p74, %p75
      %p77 = scmp.ne.s32.totalorder %s69, %s72
      %p78 = scmp.eq.s32.totalorder %s12, 0
      %p79 = por %p77, %p78
      %p80 = scmp.ne.s32.totalorder %s69, %s72
      %p81 = scmp.eq.s32.totalorder %s17, 3
      %p82 = por %p80, %p81
      %p83 = scmp.ne.s32.totalorder %s72, %s73
      %p84 = scmp.eq.s32.totalorder %s17, 0
      %p85 = por %p83, %p84
      %p86 = scmp.ne.s32.totalorder %s72, %s73
      %p87 = scmp.eq.s32.totalorder %s18, 3
      %p88 = por %p86, %p87
      %p90 = scmp.ne.s32.totalorder %s73, %s89
      %p91 = scmp.eq.s32.totalorder %s18, 0
      %p92 = por %p90, %p91
      %s93 = ssub.s32 %s12, %s19
      %p94 = scmp.eq.s32.totalorder %s93, 0
      %s96 = sadd.s32 %s95, 1
      %s97 = scalar_select %p94, %s95, %s96
      %p100 = pneg %p94
      %p101 = scmp.eq.s32.totalorder %s12, 3
      %p102 = por %p100, %p101
      %p103 = scmp.ne.s32.totalorder %s95, %s98
      %p104 = scmp.eq.s32.totalorder %s12, 0
      %p105 = por %p103, %p104
      %p106 = scmp.ne.s32.totalorder %s95, %s98
      %p107 = scmp.eq.s32.totalorder %s17, 3
      %p108 = por %p106, %p107
      %p109 = scmp.ne.s32.totalorder %s98, %s99
      %p110 = scmp.eq.s32.totalorder %s17, 0
      %p111 = por %p109, %p110
      %p112 = scmp.ne.s32.totalorder %s98, %s99
      %p113 = scmp.eq.s32.totalorder %s18, 3
      %p114 = por %p112, %p113
      %p116 = scmp.ne.s32.totalorder %s99, %s115
      %p117 = scmp.eq.s32.totalorder %s18, 0
      %p118 = por %p116, %p117
      %s120 = sadd.s32 %s119, 1
      %p123 = scmp.eq.s32.totalorder %s12, 3
      %p124 = scmp.ne.s32.totalorder %s119, %s121
      %p125 = scmp.eq.s32.totalorder %s12, 0
      %p126 = por %p124, %p125
      %p127 = scmp.ne.s32.totalorder %s119, %s121
      %p128 = scmp.eq.s32.totalorder %s17, 3
      %p129 = por %p127, %p128
      %p130 = scmp.ne.s32.totalorder %s121, %s122
      %p131 = scmp.eq.s32.totalorder %s17, 0
      %p132 = por %p130, %p131
      %p133 = scmp.ne.s32.totalorder %s121, %s122
      %p134 = scmp.eq.s32.totalorder %s18, 3
      %p135 = por %p133, %p134
      %p137 = scmp.ne.s32.totalorder %s122, %s136
      %p138 = scmp.eq.s32.totalorder %s18, 0
      %p139 = por %p137, %p138
      %s141 = sadd.s32 %s140, 1
      %p144 = scmp.eq.s32.totalorder %s12, 3
      %p145 = scmp.ne.s32.totalorder %s140, %s142
      %p146 = scmp.eq.s32.totalorder %s12, 0
      %p147 = por %p145, %p146
      %p148 = scmp.ne.s32.totalorder %s140, %s142
      %p149 = scmp.eq.s32.totalorder %s17, 3
      %p150 = por %p148, %p149
      %p151 = scmp.ne.s32.totalorder %s142, %s143
      %p152 = scmp.eq.s32.totalorder %s17, 0
      %p153 = por %p151, %p152
      %p154 = scmp.ne.s32.totalorder %s142, %s143
      %p155 = scmp.eq.s32.totalorder %s18, 3
      %p156 = por %p154, %p155
      %p158 = scmp.ne.s32.totalorder %s143, %s157
      %p159 = scmp.eq.s32.totalorder %s18, 0
      %p160 = por %p158, %p159
      %p161 = scmp.le.s32.totalorder 1, %s12
      %p162 = scmp.lt.s32.totalorder %s12, 5
      %p163 = pnand %p161, %p162
      %p164 = pneg %p163
      // Predicated region
      $region9: #{net_forward.5} parent=5 // pred_check
        _
      $region10: #{net_forward.5} parent=5 // pred_check_branch
        %166 = sbr.rel (%p163) target = $region12
      $region11: #{net_forward.5} parent=5 // pred_region
        %s167 = ssub.s32 %s12, 1
        // Predicated region
        $region13: #{net_forward.5} parent=11 // pred_check
          %p168 = pneg %p33
        $region14: #{net_forward.5} parent=11 // pred_check_branch
          %170 = sbr.rel (%p168) target = $region16
        $region15: #{net_forward.5} parent=11 // pred_region
          _
        $region16: #{net_forward.5} parent=11 // pred_fallthru
          _
        // Predicated region
        $region17: #{net_forward.5} parent=11 // pred_check
          %p171 = pneg %p132
        $region18: #{net_forward.5} parent=11 // pred_check_branch
          %173 = sbr.rel (%p171) target = $region20
        $region19: #{net_forward.5} parent=11 // pred_region
          _
        $region20: #{net_forward.5} parent=11 // pred_fallthru
          _
      $region12: #{net_forward.5} parent=5 // pred_fallthru
        _
      %p174 = scmp.lt.s32.totalorder %s12, 4
      // Predicated region
      $region21: #{net_forward.5} parent=5 // pred_check
        %p175 = pneg %p174
      $region22: #{net_forward.5} parent=5 // pred_check_branch
        %177 = sbr.rel (%p175) target = $region24
      $region23: #{net_forward.5} parent=5 // pred_region
        // Predicated region
        $region25: #{net_forward.5} parent=23 // pred_check
          %p178 = pneg %p53
        $region26: #{net_forward.5} parent=23 // pred_check_branch
          %180 = sbr.rel (%p178) target = $region28
        $region27: #{net_forward.5} parent=23 // pred_region
          %s181 = sand.u32 %s43, 1
          %s182 = sand.u32 %s43, 1
          %s183 = smul.addr %s182, 4096
          %s184 = scalar_lea.vmem [#allocation2], %s183
          %s185 = smul.u32 4, %s12
          %s186 = smul.addr %s185, 8
          %s187 = scalar_lea.vmem %s1, %s186
          // Predicated region
          $region29: #{net_forward.5} parent=27 // pred_check
            _
          $region30: #{net_forward.5} parent=27 // pred_check_branch
            %189 = sbr.rel (0) target = $region32
          $region31: #{net_forward.5} parent=27 // pred_region
            // Predicated region
            $region33: #{net_forward.5} parent=31 // pred_check
              _
            $region34: #{net_forward.5} parent=31 // pred_check_branch
              %191 = sbr.rel (0) target = $region36
            $region35: #{net_forward.5} parent=31 // pred_region
              loop: start=0, step=1, limit=1
              $region37: #{net_forward.5} parent=35 // loop_pre_header
                _
              $region38: #{net_forward.5} parent=35 // loop_header
                %s193 = sphi 0, %s197
                %p194 = scmp.ge.s32.totalorder %s193, 1
                %s198 = sphi %s187, %s187
                %s199 = sphi %s184, %s184
              $region39: #{net_forward.5} parent=35 // loop_header_branch
                %196 = sbr.rel (%p194) target = $region43
              $region40: #{net_forward.5} parent=35 // loop_body
                %v200 = vld [vmem:[%s198] sm:$0xff]
                %201 = vst [vmem:[%s199] sm:$0xff] %v200
                %v202 = vld [vmem:[%s198 + $0x8] sm:$0xff]
                %203 = vst [vmem:[%s199 + $0x8] sm:$0xff] %v202
                %v204 = vld [vmem:[%s198 + $0x10] sm:$0xff]
                %205 = vst [vmem:[%s199 + $0x10] sm:$0xff] %v204
                %v206 = vld [vmem:[%s198 + $0x18] sm:$0xff]
                %207 = vst [vmem:[%s199 + $0x18] sm:$0xff] %v206
                %v208 = vld [vmem:[%s198 + $0x80] sm:$0xff]
                %209 = vst [vmem:[%s199 + $0x20] sm:$0xff] %v208
                %v210 = vld [vmem:[%s198 + $0x88] sm:$0xff]
                %211 = vst [vmem:[%s199 + $0x28] sm:$0xff] %v210
                %v212 = vld [vmem:[%s198 + $0x90] sm:$0xff]
                %213 = vst [vmem:[%s199 + $0x30] sm:$0xff] %v212
                %v214 = vld [vmem:[%s198 + $0x98] sm:$0xff]
                %215 = vst [vmem:[%s199 + $0x38] sm:$0xff] %v214
                %v216 = vld [vmem:[%s198 + $0x100] sm:$0xff]
                %217 = vst [vmem:[%s199 + $0x40] sm:$0xff] %v216
                %v218 = vld [vmem:[%s198 + $0x108] sm:$0xff]
                %219 = vst [vmem:[%s199 + $0x48] sm:$0xff] %v218
                %v220 = vld [vmem:[%s198 + $0x110] sm:$0xff]
                %221 = vst [vmem:[%s199 + $0x50] sm:$0xff] %v220
                %v222 = vld [vmem:[%s198 + $0x118] sm:$0xff]
                %223 = vst [vmem:[%s199 + $0x58] sm:$0xff] %v222
                %v224 = vld [vmem:[%s198 + $0x180] sm:$0xff]
                %225 = vst [vmem:[%s199 + $0x60] sm:$0xff] %v224
                %v226 = vld [vmem:[%s198 + $0x188] sm:$0xff]
                %227 = vst [vmem:[%s199 + $0x68] sm:$0xff] %v226
                %v228 = vld [vmem:[%s198 + $0x190] sm:$0xff]
                %229 = vst [vmem:[%s199 + $0x70] sm:$0xff] %v228
                %v230 = vld [vmem:[%s198 + $0x198] sm:$0xff]
                %231 = vst [vmem:[%s199 + $0x78] sm:$0xff] %v230
                %v232 = vld [vmem:[%s198 + $0x200] sm:$0xff]
                %233 = vst [vmem:[%s199 + $0x80] sm:$0xff] %v232
                %v234 = vld [vmem:[%s198 + $0x208] sm:$0xff]
                %235 = vst [vmem:[%s199 + $0x88] sm:$0xff] %v234
                %v236 = vld [vmem:[%s198 + $0x210] sm:$0xff]
                %237 = vst [vmem:[%s199 + $0x90] sm:$0xff] %v236
                %v238 = vld [vmem:[%s198 + $0x218] sm:$0xff]
                %239 = vst [vmem:[%s199 + $0x98] sm:$0xff] %v238
                %v240 = vld [vmem:[%s198 + $0x280] sm:$0xff]
                %241 = vst [vmem:[%s199 + $0xa0] sm:$0xff] %v240
                %v242 = vld [vmem:[%s198 + $0x288] sm:$0xff]
                %243 = vst [vmem:[%s199 + $0xa8] sm:$0xff] %v242
                %v244 = vld [vmem:[%s198 + $0x290] sm:$0xff]
                %245 = vst [vmem:[%s199 + $0xb0] sm:$0xff] %v244
                %v246 = vld [vmem:[%s198 + $0x298] sm:$0xff]
                %247 = vst [vmem:[%s199 + $0xb8] sm:$0xff] %v246
                %v248 = vld [vmem:[%s198 + $0x300] sm:$0xff]
                %249 = vst [vmem:[%s199 + $0xc0] sm:$0xff] %v248
                %v250 = vld [vmem:[%s198 + $0x308] sm:$0xff]
                %251 = vst [vmem:[%s199 + $0xc8] sm:$0xff] %v250
                %v252 = vld [vmem:[%s198 + $0x310] sm:$0xff]
                %253 = vst [vmem:[%s199 + $0xd0] sm:$0xff] %v252
                %v254 = vld [vmem:[%s198 + $0x318] sm:$0xff]
                %255 = vst [vmem:[%s199 + $0xd8] sm:$0xff] %v254
                %v256 = vld [vmem:[%s198 + $0x380] sm:$0xff]
                %257 = vst [vmem:[%s199 + $0xe0] sm:$0xff] %v256
                %v258 = vld [vmem:[%s198 + $0x388] sm:$0xff]
                %259 = vst [vmem:[%s199 + $0xe8] sm:$0xff] %v258
                %v260 = vld [vmem:[%s198 + $0x390] sm:$0xff]
                %261 = vst [vmem:[%s199 + $0xf0] sm:$0xff] %v260
                %v262 = vld [vmem:[%s198 + $0x398] sm:$0xff]
                %263 = vst [vmem:[%s199 + $0xf8] sm:$0xff] %v262
                %v264 = vld [vmem:[%s198 + $0x400] sm:$0xff]
                %265 = vst [vmem:[%s199 + $0x100] sm:$0xff] %v264
                %v266 = vld [vmem:[%s198 + $0x408] sm:$0xff]
                %267 = vst [vmem:[%s199 + $0x108] sm:$0xff] %v266
                %v268 = vld [vmem:[%s198 + $0x410] sm:$0xff]
                %269 = vst [vmem:[%s199 + $0x110] sm:$0xff] %v268
                %v270 = vld [vmem:[%s198 + $0x418] sm:$0xff]
                %271 = vst [vmem:[%s199 + $0x118] sm:$0xff] %v270
                %v272 = vld [vmem:[%s198 + $0x480] sm:$0xff]
                %273 = vst [vmem:[%s199 + $0x120] sm:$0xff] %v272
                %v274 = vld [vmem:[%s198 + $0x488] sm:$0xff]
                %275 = vst [vmem:[%s199 + $0x128] sm:$0xff] %v274
                %v276 = vld [vmem:[%s198 + $0x490] sm:$0xff]
                %277 = vst [vmem:[%s199 + $0x130] sm:$0xff] %v276
                %v278 = vld [vmem:[%s198 + $0x498] sm:$0xff]
                %279 = vst [vmem:[%s199 + $0x138] sm:$0xff] %v278
                %v280 = vld [vmem:[%s198 + $0x500] sm:$0xff]
                %281 = vst [vmem:[%s199 + $0x140] sm:$0xff] %v280
                %v282 = vld [vmem:[%s198 + $0x508] sm:$0xff]
                %283 = vst [vmem:[%s199 + $0x148] sm:$0xff] %v282
                %v284 = vld [vmem:[%s198 + $0x510] sm:$0xff]
                %285 = vst [vmem:[%s199 + $0x150] sm:$0xff] %v284
                %v286 = vld [vmem:[%s198 + $0x518] sm:$0xff]
                %287 = vst [vmem:[%s199 + $0x158] sm:$0xff] %v286
                %v288 = vld [vmem:[%s198 + $0x580] sm:$0xff]
                %289 = vst [vmem:[%s199 + $0x160] sm:$0xff] %v288
                %v290 = vld [vmem:[%s198 + $0x588] sm:$0xff]
                %291 = vst [vmem:[%s199 + $0x168] sm:$0xff] %v290
                %v292 = vld [vmem:[%s198 + $0x590] sm:$0xff]
                %293 = vst [vmem:[%s199 + $0x170] sm:$0xff] %v292
                %v294 = vld [vmem:[%s198 + $0x598] sm:$0xff]
                %295 = vst [vmem:[%s199 + $0x178] sm:$0xff] %v294
                %v296 = vld [vmem:[%s198 + $0x600] sm:$0xff]
                %297 = vst [vmem:[%s199 + $0x180] sm:$0xff] %v296
                %v298 = vld [vmem:[%s198 + $0x608] sm:$0xff]
                %299 = vst [vmem:[%s199 + $0x188] sm:$0xff] %v298
                %v300 = vld [vmem:[%s198 + $0x610] sm:$0xff]
                %301 = vst [vmem:[%s199 + $0x190] sm:$0xff] %v300
                %v302 = vld [vmem:[%s198 + $0x618] sm:$0xff]
                %303 = vst [vmem:[%s199 + $0x198] sm:$0xff] %v302
                %v304 = vld [vmem:[%s198 + $0x680] sm:$0xff]
                %305 = vst [vmem:[%s199 + $0x1a0] sm:$0xff] %v304
                %v306 = vld [vmem:[%s198 + $0x688] sm:$0xff]
                %307 = vst [vmem:[%s199 + $0x1a8] sm:$0xff] %v306
                %v308 = vld [vmem:[%s198 + $0x690] sm:$0xff]
                %309 = vst [vmem:[%s199 + $0x1b0] sm:$0xff] %v308
                %v310 = vld [vmem:[%s198 + $0x698] sm:$0xff]
                %311 = vst [vmem:[%s199 + $0x1b8] sm:$0xff] %v310
                %v312 = vld [vmem:[%s198 + $0x700] sm:$0xff]
                %313 = vst [vmem:[%s199 + $0x1c0] sm:$0xff] %v312
                %v314 = vld [vmem:[%s198 + $0x708] sm:$0xff]
                %315 = vst [vmem:[%s199 + $0x1c8] sm:$0xff] %v314
                %v316 = vld [vmem:[%s198 + $0x710] sm:$0xff]
                %317 = vst [vmem:[%s199 + $0x1d0] sm:$0xff] %v316
                %v318 = vld [vmem:[%s198 + $0x718] sm:$0xff]
                %319 = vst [vmem:[%s199 + $0x1d8] sm:$0xff] %v318
                %v320 = vld [vmem:[%s198 + $0x780] sm:$0xff]
                %321 = vst [vmem:[%s199 + $0x1e0] sm:$0xff] %v320
                %v322 = vld [vmem:[%s198 + $0x788] sm:$0xff]
                %323 = vst [vmem:[%s199 + $0x1e8] sm:$0xff] %v322
                %v324 = vld [vmem:[%s198 + $0x790] sm:$0xff]
                %325 = vst [vmem:[%s199 + $0x1f0] sm:$0xff] %v324
                %v326 = vld [vmem:[%s198 + $0x798] sm:$0xff]
                %327 = vst [vmem:[%s199 + $0x1f8] sm:$0xff] %v326
                %v328 = vld [vmem:[%s198 + $0x800] sm:$0xff]
                %329 = vst [vmem:[%s199 + $0x200] sm:$0xff] %v328
                %v330 = vld [vmem:[%s198 + $0x808] sm:$0xff]
                %331 = vst [vmem:[%s199 + $0x208] sm:$0xff] %v330
                %v332 = vld [vmem:[%s198 + $0x810] sm:$0xff]
                %333 = vst [vmem:[%s199 + $0x210] sm:$0xff] %v332
                %v334 = vld [vmem:[%s198 + $0x818] sm:$0xff]
                %335 = vst [vmem:[%s199 + $0x218] sm:$0xff] %v334
                %v336 = vld [vmem:[%s198 + $0x880] sm:$0xff]
                %337 = vst [vmem:[%s199 + $0x220] sm:$0xff] %v336
                %v338 = vld [vmem:[%s198 + $0x888] sm:$0xff]
                %339 = vst [vmem:[%s199 + $0x228] sm:$0xff] %v338
                %v340 = vld [vmem:[%s198 + $0x890] sm:$0xff]
                %341 = vst [vmem:[%s199 + $0x230] sm:$0xff] %v340
                %v342 = vld [vmem:[%s198 + $0x898] sm:$0xff]
                %343 = vst [vmem:[%s199 + $0x238] sm:$0xff] %v342
                %v344 = vld [vmem:[%s198 + $0x900] sm:$0xff]
                %345 = vst [vmem:[%s199 + $0x240] sm:$0xff] %v344
                %v346 = vld [vmem:[%s198 + $0x908] sm:$0xff]
                %347 = vst [vmem:[%s199 + $0x248] sm:$0xff] %v346
                %v348 = vld [vmem:[%s198 + $0x910] sm:$0xff]
                %349 = vst [vmem:[%s199 + $0x250] sm:$0xff] %v348
                %v350 = vld [vmem:[%s198 + $0x918] sm:$0xff]
                %351 = vst [vmem:[%s199 + $0x258] sm:$0xff] %v350
                %v352 = vld [vmem:[%s198 + $0x980] sm:$0xff]
                %353 = vst [vmem:[%s199 + $0x260] sm:$0xff] %v352
                %v354 = vld [vmem:[%s198 + $0x988] sm:$0xff]
                %355 = vst [vmem:[%s199 + $0x268] sm:$0xff] %v354
                %v356 = vld [vmem:[%s198 + $0x990] sm:$0xff]
                %357 = vst [vmem:[%s199 + $0x270] sm:$0xff] %v356
                %v358 = vld [vmem:[%s198 + $0x998] sm:$0xff]
                %359 = vst [vmem:[%s199 + $0x278] sm:$0xff] %v358
                %v360 = vld [vmem:[%s198 + $0xa00] sm:$0xff]
                %361 = vst [vmem:[%s199 + $0x280] sm:$0xff] %v360
                %v362 = vld [vmem:[%s198 + $0xa08] sm:$0xff]
                %363 = vst [vmem:[%s199 + $0x288] sm:$0xff] %v362
                %v364 = vld [vmem:[%s198 + $0xa10] sm:$0xff]
                %365 = vst [vmem:[%s199 + $0x290] sm:$0xff] %v364
                %v366 = vld [vmem:[%s198 + $0xa18] sm:$0xff]
                %367 = vst [vmem:[%s199 + $0x298] sm:$0xff] %v366
                %v368 = vld [vmem:[%s198 + $0xa80] sm:$0xff]
                %369 = vst [vmem:[%s199 + $0x2a0] sm:$0xff] %v368
                %v370 = vld [vmem:[%s198 + $0xa88] sm:$0xff]
                %371 = vst [vmem:[%s199 + $0x2a8] sm:$0xff] %v370
                %v372 = vld [vmem:[%s198 + $0xa90] sm:$0xff]
                %373 = vst [vmem:[%s199 + $0x2b0] sm:$0xff] %v372
                %v374 = vld [vmem:[%s198 + $0xa98] sm:$0xff]
                %375 = vst [vmem:[%s199 + $0x2b8] sm:$0xff] %v374
                %v376 = vld [vmem:[%s198 + $0xb00] sm:$0xff]
                %377 = vst [vmem:[%s199 + $0x2c0] sm:$0xff] %v376
                %v378 = vld [vmem:[%s198 + $0xb08] sm:$0xff]
                %379 = vst [vmem:[%s199 + $0x2c8] sm:$0xff] %v378
                %v380 = vld [vmem:[%s198 + $0xb10] sm:$0xff]
                %381 = vst [vmem:[%s199 + $0x2d0] sm:$0xff] %v380
                %v382 = vld [vmem:[%s198 + $0xb18] sm:$0xff]
                %383 = vst [vmem:[%s199 + $0x2d8] sm:$0xff] %v382
                %v384 = vld [vmem:[%s198 + $0xb80] sm:$0xff]
                %385 = vst [vmem:[%s199 + $0x2e0] sm:$0xff] %v384
                %v386 = vld [vmem:[%s198 + $0xb88] sm:$0xff]
                %387 = vst [vmem:[%s199 + $0x2e8] sm:$0xff] %v386
                %v388 = vld [vmem:[%s198 + $0xb90] sm:$0xff]
                %389 = vst [vmem:[%s199 + $0x2f0] sm:$0xff] %v388
                %v390 = vld [vmem:[%s198 + $0xb98] sm:$0xff]
                %391 = vst [vmem:[%s199 + $0x2f8] sm:$0xff] %v390
                %v392 = vld [vmem:[%s198 + $0xc00] sm:$0xff]
                %393 = vst [vmem:[%s199 + $0x300] sm:$0xff] %v392
                %v394 = vld [vmem:[%s198 + $0xc08] sm:$0xff]
                %395 = vst [vmem:[%s199 + $0x308] sm:$0xff] %v394
                %v396 = vld [vmem:[%s198 + $0xc10] sm:$0xff]
                %397 = vst [vmem:[%s199 + $0x310] sm:$0xff] %v396
                %v398 = vld [vmem:[%s198 + $0xc18] sm:$0xff]
                %399 = vst [vmem:[%s199 + $0x318] sm:$0xff] %v398
                %v400 = vld [vmem:[%s198 + $0xc80] sm:$0xff]
                %401 = vst [vmem:[%s199 + $0x320] sm:$0xff] %v400
                %v402 = vld [vmem:[%s198 + $0xc88] sm:$0xff]
                %403 = vst [vmem:[%s199 + $0x328] sm:$0xff] %v402
                %v404 = vld [vmem:[%s198 + $0xc90] sm:$0xff]
                %405 = vst [vmem:[%s199 + $0x330] sm:$0xff] %v404
                %v406 = vld [vmem:[%s198 + $0xc98] sm:$0xff]
                %407 = vst [vmem:[%s199 + $0x338] sm:$0xff] %v406
                %v408 = vld [vmem:[%s198 + $0xd00] sm:$0xff]
                %409 = vst [vmem:[%s199 + $0x340] sm:$0xff] %v408
                %v410 = vld [vmem:[%s198 + $0xd08] sm:$0xff]
                %411 = vst [vmem:[%s199 + $0x348] sm:$0xff] %v410
                %v412 = vld [vmem:[%s198 + $0xd10] sm:$0xff]
                %413 = vst [vmem:[%s199 + $0x350] sm:$0xff] %v412
                %v414 = vld [vmem:[%s198 + $0xd18] sm:$0xff]
                %415 = vst [vmem:[%s199 + $0x358] sm:$0xff] %v414
                %v416 = vld [vmem:[%s198 + $0xd80] sm:$0xff]
                %417 = vst [vmem:[%s199 + $0x360] sm:$0xff] %v416
                %v418 = vld [vmem:[%s198 + $0xd88] sm:$0xff]
                %419 = vst [vmem:[%s199 + $0x368] sm:$0xff] %v418
                %v420 = vld [vmem:[%s198 + $0xd90] sm:$0xff]
                %421 = vst [vmem:[%s199 + $0x370] sm:$0xff] %v420
                %v422 = vld [vmem:[%s198 + $0xd98] sm:$0xff]
                %423 = vst [vmem:[%s199 + $0x378] sm:$0xff] %v422
                %v424 = vld [vmem:[%s198 + $0xe00] sm:$0xff]
                %425 = vst [vmem:[%s199 + $0x380] sm:$0xff] %v424
                %v426 = vld [vmem:[%s198 + $0xe08] sm:$0xff]
                %427 = vst [vmem:[%s199 + $0x388] sm:$0xff] %v426
                %v428 = vld [vmem:[%s198 + $0xe10] sm:$0xff]
                %429 = vst [vmem:[%s199 + $0x390] sm:$0xff] %v428
                %v430 = vld [vmem:[%s198 + $0xe18] sm:$0xff]
                %431 = vst [vmem:[%s199 + $0x398] sm:$0xff] %v430
                %v432 = vld [vmem:[%s198 + $0xe80] sm:$0xff]
                %433 = vst [vmem:[%s199 + $0x3a0] sm:$0xff] %v432
                %v434 = vld [vmem:[%s198 + $0xe88] sm:$0xff]
                %435 = vst [vmem:[%s199 + $0x3a8] sm:$0xff] %v434
                %v436 = vld [vmem:[%s198 + $0xe90] sm:$0xff]
                %437 = vst [vmem:[%s199 + $0x3b0] sm:$0xff] %v436
                %v438 = vld [vmem:[%s198 + $0xe98] sm:$0xff]
                %439 = vst [vmem:[%s199 + $0x3b8] sm:$0xff] %v438
                %v440 = vld [vmem:[%s198 + $0xf00] sm:$0xff]
                %441 = vst [vmem:[%s199 + $0x3c0] sm:$0xff] %v440
                %v442 = vld [vmem:[%s198 + $0xf08] sm:$0xff]
                %443 = vst [vmem:[%s199 + $0x3c8] sm:$0xff] %v442
                %v444 = vld [vmem:[%s198 + $0xf10] sm:$0xff]
                %445 = vst [vmem:[%s199 + $0x3d0] sm:$0xff] %v444
                %v446 = vld [vmem:[%s198 + $0xf18] sm:$0xff]
                %447 = vst [vmem:[%s199 + $0x3d8] sm:$0xff] %v446
                %v448 = vld [vmem:[%s198 + $0xf80] sm:$0xff]
                %449 = vst [vmem:[%s199 + $0x3e0] sm:$0xff] %v448
                %v450 = vld [vmem:[%s198 + $0xf88] sm:$0xff]
                %451 = vst [vmem:[%s199 + $0x3e8] sm:$0xff] %v450
                %v452 = vld [vmem:[%s198 + $0xf90] sm:$0xff]
                %453 = vst [vmem:[%s199 + $0x3f0] sm:$0xff] %v452
                %v454 = vld [vmem:[%s198 + $0xf98] sm:$0xff]
                %455 = vst [vmem:[%s199 + $0x3f8] sm:$0xff] %v454
                %v456 = vld [vmem:[%s198 + $0x1000] sm:$0xff]
                %457 = vst [vmem:[%s199 + $0x400] sm:$0xff] %v456
                %v458 = vld [vmem:[%s198 + $0x1008] sm:$0xff]
                %459 = vst [vmem:[%s199 + $0x408] sm:$0xff] %v458
                %v460 = vld [vmem:[%s198 + $0x1010] sm:$0xff]
                %461 = vst [vmem:[%s199 + $0x410] sm:$0xff] %v460
                %v462 = vld [vmem:[%s198 + $0x1018] sm:$0xff]
                %463 = vst [vmem:[%s199 + $0x418] sm:$0xff] %v462
                %v464 = vld [vmem:[%s198 + $0x1080] sm:$0xff]
                %465 = vst [vmem:[%s199 + $0x420] sm:$0xff] %v464
                %v466 = vld [vmem:[%s198 + $0x1088] sm:$0xff]
                %467 = vst [vmem:[%s199 + $0x428] sm:$0xff] %v466
                %v468 = vld [vmem:[%s198 + $0x1090] sm:$0xff]
                %469 = vst [vmem:[%s199 + $0x430] sm:$0xff] %v468
                %v470 = vld [vmem:[%s198 + $0x1098] sm:$0xff]
                %471 = vst [vmem:[%s199 + $0x438] sm:$0xff] %v470
                %v472 = vld [vmem:[%s198 + $0x1100] sm:$0xff]
                %473 = vst [vmem:[%s199 + $0x440] sm:$0xff] %v472
                %v474 = vld [vmem:[%s198 + $0x1108] sm:$0xff]
                %475 = vst [vmem:[%s199 + $0x448] sm:$0xff] %v474
                %v476 = vld [vmem:[%s198 + $0x1110] sm:$0xff]
                %477 = vst [vmem:[%s199 + $0x450] sm:$0xff] %v476
                %v478 = vld [vmem:[%s198 + $0x1118] sm:$0xff]
                %479 = vst [vmem:[%s199 + $0x458] sm:$0xff] %v478
                %v480 = vld [vmem:[%s198 + $0x1180] sm:$0xff]
                %481 = vst [vmem:[%s199 + $0x460] sm:$0xff] %v480
                %v482 = vld [vmem:[%s198 + $0x1188] sm:$0xff]
                %483 = vst [vmem:[%s199 + $0x468] sm:$0xff] %v482
                %v484 = vld [vmem:[%s198 + $0x1190] sm:$0xff]
                %485 = vst [vmem:[%s199 + $0x470] sm:$0xff] %v484
                %v486 = vld [vmem:[%s198 + $0x1198] sm:$0xff]
                %487 = vst [vmem:[%s199 + $0x478] sm:$0xff] %v486
                %v488 = vld [vmem:[%s198 + $0x1200] sm:$0xff]
                %489 = vst [vmem:[%s199 + $0x480] sm:$0xff] %v488
                %v490 = vld [vmem:[%s198 + $0x1208] sm:$0xff]
                %491 = vst [vmem:[%s199 + $0x488] sm:$0xff] %v490
                %v492 = vld [vmem:[%s198 + $0x1210] sm:$0xff]
                %493 = vst [vmem:[%s199 + $0x490] sm:$0xff] %v492
                %v494 = vld [vmem:[%s198 + $0x1218] sm:$0xff]
                %495 = vst [vmem:[%s199 + $0x498] sm:$0xff] %v494
                %v496 = vld [vmem:[%s198 + $0x1280] sm:$0xff]
                %497 = vst [vmem:[%s199 + $0x4a0] sm:$0xff] %v496
                %v498 = vld [vmem:[%s198 + $0x1288] sm:$0xff]
                %499 = vst [vmem:[%s199 + $0x4a8] sm:$0xff] %v498
                %v500 = vld [vmem:[%s198 + $0x1290] sm:$0xff]
                %501 = vst [vmem:[%s199 + $0x4b0] sm:$0xff] %v500
                %v502 = vld [vmem:[%s198 + $0x1298] sm:$0xff]
                %503 = vst [vmem:[%s199 + $0x4b8] sm:$0xff] %v502
                %v504 = vld [vmem:[%s198 + $0x1300] sm:$0xff]
                %505 = vst [vmem:[%s199 + $0x4c0] sm:$0xff] %v504
                %v506 = vld [vmem:[%s198 + $0x1308] sm:$0xff]
                %507 = vst [vmem:[%s199 + $0x4c8] sm:$0xff] %v506
                %v508 = vld [vmem:[%s198 + $0x1310] sm:$0xff]
                %509 = vst [vmem:[%s199 + $0x4d0] sm:$0xff] %v508
                %v510 = vld [vmem:[%s198 + $0x1318] sm:$0xff]
                %511 = vst [vmem:[%s199 + $0x4d8] sm:$0xff] %v510
                %v512 = vld [vmem:[%s198 + $0x1380] sm:$0xff]
                %513 = vst [vmem:[%s199 + $0x4e0] sm:$0xff] %v512
                %v514 = vld [vmem:[%s198 + $0x1388] sm:$0xff]
                %515 = vst [vmem:[%s199 + $0x4e8] sm:$0xff] %v514
                %v516 = vld [vmem:[%s198 + $0x1390] sm:$0xff]
                %517 = vst [vmem:[%s199 + $0x4f0] sm:$0xff] %v516
                %v518 = vld [vmem:[%s198 + $0x1398] sm:$0xff]
                %519 = vst [vmem:[%s199 + $0x4f8] sm:$0xff] %v518
                %v520 = vld [vmem:[%s198 + $0x1400] sm:$0xff]
                %521 = vst [vmem:[%s199 + $0x500] sm:$0xff] %v520
                %v522 = vld [vmem:[%s198 + $0x1408] sm:$0xff]
                %523 = vst [vmem:[%s199 + $0x508] sm:$0xff] %v522
                %v524 = vld [vmem:[%s198 + $0x1410] sm:$0xff]
                %525 = vst [vmem:[%s199 + $0x510] sm:$0xff] %v524
                %v526 = vld [vmem:[%s198 + $0x1418] sm:$0xff]
                %527 = vst [vmem:[%s199 + $0x518] sm:$0xff] %v526
                %v528 = vld [vmem:[%s198 + $0x1480] sm:$0xff]
                %529 = vst [vmem:[%s199 + $0x520] sm:$0xff] %v528
                %v530 = vld [vmem:[%s198 + $0x1488] sm:$0xff]
                %531 = vst [vmem:[%s199 + $0x528] sm:$0xff] %v530
                %v532 = vld [vmem:[%s198 + $0x1490] sm:$0xff]
                %533 = vst [vmem:[%s199 + $0x530] sm:$0xff] %v532
                %v534 = vld [vmem:[%s198 + $0x1498] sm:$0xff]
                %535 = vst [vmem:[%s199 + $0x538] sm:$0xff] %v534
                %v536 = vld [vmem:[%s198 + $0x1500] sm:$0xff]
                %537 = vst [vmem:[%s199 + $0x540] sm:$0xff] %v536
                %v538 = vld [vmem:[%s198 + $0x1508] sm:$0xff]
                %539 = vst [vmem:[%s199 + $0x548] sm:$0xff] %v538
                %v540 = vld [vmem:[%s198 + $0x1510] sm:$0xff]
                %541 = vst [vmem:[%s199 + $0x550] sm:$0xff] %v540
                %v542 = vld [vmem:[%s198 + $0x1518] sm:$0xff]
                %543 = vst [vmem:[%s199 + $0x558] sm:$0xff] %v542
                %v544 = vld [vmem:[%s198 + $0x1580] sm:$0xff]
                %545 = vst [vmem:[%s199 + $0x560] sm:$0xff] %v544
                %v546 = vld [vmem:[%s198 + $0x1588] sm:$0xff]
                %547 = vst [vmem:[%s199 + $0x568] sm:$0xff] %v546
                %v548 = vld [vmem:[%s198 + $0x1590] sm:$0xff]
                %549 = vst [vmem:[%s199 + $0x570] sm:$0xff] %v548
                %v550 = vld [vmem:[%s198 + $0x1598] sm:$0xff]
                %551 = vst [vmem:[%s199 + $0x578] sm:$0xff] %v550
                %v552 = vld [vmem:[%s198 + $0x1600] sm:$0xff]
                %553 = vst [vmem:[%s199 + $0x580] sm:$0xff] %v552
                %v554 = vld [vmem:[%s198 + $0x1608] sm:$0xff]
                %555 = vst [vmem:[%s199 + $0x588] sm:$0xff] %v554
                %v556 = vld [vmem:[%s198 + $0x1610] sm:$0xff]
                %557 = vst [vmem:[%s199 + $0x590] sm:$0xff] %v556
                %v558 = vld [vmem:[%s198 + $0x1618] sm:$0xff]
                %559 = vst [vmem:[%s199 + $0x598] sm:$0xff] %v558
                %v560 = vld [vmem:[%s198 + $0x1680] sm:$0xff]
                %561 = vst [vmem:[%s199 + $0x5a0] sm:$0xff] %v560
                %v562 = vld [vmem:[%s198 + $0x1688] sm:$0xff]
                %563 = vst [vmem:[%s199 + $0x5a8] sm:$0xff] %v562
                %v564 = vld [vmem:[%s198 + $0x1690] sm:$0xff]
                %565 = vst [vmem:[%s199 + $0x5b0] sm:$0xff] %v564
                %v566 = vld [vmem:[%s198 + $0x1698] sm:$0xff]
                %567 = vst [vmem:[%s199 + $0x5b8] sm:$0xff] %v566
                %v568 = vld [vmem:[%s198 + $0x1700] sm:$0xff]
                %569 = vst [vmem:[%s199 + $0x5c0] sm:$0xff] %v568
                %v570 = vld [vmem:[%s198 + $0x1708] sm:$0xff]
                %571 = vst [vmem:[%s199 + $0x5c8] sm:$0xff] %v570
                %v572 = vld [vmem:[%s198 + $0x1710] sm:$0xff]
                %573 = vst [vmem:[%s199 + $0x5d0] sm:$0xff] %v572
                %v574 = vld [vmem:[%s198 + $0x1718] sm:$0xff]
                %575 = vst [vmem:[%s199 + $0x5d8] sm:$0xff] %v574
                %v576 = vld [vmem:[%s198 + $0x1780] sm:$0xff]
                %577 = vst [vmem:[%s199 + $0x5e0] sm:$0xff] %v576
                %v578 = vld [vmem:[%s198 + $0x1788] sm:$0xff]
                %579 = vst [vmem:[%s199 + $0x5e8] sm:$0xff] %v578
                %v580 = vld [vmem:[%s198 + $0x1790] sm:$0xff]
                %581 = vst [vmem:[%s199 + $0x5f0] sm:$0xff] %v580
                %v582 = vld [vmem:[%s198 + $0x1798] sm:$0xff]
                %583 = vst [vmem:[%s199 + $0x5f8] sm:$0xff] %v582
                %v584 = vld [vmem:[%s198 + $0x1800] sm:$0xff]
                %585 = vst [vmem:[%s199 + $0x600] sm:$0xff] %v584
                %v586 = vld [vmem:[%s198 + $0x1808] sm:$0xff]
                %587 = vst [vmem:[%s199 + $0x608] sm:$0xff] %v586
                %v588 = vld [vmem:[%s198 + $0x1810] sm:$0xff]
                %589 = vst [vmem:[%s199 + $0x610] sm:$0xff] %v588
                %v590 = vld [vmem:[%s198 + $0x1818] sm:$0xff]
                %591 = vst [vmem:[%s199 + $0x618] sm:$0xff] %v590
                %v592 = vld [vmem:[%s198 + $0x1880] sm:$0xff]
                %593 = vst [vmem:[%s199 + $0x620] sm:$0xff] %v592
                %v594 = vld [vmem:[%s198 + $0x1888] sm:$0xff]
                %595 = vst [vmem:[%s199 + $0x628] sm:$0xff] %v594
                %v596 = vld [vmem:[%s198 + $0x1890] sm:$0xff]
                %597 = vst [vmem:[%s199 + $0x630] sm:$0xff] %v596
                %v598 = vld [vmem:[%s198 + $0x1898] sm:$0xff]
                %599 = vst [vmem:[%s199 + $0x638] sm:$0xff] %v598
                %v600 = vld [vmem:[%s198 + $0x1900] sm:$0xff]
                %601 = vst [vmem:[%s199 + $0x640] sm:$0xff] %v600
                %v602 = vld [vmem:[%s198 + $0x1908] sm:$0xff]
                %603 = vst [vmem:[%s199 + $0x648] sm:$0xff] %v602
                %v604 = vld [vmem:[%s198 + $0x1910] sm:$0xff]
                %605 = vst [vmem:[%s199 + $0x650] sm:$0xff] %v604
                %v606 = vld [vmem:[%s198 + $0x1918] sm:$0xff]
                %607 = vst [vmem:[%s199 + $0x658] sm:$0xff] %v606
                %v608 = vld [vmem:[%s198 + $0x1980] sm:$0xff]
                %609 = vst [vmem:[%s199 + $0x660] sm:$0xff] %v608
                %v610 = vld [vmem:[%s198 + $0x1988] sm:$0xff]
                %611 = vst [vmem:[%s199 + $0x668] sm:$0xff] %v610
                %v612 = vld [vmem:[%s198 + $0x1990] sm:$0xff]
                %613 = vst [vmem:[%s199 + $0x670] sm:$0xff] %v612
                %v614 = vld [vmem:[%s198 + $0x1998] sm:$0xff]
                %615 = vst [vmem:[%s199 + $0x678] sm:$0xff] %v614
                %v616 = vld [vmem:[%s198 + $0x1a00] sm:$0xff]
                %617 = vst [vmem:[%s199 + $0x680] sm:$0xff] %v616
                %v618 = vld [vmem:[%s198 + $0x1a08] sm:$0xff]
                %619 = vst [vmem:[%s199 + $0x688] sm:$0xff] %v618
                %v620 = vld [vmem:[%s198 + $0x1a10] sm:$0xff]
                %621 = vst [vmem:[%s199 + $0x690] sm:$0xff] %v620
                %v622 = vld [vmem:[%s198 + $0x1a18] sm:$0xff]
                %623 = vst [vmem:[%s199 + $0x698] sm:$0xff] %v622
                %v624 = vld [vmem:[%s198 + $0x1a80] sm:$0xff]
                %625 = vst [vmem:[%s199 + $0x6a0] sm:$0xff] %v624
                %v626 = vld [vmem:[%s198 + $0x1a88] sm:$0xff]
                %627 = vst [vmem:[%s199 + $0x6a8] sm:$0xff] %v626
                %v628 = vld [vmem:[%s198 + $0x1a90] sm:$0xff]
                %629 = vst [vmem:[%s199 + $0x6b0] sm:$0xff] %v628
                %v630 = vld [vmem:[%s198 + $0x1a98] sm:$0xff]
                %631 = vst [vmem:[%s199 + $0x6b8] sm:$0xff] %v630
                %v632 = vld [vmem:[%s198 + $0x1b00] sm:$0xff]
                %633 = vst [vmem:[%s199 + $0x6c0] sm:$0xff] %v632
                %v634 = vld [vmem:[%s198 + $0x1b08] sm:$0xff]
                %635 = vst [vmem:[%s199 + $0x6c8] sm:$0xff] %v634
                %v636 = vld [vmem:[%s198 + $0x1b10] sm:$0xff]
                %637 = vst [vmem:[%s199 + $0x6d0] sm:$0xff] %v636
                %v638 = vld [vmem:[%s198 + $0x1b18] sm:$0xff]
                %639 = vst [vmem:[%s199 + $0x6d8] sm:$0xff] %v638
                %v640 = vld [vmem:[%s198 + $0x1b80] sm:$0xff]
                %641 = vst [vmem:[%s199 + $0x6e0] sm:$0xff] %v640
                %v642 = vld [vmem:[%s198 + $0x1b88] sm:$0xff]
                %643 = vst [vmem:[%s199 + $0x6e8] sm:$0xff] %v642
                %v644 = vld [vmem:[%s198 + $0x1b90] sm:$0xff]
                %645 = vst [vmem:[%s199 + $0x6f0] sm:$0xff] %v644
                %v646 = vld [vmem:[%s198 + $0x1b98] sm:$0xff]
                %647 = vst [vmem:[%s199 + $0x6f8] sm:$0xff] %v646
                %v648 = vld [vmem:[%s198 + $0x1c00] sm:$0xff]
                %649 = vst [vmem:[%s199 + $0x700] sm:$0xff] %v648
                %v650 = vld [vmem:[%s198 + $0x1c08] sm:$0xff]
                %651 = vst [vmem:[%s199 + $0x708] sm:$0xff] %v650
                %v652 = vld [vmem:[%s198 + $0x1c10] sm:$0xff]
                %653 = vst [vmem:[%s199 + $0x710] sm:$0xff] %v652
                %v654 = vld [vmem:[%s198 + $0x1c18] sm:$0xff]
                %655 = vst [vmem:[%s199 + $0x718] sm:$0xff] %v654
                %v656 = vld [vmem:[%s198 + $0x1c80] sm:$0xff]
                %657 = vst [vmem:[%s199 + $0x720] sm:$0xff] %v656
                %v658 = vld [vmem:[%s198 + $0x1c88] sm:$0xff]
                %659 = vst [vmem:[%s199 + $0x728] sm:$0xff] %v658
                %v660 = vld [vmem:[%s198 + $0x1c90] sm:$0xff]
                %661 = vst [vmem:[%s199 + $0x730] sm:$0xff] %v660
                %v662 = vld [vmem:[%s198 + $0x1c98] sm:$0xff]
                %663 = vst [vmem:[%s199 + $0x738] sm:$0xff] %v662
                %v664 = vld [vmem:[%s198 + $0x1d00] sm:$0xff]
                %665 = vst [vmem:[%s199 + $0x740] sm:$0xff] %v664
                %v666 = vld [vmem:[%s198 + $0x1d08] sm:$0xff]
                %667 = vst [vmem:[%s199 + $0x748] sm:$0xff] %v666
                %v668 = vld [vmem:[%s198 + $0x1d10] sm:$0xff]
                %669 = vst [vmem:[%s199 + $0x750] sm:$0xff] %v668
                %v670 = vld [vmem:[%s198 + $0x1d18] sm:$0xff]
                %671 = vst [vmem:[%s199 + $0x758] sm:$0xff] %v670
                %v672 = vld [vmem:[%s198 + $0x1d80] sm:$0xff]
                %673 = vst [vmem:[%s199 + $0x760] sm:$0xff] %v672
                %v674 = vld [vmem:[%s198 + $0x1d88] sm:$0xff]
                %675 = vst [vmem:[%s199 + $0x768] sm:$0xff] %v674
                %v676 = vld [vmem:[%s198 + $0x1d90] sm:$0xff]
                %677 = vst [vmem:[%s199 + $0x770] sm:$0xff] %v676
                %v678 = vld [vmem:[%s198 + $0x1d98] sm:$0xff]
                %679 = vst [vmem:[%s199 + $0x778] sm:$0xff] %v678
                %v680 = vld [vmem:[%s198 + $0x1e00] sm:$0xff]
                %681 = vst [vmem:[%s199 + $0x780] sm:$0xff] %v680
                %v682 = vld [vmem:[%s198 + $0x1e08] sm:$0xff]
                %683 = vst [vmem:[%s199 + $0x788] sm:$0xff] %v682
                %v684 = vld [vmem:[%s198 + $0x1e10] sm:$0xff]
                %685 = vst [vmem:[%s199 + $0x790] sm:$0xff] %v684
                %v686 = vld [vmem:[%s198 + $0x1e18] sm:$0xff]
                %687 = vst [vmem:[%s199 + $0x798] sm:$0xff] %v686
                %v688 = vld [vmem:[%s198 + $0x1e80] sm:$0xff]
                %689 = vst [vmem:[%s199 + $0x7a0] sm:$0xff] %v688
                %v690 = vld [vmem:[%s198 + $0x1e88] sm:$0xff]
                %691 = vst [vmem:[%s199 + $0x7a8] sm:$0xff] %v690
                %v692 = vld [vmem:[%s198 + $0x1e90] sm:$0xff]
                %693 = vst [vmem:[%s199 + $0x7b0] sm:$0xff] %v692
                %v694 = vld [vmem:[%s198 + $0x1e98] sm:$0xff]
                %695 = vst [vmem:[%s199 + $0x7b8] sm:$0xff] %v694
                %v696 = vld [vmem:[%s198 + $0x1f00] sm:$0xff]
                %697 = vst [vmem:[%s199 + $0x7c0] sm:$0xff] %v696
                %v698 = vld [vmem:[%s198 + $0x1f08] sm:$0xff]
                %699 = vst [vmem:[%s199 + $0x7c8] sm:$0xff] %v698
                %v700 = vld [vmem:[%s198 + $0x1f10] sm:$0xff]
                %701 = vst [vmem:[%s199 + $0x7d0] sm:$0xff] %v700
                %v702 = vld [vmem:[%s198 + $0x1f18] sm:$0xff]
                %703 = vst [vmem:[%s199 + $0x7d8] sm:$0xff] %v702
                %v704 = vld [vmem:[%s198 + $0x1f80] sm:$0xff]
                %705 = vst [vmem:[%s199 + $0x7e0] sm:$0xff] %v704
                %v706 = vld [vmem:[%s198 + $0x1f88] sm:$0xff]
                %707 = vst [vmem:[%s199 + $0x7e8] sm:$0xff] %v706
                %v708 = vld [vmem:[%s198 + $0x1f90] sm:$0xff]
                %709 = vst [vmem:[%s199 + $0x7f0] sm:$0xff] %v708
                %v710 = vld [vmem:[%s198 + $0x1f98] sm:$0xff]
                %711 = vst [vmem:[%s199 + $0x7f8] sm:$0xff] %v710
                %v712 = vld [vmem:[%s198 + $0x2000] sm:$0xff]
                %713 = vst [vmem:[%s199 + $0x800] sm:$0xff] %v712
                %v714 = vld [vmem:[%s198 + $0x2008] sm:$0xff]
                %715 = vst [vmem:[%s199 + $0x808] sm:$0xff] %v714
                %v716 = vld [vmem:[%s198 + $0x2010] sm:$0xff]
                %717 = vst [vmem:[%s199 + $0x810] sm:$0xff] %v716
                %v718 = vld [vmem:[%s198 + $0x2018] sm:$0xff]
                %719 = vst [vmem:[%s199 + $0x818] sm:$0xff] %v718
                %v720 = vld [vmem:[%s198 + $0x2080] sm:$0xff]
                %721 = vst [vmem:[%s199 + $0x820] sm:$0xff] %v720
                %v722 = vld [vmem:[%s198 + $0x2088] sm:$0xff]
                %723 = vst [vmem:[%s199 + $0x828] sm:$0xff] %v722
                %v724 = vld [vmem:[%s198 + $0x2090] sm:$0xff]
                %725 = vst [vmem:[%s199 + $0x830] sm:$0xff] %v724
                %v726 = vld [vmem:[%s198 + $0x2098] sm:$0xff]
                %727 = vst [vmem:[%s199 + $0x838] sm:$0xff] %v726
                %v728 = vld [vmem:[%s198 + $0x2100] sm:$0xff]
                %729 = vst [vmem:[%s199 + $0x840] sm:$0xff] %v728
                %v730 = vld [vmem:[%s198 + $0x2108] sm:$0xff]
                %731 = vst [vmem:[%s199 + $0x848] sm:$0xff] %v730
                %v732 = vld [vmem:[%s198 + $0x2110] sm:$0xff]
                %733 = vst [vmem:[%s199 + $0x850] sm:$0xff] %v732
                %v734 = vld [vmem:[%s198 + $0x2118] sm:$0xff]
                %735 = vst [vmem:[%s199 + $0x858] sm:$0xff] %v734
                %v736 = vld [vmem:[%s198 + $0x2180] sm:$0xff]
                %737 = vst [vmem:[%s199 + $0x860] sm:$0xff] %v736
                %v738 = vld [vmem:[%s198 + $0x2188] sm:$0xff]
                %739 = vst [vmem:[%s199 + $0x868] sm:$0xff] %v738
                %v740 = vld [vmem:[%s198 + $0x2190] sm:$0xff]
                %741 = vst [vmem:[%s199 + $0x870] sm:$0xff] %v740
                %v742 = vld [vmem:[%s198 + $0x2198] sm:$0xff]
                %743 = vst [vmem:[%s199 + $0x878] sm:$0xff] %v742
                %v744 = vld [vmem:[%s198 + $0x2200] sm:$0xff]
                %745 = vst [vmem:[%s199 + $0x880] sm:$0xff] %v744
                %v746 = vld [vmem:[%s198 + $0x2208] sm:$0xff]
                %747 = vst [vmem:[%s199 + $0x888] sm:$0xff] %v746
                %v748 = vld [vmem:[%s198 + $0x2210] sm:$0xff]
                %749 = vst [vmem:[%s199 + $0x890] sm:$0xff] %v748
                %v750 = vld [vmem:[%s198 + $0x2218] sm:$0xff]
                %751 = vst [vmem:[%s199 + $0x898] sm:$0xff] %v750
                %v752 = vld [vmem:[%s198 + $0x2280] sm:$0xff]
                %753 = vst [vmem:[%s199 + $0x8a0] sm:$0xff] %v752
                %v754 = vld [vmem:[%s198 + $0x2288] sm:$0xff]
                %755 = vst [vmem:[%s199 + $0x8a8] sm:$0xff] %v754
                %v756 = vld [vmem:[%s198 + $0x2290] sm:$0xff]
                %757 = vst [vmem:[%s199 + $0x8b0] sm:$0xff] %v756
                %v758 = vld [vmem:[%s198 + $0x2298] sm:$0xff]
                %759 = vst [vmem:[%s199 + $0x8b8] sm:$0xff] %v758
                %v760 = vld [vmem:[%s198 + $0x2300] sm:$0xff]
                %761 = vst [vmem:[%s199 + $0x8c0] sm:$0xff] %v760
                %v762 = vld [vmem:[%s198 + $0x2308] sm:$0xff]
                %763 = vst [vmem:[%s199 + $0x8c8] sm:$0xff] %v762
                %v764 = vld [vmem:[%s198 + $0x2310] sm:$0xff]
                %765 = vst [vmem:[%s199 + $0x8d0] sm:$0xff] %v764
                %v766 = vld [vmem:[%s198 + $0x2318] sm:$0xff]
                %767 = vst [vmem:[%s199 + $0x8d8] sm:$0xff] %v766
                %v768 = vld [vmem:[%s198 + $0x2380] sm:$0xff]
                %769 = vst [vmem:[%s199 + $0x8e0] sm:$0xff] %v768
                %v770 = vld [vmem:[%s198 + $0x2388] sm:$0xff]
                %771 = vst [vmem:[%s199 + $0x8e8] sm:$0xff] %v770
                %v772 = vld [vmem:[%s198 + $0x2390] sm:$0xff]
                %773 = vst [vmem:[%s199 + $0x8f0] sm:$0xff] %v772
                %v774 = vld [vmem:[%s198 + $0x2398] sm:$0xff]
                %775 = vst [vmem:[%s199 + $0x8f8] sm:$0xff] %v774
                %v776 = vld [vmem:[%s198 + $0x2400] sm:$0xff]
                %777 = vst [vmem:[%s199 + $0x900] sm:$0xff] %v776
                %v778 = vld [vmem:[%s198 + $0x2408] sm:$0xff]
                %779 = vst [vmem:[%s199 + $0x908] sm:$0xff] %v778
                %v780 = vld [vmem:[%s198 + $0x2410] sm:$0xff]
                %781 = vst [vmem:[%s199 + $0x910] sm:$0xff] %v780
                %v782 = vld [vmem:[%s198 + $0x2418] sm:$0xff]
                %783 = vst [vmem:[%s199 + $0x918] sm:$0xff] %v782
                %v784 = vld [vmem:[%s198 + $0x2480] sm:$0xff]
                %785 = vst [vmem:[%s199 + $0x920] sm:$0xff] %v784
                %v786 = vld [vmem:[%s198 + $0x2488] sm:$0xff]
                %787 = vst [vmem:[%s199 + $0x928] sm:$0xff] %v786
                %v788 = vld [vmem:[%s198 + $0x2490] sm:$0xff]
                %789 = vst [vmem:[%s199 + $0x930] sm:$0xff] %v788
                %v790 = vld [vmem:[%s198 + $0x2498] sm:$0xff]
                %791 = vst [vmem:[%s199 + $0x938] sm:$0xff] %v790
                %v792 = vld [vmem:[%s198 + $0x2500] sm:$0xff]
                %793 = vst [vmem:[%s199 + $0x940] sm:$0xff] %v792
                %v794 = vld [vmem:[%s198 + $0x2508] sm:$0xff]
                %795 = vst [vmem:[%s199 + $0x948] sm:$0xff] %v794
                %v796 = vld [vmem:[%s198 + $0x2510] sm:$0xff]
                %797 = vst [vmem:[%s199 + $0x950] sm:$0xff] %v796
                %v798 = vld [vmem:[%s198 + $0x2518] sm:$0xff]
                %799 = vst [vmem:[%s199 + $0x958] sm:$0xff] %v798
                %v800 = vld [vmem:[%s198 + $0x2580] sm:$0xff]
                %801 = vst [vmem:[%s199 + $0x960] sm:$0xff] %v800
                %v802 = vld [vmem:[%s198 + $0x2588] sm:$0xff]
                %803 = vst [vmem:[%s199 + $0x968] sm:$0xff] %v802
                %v804 = vld [vmem:[%s198 + $0x2590] sm:$0xff]
                %805 = vst [vmem:[%s199 + $0x970] sm:$0xff] %v804
                %v806 = vld [vmem:[%s198 + $0x2598] sm:$0xff]
                %807 = vst [vmem:[%s199 + $0x978] sm:$0xff] %v806
                %v808 = vld [vmem:[%s198 + $0x2600] sm:$0xff]
                %809 = vst [vmem:[%s199 + $0x980] sm:$0xff] %v808
                %v810 = vld [vmem:[%s198 + $0x2608] sm:$0xff]
                %811 = vst [vmem:[%s199 + $0x988] sm:$0xff] %v810
                %v812 = vld [vmem:[%s198 + $0x2610] sm:$0xff]
                %813 = vst [vmem:[%s199 + $0x990] sm:$0xff] %v812
                %v814 = vld [vmem:[%s198 + $0x2618] sm:$0xff]
                %815 = vst [vmem:[%s199 + $0x998] sm:$0xff] %v814
                %v816 = vld [vmem:[%s198 + $0x2680] sm:$0xff]
                %817 = vst [vmem:[%s199 + $0x9a0] sm:$0xff] %v816
                %v818 = vld [vmem:[%s198 + $0x2688] sm:$0xff]
                %819 = vst [vmem:[%s199 + $0x9a8] sm:$0xff] %v818
                %v820 = vld [vmem:[%s198 + $0x2690] sm:$0xff]
                %821 = vst [vmem:[%s199 + $0x9b0] sm:$0xff] %v820
                %v822 = vld [vmem:[%s198 + $0x2698] sm:$0xff]
                %823 = vst [vmem:[%s199 + $0x9b8] sm:$0xff] %v822
                %v824 = vld [vmem:[%s198 + $0x2700] sm:$0xff]
                %825 = vst [vmem:[%s199 + $0x9c0] sm:$0xff] %v824
                %v826 = vld [vmem:[%s198 + $0x2708] sm:$0xff]
                %827 = vst [vmem:[%s199 + $0x9c8] sm:$0xff] %v826
                %v828 = vld [vmem:[%s198 + $0x2710] sm:$0xff]
                %829 = vst [vmem:[%s199 + $0x9d0] sm:$0xff] %v828
                %v830 = vld [vmem:[%s198 + $0x2718] sm:$0xff]
                %831 = vst [vmem:[%s199 + $0x9d8] sm:$0xff] %v830
                %v832 = vld [vmem:[%s198 + $0x2780] sm:$0xff]
                %833 = vst [vmem:[%s199 + $0x9e0] sm:$0xff] %v832
                %v834 = vld [vmem:[%s198 + $0x2788] sm:$0xff]
                %835 = vst [vmem:[%s199 + $0x9e8] sm:$0xff] %v834
                %v836 = vld [vmem:[%s198 + $0x2790] sm:$0xff]
                %837 = vst [vmem:[%s199 + $0x9f0] sm:$0xff] %v836
                %v838 = vld [vmem:[%s198 + $0x2798] sm:$0xff]
                %839 = vst [vmem:[%s199 + $0x9f8] sm:$0xff] %v838
                %v840 = vld [vmem:[%s198 + $0x2800] sm:$0xff]
                %841 = vst [vmem:[%s199 + $0xa00] sm:$0xff] %v840
                %v842 = vld [vmem:[%s198 + $0x2808] sm:$0xff]
                %843 = vst [vmem:[%s199 + $0xa08] sm:$0xff] %v842
                %v844 = vld [vmem:[%s198 + $0x2810] sm:$0xff]
                %845 = vst [vmem:[%s199 + $0xa10] sm:$0xff] %v844
                %v846 = vld [vmem:[%s198 + $0x2818] sm:$0xff]
                %847 = vst [vmem:[%s199 + $0xa18] sm:$0xff] %v846
                %v848 = vld [vmem:[%s198 + $0x2880] sm:$0xff]
                %849 = vst [vmem:[%s199 + $0xa20] sm:$0xff] %v848
                %v850 = vld [vmem:[%s198 + $0x2888] sm:$0xff]
                %851 = vst [vmem:[%s199 + $0xa28] sm:$0xff] %v850
                %v852 = vld [vmem:[%s198 + $0x2890] sm:$0xff]
                %853 = vst [vmem:[%s199 + $0xa30] sm:$0xff] %v852
                %v854 = vld [vmem:[%s198 + $0x2898] sm:$0xff]
                %855 = vst [vmem:[%s199 + $0xa38] sm:$0xff] %v854
                %v856 = vld [vmem:[%s198 + $0x2900] sm:$0xff]
                %857 = vst [vmem:[%s199 + $0xa40] sm:$0xff] %v856
                %v858 = vld [vmem:[%s198 + $0x2908] sm:$0xff]
                %859 = vst [vmem:[%s199 + $0xa48] sm:$0xff] %v858
                %v860 = vld [vmem:[%s198 + $0x2910] sm:$0xff]
                %861 = vst [vmem:[%s199 + $0xa50] sm:$0xff] %v860
                %v862 = vld [vmem:[%s198 + $0x2918] sm:$0xff]
                %863 = vst [vmem:[%s199 + $0xa58] sm:$0xff] %v862
                %v864 = vld [vmem:[%s198 + $0x2980] sm:$0xff]
                %865 = vst [vmem:[%s199 + $0xa60] sm:$0xff] %v864
                %v866 = vld [vmem:[%s198 + $0x2988] sm:$0xff]
                %867 = vst [vmem:[%s199 + $0xa68] sm:$0xff] %v866
                %v868 = vld [vmem:[%s198 + $0x2990] sm:$0xff]
                %869 = vst [vmem:[%s199 + $0xa70] sm:$0xff] %v868
                %v870 = vld [vmem:[%s198 + $0x2998] sm:$0xff]
                %871 = vst [vmem:[%s199 + $0xa78] sm:$0xff] %v870
                %v872 = vld [vmem:[%s198 + $0x2a00] sm:$0xff]
                %873 = vst [vmem:[%s199 + $0xa80] sm:$0xff] %v872
                %v874 = vld [vmem:[%s198 + $0x2a08] sm:$0xff]
                %875 = vst [vmem:[%s199 + $0xa88] sm:$0xff] %v874
                %v876 = vld [vmem:[%s198 + $0x2a10] sm:$0xff]
                %877 = vst [vmem:[%s199 + $0xa90] sm:$0xff] %v876
                %v878 = vld [vmem:[%s198 + $0x2a18] sm:$0xff]
                %879 = vst [vmem:[%s199 + $0xa98] sm:$0xff] %v878
                %v880 = vld [vmem:[%s198 + $0x2a80] sm:$0xff]
                %881 = vst [vmem:[%s199 + $0xaa0] sm:$0xff] %v880
                %v882 = vld [vmem:[%s198 + $0x2a88] sm:$0xff]
                %883 = vst [vmem:[%s199 + $0xaa8] sm:$0xff] %v882
                %v884 = vld [vmem:[%s198 + $0x2a90] sm:$0xff]
                %885 = vst [vmem:[%s199 + $0xab0] sm:$0xff] %v884
                %v886 = vld [vmem:[%s198 + $0x2a98] sm:$0xff]
                %887 = vst [vmem:[%s199 + $0xab8] sm:$0xff] %v886
                %v888 = vld [vmem:[%s198 + $0x2b00] sm:$0xff]
                %889 = vst [vmem:[%s199 + $0xac0] sm:$0xff] %v888
                %v890 = vld [vmem:[%s198 + $0x2b08] sm:$0xff]
                %891 = vst [vmem:[%s199 + $0xac8] sm:$0xff] %v890
                %v892 = vld [vmem:[%s198 + $0x2b10] sm:$0xff]
                %893 = vst [vmem:[%s199 + $0xad0] sm:$0xff] %v892
                %v894 = vld [vmem:[%s198 + $0x2b18] sm:$0xff]
                %895 = vst [vmem:[%s199 + $0xad8] sm:$0xff] %v894
                %v896 = vld [vmem:[%s198 + $0x2b80] sm:$0xff]
                %897 = vst [vmem:[%s199 + $0xae0] sm:$0xff] %v896
                %v898 = vld [vmem:[%s198 + $0x2b88] sm:$0xff]
                %899 = vst [vmem:[%s199 + $0xae8] sm:$0xff] %v898
                %v900 = vld [vmem:[%s198 + $0x2b90] sm:$0xff]
                %901 = vst [vmem:[%s199 + $0xaf0] sm:$0xff] %v900
                %v902 = vld [vmem:[%s198 + $0x2b98] sm:$0xff]
                %903 = vst [vmem:[%s199 + $0xaf8] sm:$0xff] %v902
                %v904 = vld [vmem:[%s198 + $0x2c00] sm:$0xff]
                %905 = vst [vmem:[%s199 + $0xb00] sm:$0xff] %v904
                %v906 = vld [vmem:[%s198 + $0x2c08] sm:$0xff]
                %907 = vst [vmem:[%s199 + $0xb08] sm:$0xff] %v906
                %v908 = vld [vmem:[%s198 + $0x2c10] sm:$0xff]
                %909 = vst [vmem:[%s199 + $0xb10] sm:$0xff] %v908
                %v910 = vld [vmem:[%s198 + $0x2c18] sm:$0xff]
                %911 = vst [vmem:[%s199 + $0xb18] sm:$0xff] %v910
                %v912 = vld [vmem:[%s198 + $0x2c80] sm:$0xff]
                %913 = vst [vmem:[%s199 + $0xb20] sm:$0xff] %v912
                %v914 = vld [vmem:[%s198 + $0x2c88] sm:$0xff]
                %915 = vst [vmem:[%s199 + $0xb28] sm:$0xff] %v914
                %v916 = vld [vmem:[%s198 + $0x2c90] sm:$0xff]
                %917 = vst [vmem:[%s199 + $0xb30] sm:$0xff] %v916
                %v918 = vld [vmem:[%s198 + $0x2c98] sm:$0xff]
                %919 = vst [vmem:[%s199 + $0xb38] sm:$0xff] %v918
                %v920 = vld [vmem:[%s198 + $0x2d00] sm:$0xff]
                %921 = vst [vmem:[%s199 + $0xb40] sm:$0xff] %v920
                %v922 = vld [vmem:[%s198 + $0x2d08] sm:$0xff]
                %923 = vst [vmem:[%s199 + $0xb48] sm:$0xff] %v922
                %v924 = vld [vmem:[%s198 + $0x2d10] sm:$0xff]
                %925 = vst [vmem:[%s199 + $0xb50] sm:$0xff] %v924
                %v926 = vld [vmem:[%s198 + $0x2d18] sm:$0xff]
                %927 = vst [vmem:[%s199 + $0xb58] sm:$0xff] %v926
                %v928 = vld [vmem:[%s198 + $0x2d80] sm:$0xff]
                %929 = vst [vmem:[%s199 + $0xb60] sm:$0xff] %v928
                %v930 = vld [vmem:[%s198 + $0x2d88] sm:$0xff]
                %931 = vst [vmem:[%s199 + $0xb68] sm:$0xff] %v930
                %v932 = vld [vmem:[%s198 + $0x2d90] sm:$0xff]
                %933 = vst [vmem:[%s199 + $0xb70] sm:$0xff] %v932
                %v934 = vld [vmem:[%s198 + $0x2d98] sm:$0xff]
                %935 = vst [vmem:[%s199 + $0xb78] sm:$0xff] %v934
                %v936 = vld [vmem:[%s198 + $0x2e00] sm:$0xff]
                %937 = vst [vmem:[%s199 + $0xb80] sm:$0xff] %v936
                %v938 = vld [vmem:[%s198 + $0x2e08] sm:$0xff]
                %939 = vst [vmem:[%s199 + $0xb88] sm:$0xff] %v938
                %v940 = vld [vmem:[%s198 + $0x2e10] sm:$0xff]
                %941 = vst [vmem:[%s199 + $0xb90] sm:$0xff] %v940
                %v942 = vld [vmem:[%s198 + $0x2e18] sm:$0xff]
                %943 = vst [vmem:[%s199 + $0xb98] sm:$0xff] %v942
                %v944 = vld [vmem:[%s198 + $0x2e80] sm:$0xff]
                %945 = vst [vmem:[%s199 + $0xba0] sm:$0xff] %v944
                %v946 = vld [vmem:[%s198 + $0x2e88] sm:$0xff]
                %947 = vst [vmem:[%s199 + $0xba8] sm:$0xff] %v946
                %v948 = vld [vmem:[%s198 + $0x2e90] sm:$0xff]
                %949 = vst [vmem:[%s199 + $0xbb0] sm:$0xff] %v948
                %v950 = vld [vmem:[%s198 + $0x2e98] sm:$0xff]
                %951 = vst [vmem:[%s199 + $0xbb8] sm:$0xff] %v950
                %v952 = vld [vmem:[%s198 + $0x2f00] sm:$0xff]
                %953 = vst [vmem:[%s199 + $0xbc0] sm:$0xff] %v952
                %v954 = vld [vmem:[%s198 + $0x2f08] sm:$0xff]
                %955 = vst [vmem:[%s199 + $0xbc8] sm:$0xff] %v954
                %v956 = vld [vmem:[%s198 + $0x2f10] sm:$0xff]
                %957 = vst [vmem:[%s199 + $0xbd0] sm:$0xff] %v956
                %v958 = vld [vmem:[%s198 + $0x2f18] sm:$0xff]
                %959 = vst [vmem:[%s199 + $0xbd8] sm:$0xff] %v958
                %v960 = vld [vmem:[%s198 + $0x2f80] sm:$0xff]
                %961 = vst [vmem:[%s199 + $0xbe0] sm:$0xff] %v960
                %v962 = vld [vmem:[%s198 + $0x2f88] sm:$0xff]
                %963 = vst [vmem:[%s199 + $0xbe8] sm:$0xff] %v962
                %v964 = vld [vmem:[%s198 + $0x2f90] sm:$0xff]
                %965 = vst [vmem:[%s199 + $0xbf0] sm:$0xff] %v964
                %v966 = vld [vmem:[%s198 + $0x2f98] sm:$0xff]
                %967 = vst [vmem:[%s199 + $0xbf8] sm:$0xff] %v966
                %v968 = vld [vmem:[%s198 + $0x3000] sm:$0xff]
                %969 = vst [vmem:[%s199 + $0xc00] sm:$0xff] %v968
                %v970 = vld [vmem:[%s198 + $0x3008] sm:$0xff]
                %971 = vst [vmem:[%s199 + $0xc08] sm:$0xff] %v970
                %v972 = vld [vmem:[%s198 + $0x3010] sm:$0xff]
                %973 = vst [vmem:[%s199 + $0xc10] sm:$0xff] %v972
                %v974 = vld [vmem:[%s198 + $0x3018] sm:$0xff]
                %975 = vst [vmem:[%s199 + $0xc18] sm:$0xff] %v974
                %v976 = vld [vmem:[%s198 + $0x3080] sm:$0xff]
                %977 = vst [vmem:[%s199 + $0xc20] sm:$0xff] %v976
                %v978 = vld [vmem:[%s198 + $0x3088] sm:$0xff]
                %979 = vst [vmem:[%s199 + $0xc28] sm:$0xff] %v978
                %v980 = vld [vmem:[%s198 + $0x3090] sm:$0xff]
                %981 = vst [vmem:[%s199 + $0xc30] sm:$0xff] %v980
                %v982 = vld [vmem:[%s198 + $0x3098] sm:$0xff]
                %983 = vst [vmem:[%s199 + $0xc38] sm:$0xff] %v982
                %v984 = vld [vmem:[%s198 + $0x3100] sm:$0xff]
                %985 = vst [vmem:[%s199 + $0xc40] sm:$0xff] %v984
                %v986 = vld [vmem:[%s198 + $0x3108] sm:$0xff]
                %987 = vst [vmem:[%s199 + $0xc48] sm:$0xff] %v986
                %v988 = vld [vmem:[%s198 + $0x3110] sm:$0xff]
                %989 = vst [vmem:[%s199 + $0xc50] sm:$0xff] %v988
                %v990 = vld [vmem:[%s198 + $0x3118] sm:$0xff]
                %991 = vst [vmem:[%s199 + $0xc58] sm:$0xff] %v990
                %v992 = vld [vmem:[%s198 + $0x3180] sm:$0xff]
                %993 = vst [vmem:[%s199 + $0xc60] sm:$0xff] %v992
                %v994 = vld [vmem:[%s198 + $0x3188] sm:$0xff]
                %995 = vst [vmem:[%s199 + $0xc68] sm:$0xff] %v994
                %v996 = vld [vmem:[%s198 + $0x3190] sm:$0xff]
                %997 = vst [vmem:[%s199 + $0xc70] sm:$0xff] %v996
                %v998 = vld [vmem:[%s198 + $0x3198] sm:$0xff]
                %999 = vst [vmem:[%s199 + $0xc78] sm:$0xff] %v998
                %v1000 = vld [vmem:[%s198 + $0x3200] sm:$0xff]
                %1001 = vst [vmem:[%s199 + $0xc80] sm:$0xff] %v1000
                %v1002 = vld [vmem:[%s198 + $0x3208] sm:$0xff]
                %1003 = vst [vmem:[%s199 + $0xc88] sm:$0xff] %v1002
                %v1004 = vld [vmem:[%s198 + $0x3210] sm:$0xff]
                %1005 = vst [vmem:[%s199 + $0xc90] sm:$0xff] %v1004
                %v1006 = vld [vmem:[%s198 + $0x3218] sm:$0xff]
                %1007 = vst [vmem:[%s199 + $0xc98] sm:$0xff] %v1006
                %v1008 = vld [vmem:[%s198 + $0x3280] sm:$0xff]
                %1009 = vst [vmem:[%s199 + $0xca0] sm:$0xff] %v1008
                %v1010 = vld [vmem:[%s198 + $0x3288] sm:$0xff]
                %1011 = vst [vmem:[%s199 + $0xca8] sm:$0xff] %v1010
                %v1012 = vld [vmem:[%s198 + $0x3290] sm:$0xff]
                %1013 = vst [vmem:[%s199 + $0xcb0] sm:$0xff] %v1012
                %v1014 = vld [vmem:[%s198 + $0x3298] sm:$0xff]
                %1015 = vst [vmem:[%s199 + $0xcb8] sm:$0xff] %v1014
                %v1016 = vld [vmem:[%s198 + $0x3300] sm:$0xff]
                %1017 = vst [vmem:[%s199 + $0xcc0] sm:$0xff] %v1016
                %v1018 = vld [vmem:[%s198 + $0x3308] sm:$0xff]
                %1019 = vst [vmem:[%s199 + $0xcc8] sm:$0xff] %v1018
                %v1020 = vld [vmem:[%s198 + $0x3310] sm:$0xff]
                %1021 = vst [vmem:[%s199 + $0xcd0] sm:$0xff] %v1020
                %v1022 = vld [vmem:[%s198 + $0x3318] sm:$0xff]
                %1023 = vst [vmem:[%s199 + $0xcd8] sm:$0xff] %v1022
                %v1024 = vld [vmem:[%s198 + $0x3380] sm:$0xff]
                %1025 = vst [vmem:[%s199 + $0xce0] sm:$0xff] %v1024
                %v1026 = vld [vmem:[%s198 + $0x3388] sm:$0xff]
                %1027 = vst [vmem:[%s199 + $0xce8] sm:$0xff] %v1026
                %v1028 = vld [vmem:[%s198 + $0x3390] sm:$0xff]
                %1029 = vst [vmem:[%s199 + $0xcf0] sm:$0xff] %v1028
                %v1030 = vld [vmem:[%s198 + $0x3398] sm:$0xff]
                %1031 = vst [vmem:[%s199 + $0xcf8] sm:$0xff] %v1030
                %v1032 = vld [vmem:[%s198 + $0x3400] sm:$0xff]
                %1033 = vst [vmem:[%s199 + $0xd00] sm:$0xff] %v1032
                %v1034 = vld [vmem:[%s198 + $0x3408] sm:$0xff]
                %1035 = vst [vmem:[%s199 + $0xd08] sm:$0xff] %v1034
                %v1036 = vld [vmem:[%s198 + $0x3410] sm:$0xff]
                %1037 = vst [vmem:[%s199 + $0xd10] sm:$0xff] %v1036
                %v1038 = vld [vmem:[%s198 + $0x3418] sm:$0xff]
                %1039 = vst [vmem:[%s199 + $0xd18] sm:$0xff] %v1038
                %v1040 = vld [vmem:[%s198 + $0x3480] sm:$0xff]
                %1041 = vst [vmem:[%s199 + $0xd20] sm:$0xff] %v1040
                %v1042 = vld [vmem:[%s198 + $0x3488] sm:$0xff]
                %1043 = vst [vmem:[%s199 + $0xd28] sm:$0xff] %v1042
                %v1044 = vld [vmem:[%s198 + $0x3490] sm:$0xff]
                %1045 = vst [vmem:[%s199 + $0xd30] sm:$0xff] %v1044
                %v1046 = vld [vmem:[%s198 + $0x3498] sm:$0xff]
                %1047 = vst [vmem:[%s199 + $0xd38] sm:$0xff] %v1046
                %v1048 = vld [vmem:[%s198 + $0x3500] sm:$0xff]
                %1049 = vst [vmem:[%s199 + $0xd40] sm:$0xff] %v1048
                %v1050 = vld [vmem:[%s198 + $0x3508] sm:$0xff]
                %1051 = vst [vmem:[%s199 + $0xd48] sm:$0xff] %v1050
                %v1052 = vld [vmem:[%s198 + $0x3510] sm:$0xff]
                %1053 = vst [vmem:[%s199 + $0xd50] sm:$0xff] %v1052
                %v1054 = vld [vmem:[%s198 + $0x3518] sm:$0xff]
                %1055 = vst [vmem:[%s199 + $0xd58] sm:$0xff] %v1054
                %v1056 = vld [vmem:[%s198 + $0x3580] sm:$0xff]
                %1057 = vst [vmem:[%s199 + $0xd60] sm:$0xff] %v1056
                %v1058 = vld [vmem:[%s198 + $0x3588] sm:$0xff]
                %1059 = vst [vmem:[%s199 + $0xd68] sm:$0xff] %v1058
                %v1060 = vld [vmem:[%s198 + $0x3590] sm:$0xff]
                %1061 = vst [vmem:[%s199 + $0xd70] sm:$0xff] %v1060
                %v1062 = vld [vmem:[%s198 + $0x3598] sm:$0xff]
                %1063 = vst [vmem:[%s199 + $0xd78] sm:$0xff] %v1062
                %v1064 = vld [vmem:[%s198 + $0x3600] sm:$0xff]
                %1065 = vst [vmem:[%s199 + $0xd80] sm:$0xff] %v1064
                %v1066 = vld [vmem:[%s198 + $0x3608] sm:$0xff]
                %1067 = vst [vmem:[%s199 + $0xd88] sm:$0xff] %v1066
                %v1068 = vld [vmem:[%s198 + $0x3610] sm:$0xff]
                %1069 = vst [vmem:[%s199 + $0xd90] sm:$0xff] %v1068
                %v1070 = vld [vmem:[%s198 + $0x3618] sm:$0xff]
                %1071 = vst [vmem:[%s199 + $0xd98] sm:$0xff] %v1070
                %v1072 = vld [vmem:[%s198 + $0x3680] sm:$0xff]
                %1073 = vst [vmem:[%s199 + $0xda0] sm:$0xff] %v1072
                %v1074 = vld [vmem:[%s198 + $0x3688] sm:$0xff]
                %1075 = vst [vmem:[%s199 + $0xda8] sm:$0xff] %v1074
                %v1076 = vld [vmem:[%s198 + $0x3690] sm:$0xff]
                %1077 = vst [vmem:[%s199 + $0xdb0] sm:$0xff] %v1076
                %v1078 = vld [vmem:[%s198 + $0x3698] sm:$0xff]
                %1079 = vst [vmem:[%s199 + $0xdb8] sm:$0xff] %v1078
                %v1080 = vld [vmem:[%s198 + $0x3700] sm:$0xff]
                %1081 = vst [vmem:[%s199 + $0xdc0] sm:$0xff] %v1080
                %v1082 = vld [vmem:[%s198 + $0x3708] sm:$0xff]
                %1083 = vst [vmem:[%s199 + $0xdc8] sm:$0xff] %v1082
                %v1084 = vld [vmem:[%s198 + $0x3710] sm:$0xff]
                %1085 = vst [vmem:[%s199 + $0xdd0] sm:$0xff] %v1084
                %v1086 = vld [vmem:[%s198 + $0x3718] sm:$0xff]
                %1087 = vst [vmem:[%s199 + $0xdd8] sm:$0xff] %v1086
                %v1088 = vld [vmem:[%s198 + $0x3780] sm:$0xff]
                %1089 = vst [vmem:[%s199 + $0xde0] sm:$0xff] %v1088
                %v1090 = vld [vmem:[%s198 + $0x3788] sm:$0xff]
                %1091 = vst [vmem:[%s199 + $0xde8] sm:$0xff] %v1090
                %v1092 = vld [vmem:[%s198 + $0x3790] sm:$0xff]
                %1093 = vst [vmem:[%s199 + $0xdf0] sm:$0xff] %v1092
                %v1094 = vld [vmem:[%s198 + $0x3798] sm:$0xff]
                %1095 = vst [vmem:[%s199 + $0xdf8] sm:$0xff] %v1094
                %v1096 = vld [vmem:[%s198 + $0x3800] sm:$0xff]
                %1097 = vst [vmem:[%s199 + $0xe00] sm:$0xff] %v1096
                %v1098 = vld [vmem:[%s198 + $0x3808] sm:$0xff]
                %1099 = vst [vmem:[%s199 + $0xe08] sm:$0xff] %v1098
                %v1100 = vld [vmem:[%s198 + $0x3810] sm:$0xff]
                %1101 = vst [vmem:[%s199 + $0xe10] sm:$0xff] %v1100
                %v1102 = vld [vmem:[%s198 + $0x3818] sm:$0xff]
                %1103 = vst [vmem:[%s199 + $0xe18] sm:$0xff] %v1102
                %v1104 = vld [vmem:[%s198 + $0x3880] sm:$0xff]
                %1105 = vst [vmem:[%s199 + $0xe20] sm:$0xff] %v1104
                %v1106 = vld [vmem:[%s198 + $0x3888] sm:$0xff]
                %1107 = vst [vmem:[%s199 + $0xe28] sm:$0xff] %v1106
                %v1108 = vld [vmem:[%s198 + $0x3890] sm:$0xff]
                %1109 = vst [vmem:[%s199 + $0xe30] sm:$0xff] %v1108
                %v1110 = vld [vmem:[%s198 + $0x3898] sm:$0xff]
                %1111 = vst [vmem:[%s199 + $0xe38] sm:$0xff] %v1110
                %v1112 = vld [vmem:[%s198 + $0x3900] sm:$0xff]
                %1113 = vst [vmem:[%s199 + $0xe40] sm:$0xff] %v1112
                %v1114 = vld [vmem:[%s198 + $0x3908] sm:$0xff]
                %1115 = vst [vmem:[%s199 + $0xe48] sm:$0xff] %v1114
                %v1116 = vld [vmem:[%s198 + $0x3910] sm:$0xff]
                %1117 = vst [vmem:[%s199 + $0xe50] sm:$0xff] %v1116
                %v1118 = vld [vmem:[%s198 + $0x3918] sm:$0xff]
                %1119 = vst [vmem:[%s199 + $0xe58] sm:$0xff] %v1118
                %v1120 = vld [vmem:[%s198 + $0x3980] sm:$0xff]
                %1121 = vst [vmem:[%s199 + $0xe60] sm:$0xff] %v1120
                %v1122 = vld [vmem:[%s198 + $0x3988] sm:$0xff]
                %1123 = vst [vmem:[%s199 + $0xe68] sm:$0xff] %v1122
                %v1124 = vld [vmem:[%s198 + $0x3990] sm:$0xff]
                %1125 = vst [vmem:[%s199 + $0xe70] sm:$0xff] %v1124
                %v1126 = vld [vmem:[%s198 + $0x3998] sm:$0xff]
                %1127 = vst [vmem:[%s199 + $0xe78] sm:$0xff] %v1126
                %v1128 = vld [vmem:[%s198 + $0x3a00] sm:$0xff]
                %1129 = vst [vmem:[%s199 + $0xe80] sm:$0xff] %v1128
                %v1130 = vld [vmem:[%s198 + $0x3a08] sm:$0xff]
                %1131 = vst [vmem:[%s199 + $0xe88] sm:$0xff] %v1130
                %v1132 = vld [vmem:[%s198 + $0x3a10] sm:$0xff]
                %1133 = vst [vmem:[%s199 + $0xe90] sm:$0xff] %v1132
                %v1134 = vld [vmem:[%s198 + $0x3a18] sm:$0xff]
                %1135 = vst [vmem:[%s199 + $0xe98] sm:$0xff] %v1134
                %v1136 = vld [vmem:[%s198 + $0x3a80] sm:$0xff]
                %1137 = vst [vmem:[%s199 + $0xea0] sm:$0xff] %v1136
                %v1138 = vld [vmem:[%s198 + $0x3a88] sm:$0xff]
                %1139 = vst [vmem:[%s199 + $0xea8] sm:$0xff] %v1138
                %v1140 = vld [vmem:[%s198 + $0x3a90] sm:$0xff]
                %1141 = vst [vmem:[%s199 + $0xeb0] sm:$0xff] %v1140
                %v1142 = vld [vmem:[%s198 + $0x3a98] sm:$0xff]
                %1143 = vst [vmem:[%s199 + $0xeb8] sm:$0xff] %v1142
                %v1144 = vld [vmem:[%s198 + $0x3b00] sm:$0xff]
                %1145 = vst [vmem:[%s199 + $0xec0] sm:$0xff] %v1144
                %v1146 = vld [vmem:[%s198 + $0x3b08] sm:$0xff]
                %1147 = vst [vmem:[%s199 + $0xec8] sm:$0xff] %v1146
                %v1148 = vld [vmem:[%s198 + $0x3b10] sm:$0xff]
                %1149 = vst [vmem:[%s199 + $0xed0] sm:$0xff] %v1148
                %v1150 = vld [vmem:[%s198 + $0x3b18] sm:$0xff]
                %1151 = vst [vmem:[%s199 + $0xed8] sm:$0xff] %v1150
                %v1152 = vld [vmem:[%s198 + $0x3b80] sm:$0xff]
                %1153 = vst [vmem:[%s199 + $0xee0] sm:$0xff] %v1152
                %v1154 = vld [vmem:[%s198 + $0x3b88] sm:$0xff]
                %1155 = vst [vmem:[%s199 + $0xee8] sm:$0xff] %v1154
                %v1156 = vld [vmem:[%s198 + $0x3b90] sm:$0xff]
                %1157 = vst [vmem:[%s199 + $0xef0] sm:$0xff] %v1156
                %v1158 = vld [vmem:[%s198 + $0x3b98] sm:$0xff]
                %1159 = vst [vmem:[%s199 + $0xef8] sm:$0xff] %v1158
                %v1160 = vld [vmem:[%s198 + $0x3c00] sm:$0xff]
                %1161 = vst [vmem:[%s199 + $0xf00] sm:$0xff] %v1160
                %v1162 = vld [vmem:[%s198 + $0x3c08] sm:$0xff]
                %1163 = vst [vmem:[%s199 + $0xf08] sm:$0xff] %v1162
                %v1164 = vld [vmem:[%s198 + $0x3c10] sm:$0xff]
                %1165 = vst [vmem:[%s199 + $0xf10] sm:$0xff] %v1164
                %v1166 = vld [vmem:[%s198 + $0x3c18] sm:$0xff]
                %1167 = vst [vmem:[%s199 + $0xf18] sm:$0xff] %v1166
                %v1168 = vld [vmem:[%s198 + $0x3c80] sm:$0xff]
                %1169 = vst [vmem:[%s199 + $0xf20] sm:$0xff] %v1168
                %v1170 = vld [vmem:[%s198 + $0x3c88] sm:$0xff]
                %1171 = vst [vmem:[%s199 + $0xf28] sm:$0xff] %v1170
                %v1172 = vld [vmem:[%s198 + $0x3c90] sm:$0xff]
                %1173 = vst [vmem:[%s199 + $0xf30] sm:$0xff] %v1172
                %v1174 = vld [vmem:[%s198 + $0x3c98] sm:$0xff]
                %1175 = vst [vmem:[%s199 + $0xf38] sm:$0xff] %v1174
                %v1176 = vld [vmem:[%s198 + $0x3d00] sm:$0xff]
                %1177 = vst [vmem:[%s199 + $0xf40] sm:$0xff] %v1176
                %v1178 = vld [vmem:[%s198 + $0x3d08] sm:$0xff]
                %1179 = vst [vmem:[%s199 + $0xf48] sm:$0xff] %v1178
                %v1180 = vld [vmem:[%s198 + $0x3d10] sm:$0xff]
                %1181 = vst [vmem:[%s199 + $0xf50] sm:$0xff] %v1180
                %v1182 = vld [vmem:[%s198 + $0x3d18] sm:$0xff]
                %1183 = vst [vmem:[%s199 + $0xf58] sm:$0xff] %v1182
                %v1184 = vld [vmem:[%s198 + $0x3d80] sm:$0xff]
                %1185 = vst [vmem:[%s199 + $0xf60] sm:$0xff] %v1184
                %v1186 = vld [vmem:[%s198 + $0x3d88] sm:$0xff]
                %1187 = vst [vmem:[%s199 + $0xf68] sm:$0xff] %v1186
                %v1188 = vld [vmem:[%s198 + $0x3d90] sm:$0xff]
                %1189 = vst [vmem:[%s199 + $0xf70] sm:$0xff] %v1188
                %v1190 = vld [vmem:[%s198 + $0x3d98] sm:$0xff]
                %1191 = vst [vmem:[%s199 + $0xf78] sm:$0xff] %v1190
                %v1192 = vld [vmem:[%s198 + $0x3e00] sm:$0xff]
                %1193 = vst [vmem:[%s199 + $0xf80] sm:$0xff] %v1192
                %v1194 = vld [vmem:[%s198 + $0x3e08] sm:$0xff]
                %1195 = vst [vmem:[%s199 + $0xf88] sm:$0xff] %v1194
                %v1196 = vld [vmem:[%s198 + $0x3e10] sm:$0xff]
                %1197 = vst [vmem:[%s199 + $0xf90] sm:$0xff] %v1196
                %v1198 = vld [vmem:[%s198 + $0x3e18] sm:$0xff]
                %1199 = vst [vmem:[%s199 + $0xf98] sm:$0xff] %v1198
                %v1200 = vld [vmem:[%s198 + $0x3e80] sm:$0xff]
                %1201 = vst [vmem:[%s199 + $0xfa0] sm:$0xff] %v1200
                %v1202 = vld [vmem:[%s198 + $0x3e88] sm:$0xff]
                %1203 = vst [vmem:[%s199 + $0xfa8] sm:$0xff] %v1202
                %v1204 = vld [vmem:[%s198 + $0x3e90] sm:$0xff]
                %1205 = vst [vmem:[%s199 + $0xfb0] sm:$0xff] %v1204
                %v1206 = vld [vmem:[%s198 + $0x3e98] sm:$0xff]
                %1207 = vst [vmem:[%s199 + $0xfb8] sm:$0xff] %v1206
                %v1208 = vld [vmem:[%s198 + $0x3f00] sm:$0xff]
                %1209 = vst [vmem:[%s199 + $0xfc0] sm:$0xff] %v1208
                %v1210 = vld [vmem:[%s198 + $0x3f08] sm:$0xff]
                %1211 = vst [vmem:[%s199 + $0xfc8] sm:$0xff] %v1210
                %v1212 = vld [vmem:[%s198 + $0x3f10] sm:$0xff]
                %1213 = vst [vmem:[%s199 + $0xfd0] sm:$0xff] %v1212
                %v1214 = vld [vmem:[%s198 + $0x3f18] sm:$0xff]
                %1215 = vst [vmem:[%s199 + $0xfd8] sm:$0xff] %v1214
                %v1216 = vld [vmem:[%s198 + $0x3f80] sm:$0xff]
                %1217 = vst [vmem:[%s199 + $0xfe0] sm:$0xff] %v1216
                %v1218 = vld [vmem:[%s198 + $0x3f88] sm:$0xff]
                %1219 = vst [vmem:[%s199 + $0xfe8] sm:$0xff] %v1218
                %v1220 = vld [vmem:[%s198 + $0x3f90] sm:$0xff]
                %1221 = vst [vmem:[%s199 + $0xff0] sm:$0xff] %v1220
                %v1222 = vld [vmem:[%s198 + $0x3f98] sm:$0xff]
                %1223 = vst [vmem:[%s199 + $0xff8] sm:$0xff] %v1222
              $region41: #{net_forward.5} parent=35 // loop_footer
                %s197 = sadd.s32 1, %s193
              $region42: #{net_forward.5} parent=35 // loop_footer_branch
                %192 = sbr.rel target = $region38
              $region43: #{net_forward.5} parent=35 // loop_exit
                _
            $region36: #{net_forward.5} parent=31 // pred_fallthru
              _
            // Predicated region
            $region44: #{net_forward.5} parent=31 // pred_check
              _
            $region45: #{net_forward.5} parent=31 // pred_check_branch
              %1225 = sbr.rel target = $region47
            $region46: #{net_forward.5} parent=31 // pred_region
              _
            $region47: #{net_forward.5} parent=31 // pred_fallthru
              _
          $region32: #{net_forward.5} parent=27 // pred_fallthru
            _
          %1226 = vnop
        $region28: #{net_forward.5} parent=23 // pred_fallthru
          _
        // Predicated region
        $region48: #{net_forward.5} parent=23 // pred_check
          %p1227 = pneg %p79
        $region49: #{net_forward.5} parent=23 // pred_check_branch
          %1229 = sbr.rel (%p1227) target = $region51
        $region50: #{net_forward.5} parent=23 // pred_region
          %s1230 = smul.u32 4, %s12
          %p1231 = scmp.lt.s32.totalorder %s1230, 15
          %s1232 = scalar_select %p1231, %s1230, 15
          %s1233 = scalar_lea.vmem %s2, %s1232
          %s1234 = smul.u32 4, %s12
        $region51: #{net_forward.5} parent=23 // pred_fallthru
          _
        // Predicated region
        $region52: #{net_forward.5} parent=23 // pred_check
          %p1235 = pneg %p105
        $region53: #{net_forward.5} parent=23 // pred_check_branch
          %1237 = sbr.rel (%p1235) target = $region55
        $region54: #{net_forward.5} parent=23 // pred_region
          %s1238 = smul.u32 64, %s12
          %p1239 = scmp.lt.s32.totalorder %s1238, 255
          %s1240 = scalar_select %p1239, %s1238, 255
          %s1241 = smul.addr %s1240, 8
          %s1242 = scalar_lea.vmem %s3, %s1241
          %s1243 = smul.u32 64, %s12
        $region55: #{net_forward.5} parent=23 // pred_fallthru
          _
      $region24: #{net_forward.5} parent=5 // pred_fallthru
        _
      %p1244 = scmp.le.s32.totalorder 1, %s12
      %p1245 = scmp.lt.s32.totalorder %s12, 5
      %p1246 = pnand %p1244, %p1245
      %p1247 = pneg %p1246
      // Predicated region
      $region56: #{net_forward.5} parent=5 // pred_check
        _
      $region57: #{net_forward.5} parent=5 // pred_check_branch
        %1249 = sbr.rel (%p1246) target = $region59
      $region58: #{net_forward.5} parent=5 // pred_region
        %s1250 = ssub.s32 %s12, 1
        %s1251 = sand.u32 %s46, 1
        %s1252 = sand.u32 %s46, 1
        %s1253 = smul.addr %s1252, 4096
        %s1254 = scalar_lea.vmem [#allocation2], %s1253
        // Predicated region
        $region60: #{net_forward.5} parent=58 // pred_check
          %p1255 = pneg %p59
        $region61: #{net_forward.5} parent=58 // pred_check_branch
          %1257 = sbr.rel (%p1255) target = $region63
        $region62: #{net_forward.5} parent=58 // pred_region
          _
        $region63: #{net_forward.5} parent=58 // pred_fallthru
          _
        %p1258 = pneg %p33
        %p1259 = pneg %p30
        %s1260 = sand.u32 %s46, 1
        %s1261 = sand.u32 %s46, 1
        %s1262 = smul.addr %s1261, 4096
        %s1263 = scalar_lea.vmem [#allocation2], %s1262
        %p1264 = pneg %p59
        %p1265 = pneg %p56
        %s1266 = smul.u32 4, %s17
        %p1267 = scmp.lt.s32.totalorder %s1266, 15
        %s1268 = scalar_select %p1267, %s1266, 15
        %s1269 = scalar_lea.vmem %s2, %s1268
        %p1270 = pneg %p85
        %p1271 = pneg %p82
        %s1272 = smul.u32 64, %s17
        %p1273 = scmp.lt.s32.totalorder %s1272, 255
        %s1274 = scalar_select %p1273, %s1272, 255
        %s1275 = smul.addr %s1274, 8
        %s1276 = scalar_lea.vmem %s3, %s1275
        %p1277 = pneg %p111
        %p1278 = pneg %p108
        %p1279 = pneg %p132
        %p1280 = pneg %p129
        %p1281 = pneg %p153
        %p1282 = pneg %p150
        %s1283 = smul.u32 4, %s17
        %s1284 = smul.u32 4, %s17
        %p1285 = scmp.lt.s32.totalorder %s1284, 15
        %s1286 = scalar_select %p1285, %s1284, 15
        %s1287 = scalar_lea.vmem %s2, %s1286
        %s1288 = smul.u32 4, %s17
        %s1289 = smul.u32 64, %s17
        %p1290 = scmp.lt.s32.totalorder %s1289, 255
        %s1291 = scalar_select %p1290, %s1289, 255
        %s1292 = smul.addr %s1291, 8
        %s1293 = scalar_lea.vmem %s3, %s1292
        %s1294 = smul.u32 64, %s17
        %p1295 = scmp.eq.s32.totalorder %s17, 0
        // Predicated region
        $region64: #{net_forward.5} parent=58 // pred_check
          %p1296 = pneg %p1295
        $region65: #{net_forward.5} parent=58 // pred_check_branch
          %1298 = sbr.rel (%p1296) target = $region67
        $region66: #{net_forward.5} parent=58 // pred_region
          %vm1299 = vcmask 74752
          %1300 = vst.msk [vmem:[#allocation3] sm:$0x3] %vm1299, 0.0
        $region67: #{net_forward.5} parent=58 // pred_fallthru
          _
        %v1301 = vld [vmem:[%s0] sm:$0xff]
        %v1302 = vld [vmem:[%s0 + $0x8] sm:$0xff]
        %v1303 = vld [vmem:[%s1254] sm:$0xff]
        %v1304 = vld [vmem:[%s1254 + $0x8] sm:$0xff]
        %v1305 = vld [vmem:[%s1254 + $0x10] sm:$0xff]
        %v1306 = vld [vmem:[%s1254 + $0x18] sm:$0xff]
        %v1307 = vld [vmem:[%s1254 + $0x20] sm:$0xff]
        %v1308 = vld [vmem:[%s1254 + $0x28] sm:$0xff]
        %v1309 = vld [vmem:[%s1254 + $0x30] sm:$0xff]
        %v1310 = vld [vmem:[%s1254 + $0x38] sm:$0xff]
        %v1311 = vld [vmem:[%s1254 + $0x40] sm:$0xff]
        %v1312 = vld [vmem:[%s1254 + $0x48] sm:$0xff]
        %v1313 = vld [vmem:[%s1254 + $0x50] sm:$0xff]
        %v1314 = vld [vmem:[%s1254 + $0x58] sm:$0xff]
        %v1315 = vld [vmem:[%s1254 + $0x60] sm:$0xff]
        %v1316 = vld [vmem:[%s1254 + $0x68] sm:$0xff]
        %v1317 = vld [vmem:[%s1254 + $0x70] sm:$0xff]
        %v1318 = vld [vmem:[%s1254 + $0x78] sm:$0xff]
        %v1319 = vld [vmem:[%s1254 + $0x80] sm:$0xff]
        %v1320 = vld [vmem:[%s1254 + $0x88] sm:$0xff]
        %v1321 = vld [vmem:[%s1254 + $0x90] sm:$0xff]
        %v1322 = vld [vmem:[%s1254 + $0x98] sm:$0xff]
        %v1323 = vld [vmem:[%s1254 + $0xa0] sm:$0xff]
        %v1324 = vld [vmem:[%s1254 + $0xa8] sm:$0xff]
        %v1325 = vld [vmem:[%s1254 + $0xb0] sm:$0xff]
        %v1326 = vld [vmem:[%s1254 + $0xb8] sm:$0xff]
        %v1327 = vld [vmem:[%s1254 + $0xc0] sm:$0xff]
        %v1328 = vld [vmem:[%s1254 + $0xc8] sm:$0xff]
        %v1329 = vld [vmem:[%s1254 + $0xd0] sm:$0xff]
        %v1330 = vld [vmem:[%s1254 + $0xd8] sm:$0xff]
        %v1331 = vld [vmem:[%s1254 + $0xe0] sm:$0xff]
        %v1332 = vld [vmem:[%s1254 + $0xe8] sm:$0xff]
        %v1333 = vld [vmem:[%s1254 + $0xf0] sm:$0xff]
        %v1334 = vld [vmem:[%s1254 + $0xf8] sm:$0xff]
        %v1335 = vld [vmem:[%s1254 + $0x100] sm:$0xff]
        %v1336 = vld [vmem:[%s1254 + $0x108] sm:$0xff]
        %v1337 = vld [vmem:[%s1254 + $0x110] sm:$0xff]
        %v1338 = vld [vmem:[%s1254 + $0x118] sm:$0xff]
        %v1339 = vld [vmem:[%s1254 + $0x120] sm:$0xff]
        %v1340 = vld [vmem:[%s1254 + $0x128] sm:$0xff]
        %v1341 = vld [vmem:[%s1254 + $0x130] sm:$0xff]
        %v1342 = vld [vmem:[%s1254 + $0x138] sm:$0xff]
        %v1343 = vld [vmem:[%s1254 + $0x140] sm:$0xff]
        %v1344 = vld [vmem:[%s1254 + $0x148] sm:$0xff]
        %v1345 = vld [vmem:[%s1254 + $0x150] sm:$0xff]
        %v1346 = vld [vmem:[%s1254 + $0x158] sm:$0xff]
        %v1347 = vld [vmem:[%s1254 + $0x160] sm:$0xff]
        %v1348 = vld [vmem:[%s1254 + $0x168] sm:$0xff]
        %v1349 = vld [vmem:[%s1254 + $0x170] sm:$0xff]
        %v1350 = vld [vmem:[%s1254 + $0x178] sm:$0xff]
        %v1351 = vld [vmem:[%s1254 + $0x180] sm:$0xff]
        %v1352 = vld [vmem:[%s1254 + $0x188] sm:$0xff]
        %v1353 = vld [vmem:[%s1254 + $0x190] sm:$0xff]
        %v1354 = vld [vmem:[%s1254 + $0x198] sm:$0xff]
        %v1355 = vld [vmem:[%s1254 + $0x1a0] sm:$0xff]
        %v1356 = vld [vmem:[%s1254 + $0x1a8] sm:$0xff]
        %v1357 = vld [vmem:[%s1254 + $0x1b0] sm:$0xff]
        %v1358 = vld [vmem:[%s1254 + $0x1b8] sm:$0xff]
        %v1359 = vld [vmem:[%s1254 + $0x1c0] sm:$0xff]
        %v1360 = vld [vmem:[%s1254 + $0x1c8] sm:$0xff]
        %v1361 = vld [vmem:[%s1254 + $0x1d0] sm:$0xff]
        %v1362 = vld [vmem:[%s1254 + $0x1d8] sm:$0xff]
        %v1363 = vld [vmem:[%s1254 + $0x1e0] sm:$0xff]
        %v1364 = vld [vmem:[%s1254 + $0x1e8] sm:$0xff]
        %v1365 = vld [vmem:[%s1254 + $0x1f0] sm:$0xff]
        %v1366 = vld [vmem:[%s1254 + $0x1f8] sm:$0xff]
        %v1367 = vld [vmem:[%s1254 + $0x200] sm:$0xff]
        %v1368 = vld [vmem:[%s1254 + $0x208] sm:$0xff]
        %v1369 = vld [vmem:[%s1254 + $0x210] sm:$0xff]
        %v1370 = vld [vmem:[%s1254 + $0x218] sm:$0xff]
        %v1371 = vld [vmem:[%s1254 + $0x220] sm:$0xff]
        %v1372 = vld [vmem:[%s1254 + $0x228] sm:$0xff]
        %v1373 = vld [vmem:[%s1254 + $0x230] sm:$0xff]
        %v1374 = vld [vmem:[%s1254 + $0x238] sm:$0xff]
        %v1375 = vld [vmem:[%s1254 + $0x240] sm:$0xff]
        %v1376 = vld [vmem:[%s1254 + $0x248] sm:$0xff]
        %v1377 = vld [vmem:[%s1254 + $0x250] sm:$0xff]
        %v1378 = vld [vmem:[%s1254 + $0x258] sm:$0xff]
        %v1379 = vld [vmem:[%s1254 + $0x260] sm:$0xff]
        %v1380 = vld [vmem:[%s1254 + $0x268] sm:$0xff]
        %v1381 = vld [vmem:[%s1254 + $0x270] sm:$0xff]
        %v1382 = vld [vmem:[%s1254 + $0x278] sm:$0xff]
        %v1383 = vld [vmem:[%s1254 + $0x280] sm:$0xff]
        %v1384 = vld [vmem:[%s1254 + $0x288] sm:$0xff]
        %v1385 = vld [vmem:[%s1254 + $0x290] sm:$0xff]
        %v1386 = vld [vmem:[%s1254 + $0x298] sm:$0xff]
        %v1387 = vld [vmem:[%s1254 + $0x2a0] sm:$0xff]
        %v1388 = vld [vmem:[%s1254 + $0x2a8] sm:$0xff]
        %v1389 = vld [vmem:[%s1254 + $0x2b0] sm:$0xff]
        %v1390 = vld [vmem:[%s1254 + $0x2b8] sm:$0xff]
        %v1391 = vld [vmem:[%s1254 + $0x2c0] sm:$0xff]
        %v1392 = vld [vmem:[%s1254 + $0x2c8] sm:$0xff]
        %v1393 = vld [vmem:[%s1254 + $0x2d0] sm:$0xff]
        %v1394 = vld [vmem:[%s1254 + $0x2d8] sm:$0xff]
        %v1395 = vld [vmem:[%s1254 + $0x2e0] sm:$0xff]
        %v1396 = vld [vmem:[%s1254 + $0x2e8] sm:$0xff]
        %v1397 = vld [vmem:[%s1254 + $0x2f0] sm:$0xff]
        %v1398 = vld [vmem:[%s1254 + $0x2f8] sm:$0xff]
        %v1399 = vld [vmem:[%s1254 + $0x300] sm:$0xff]
        %v1400 = vld [vmem:[%s1254 + $0x308] sm:$0xff]
        %v1401 = vld [vmem:[%s1254 + $0x310] sm:$0xff]
        %v1402 = vld [vmem:[%s1254 + $0x318] sm:$0xff]
        %v1403 = vld [vmem:[%s1254 + $0x320] sm:$0xff]
        %v1404 = vld [vmem:[%s1254 + $0x328] sm:$0xff]
        %v1405 = vld [vmem:[%s1254 + $0x330] sm:$0xff]
        %v1406 = vld [vmem:[%s1254 + $0x338] sm:$0xff]
        %v1407 = vld [vmem:[%s1254 + $0x340] sm:$0xff]
        %v1408 = vld [vmem:[%s1254 + $0x348] sm:$0xff]
        %v1409 = vld [vmem:[%s1254 + $0x350] sm:$0xff]
        %v1410 = vld [vmem:[%s1254 + $0x358] sm:$0xff]
        %v1411 = vld [vmem:[%s1254 + $0x360] sm:$0xff]
        %v1412 = vld [vmem:[%s1254 + $0x368] sm:$0xff]
        %v1413 = vld [vmem:[%s1254 + $0x370] sm:$0xff]
        %v1414 = vld [vmem:[%s1254 + $0x378] sm:$0xff]
        %v1415 = vld [vmem:[%s1254 + $0x380] sm:$0xff]
        %v1416 = vld [vmem:[%s1254 + $0x388] sm:$0xff]
        %v1417 = vld [vmem:[%s1254 + $0x390] sm:$0xff]
        %v1418 = vld [vmem:[%s1254 + $0x398] sm:$0xff]
        %v1419 = vld [vmem:[%s1254 + $0x3a0] sm:$0xff]
        %v1420 = vld [vmem:[%s1254 + $0x3a8] sm:$0xff]
        %v1421 = vld [vmem:[%s1254 + $0x3b0] sm:$0xff]
        %v1422 = vld [vmem:[%s1254 + $0x3b8] sm:$0xff]
        %v1423 = vld [vmem:[%s1254 + $0x3c0] sm:$0xff]
        %v1424 = vld [vmem:[%s1254 + $0x3c8] sm:$0xff]
        %v1425 = vld [vmem:[%s1254 + $0x3d0] sm:$0xff]
        %v1426 = vld [vmem:[%s1254 + $0x3d8] sm:$0xff]
        %v1427 = vld [vmem:[%s1254 + $0x3e0] sm:$0xff]
        %v1428 = vld [vmem:[%s1254 + $0x3e8] sm:$0xff]
        %v1429 = vld [vmem:[%s1254 + $0x3f0] sm:$0xff]
        %v1430 = vld [vmem:[%s1254 + $0x3f8] sm:$0xff]
        %v1431 = vld [vmem:[%s1254 + $0x400] sm:$0xff]
        %v1432 = vld [vmem:[%s1254 + $0x408] sm:$0xff]
        %v1433 = vld [vmem:[%s1254 + $0x410] sm:$0xff]
        %v1434 = vld [vmem:[%s1254 + $0x418] sm:$0xff]
        %v1435 = vld [vmem:[%s1254 + $0x420] sm:$0xff]
        %v1436 = vld [vmem:[%s1254 + $0x428] sm:$0xff]
        %v1437 = vld [vmem:[%s1254 + $0x430] sm:$0xff]
        %v1438 = vld [vmem:[%s1254 + $0x438] sm:$0xff]
        %v1439 = vld [vmem:[%s1254 + $0x440] sm:$0xff]
        %v1440 = vld [vmem:[%s1254 + $0x448] sm:$0xff]
        %v1441 = vld [vmem:[%s1254 + $0x450] sm:$0xff]
        %v1442 = vld [vmem:[%s1254 + $0x458] sm:$0xff]
        %v1443 = vld [vmem:[%s1254 + $0x460] sm:$0xff]
        %v1444 = vld [vmem:[%s1254 + $0x468] sm:$0xff]
        %v1445 = vld [vmem:[%s1254 + $0x470] sm:$0xff]
        %v1446 = vld [vmem:[%s1254 + $0x478] sm:$0xff]
        %v1447 = vld [vmem:[%s1254 + $0x480] sm:$0xff]
        %v1448 = vld [vmem:[%s1254 + $0x488] sm:$0xff]
        %v1449 = vld [vmem:[%s1254 + $0x490] sm:$0xff]
        %v1450 = vld [vmem:[%s1254 + $0x498] sm:$0xff]
        %v1451 = vld [vmem:[%s1254 + $0x4a0] sm:$0xff]
        %v1452 = vld [vmem:[%s1254 + $0x4a8] sm:$0xff]
        %v1453 = vld [vmem:[%s1254 + $0x4b0] sm:$0xff]
        %v1454 = vld [vmem:[%s1254 + $0x4b8] sm:$0xff]
        %v1455 = vld [vmem:[%s1254 + $0x4c0] sm:$0xff]
        %v1456 = vld [vmem:[%s1254 + $0x4c8] sm:$0xff]
        %v1457 = vld [vmem:[%s1254 + $0x4d0] sm:$0xff]
        %v1458 = vld [vmem:[%s1254 + $0x4d8] sm:$0xff]
        %v1459 = vld [vmem:[%s1254 + $0x4e0] sm:$0xff]
        %v1460 = vld [vmem:[%s1254 + $0x4e8] sm:$0xff]
        %v1461 = vld [vmem:[%s1254 + $0x4f0] sm:$0xff]
        %v1462 = vld [vmem:[%s1254 + $0x4f8] sm:$0xff]
        %v1463 = vld [vmem:[%s1254 + $0x500] sm:$0xff]
        %v1464 = vld [vmem:[%s1254 + $0x508] sm:$0xff]
        %v1465 = vld [vmem:[%s1254 + $0x510] sm:$0xff]
        %v1466 = vld [vmem:[%s1254 + $0x518] sm:$0xff]
        %v1467 = vld [vmem:[%s1254 + $0x520] sm:$0xff]
        %v1468 = vld [vmem:[%s1254 + $0x528] sm:$0xff]
        %v1469 = vld [vmem:[%s1254 + $0x530] sm:$0xff]
        %v1470 = vld [vmem:[%s1254 + $0x538] sm:$0xff]
        %v1471 = vld [vmem:[%s1254 + $0x540] sm:$0xff]
        %v1472 = vld [vmem:[%s1254 + $0x548] sm:$0xff]
        %v1473 = vld [vmem:[%s1254 + $0x550] sm:$0xff]
        %v1474 = vld [vmem:[%s1254 + $0x558] sm:$0xff]
        %v1475 = vld [vmem:[%s1254 + $0x560] sm:$0xff]
        %v1476 = vld [vmem:[%s1254 + $0x568] sm:$0xff]
        %v1477 = vld [vmem:[%s1254 + $0x570] sm:$0xff]
        %v1478 = vld [vmem:[%s1254 + $0x578] sm:$0xff]
        %v1479 = vld [vmem:[%s1254 + $0x580] sm:$0xff]
        %v1480 = vld [vmem:[%s1254 + $0x588] sm:$0xff]
        %v1481 = vld [vmem:[%s1254 + $0x590] sm:$0xff]
        %v1482 = vld [vmem:[%s1254 + $0x598] sm:$0xff]
        %v1483 = vld [vmem:[%s1254 + $0x5a0] sm:$0xff]
        %v1484 = vld [vmem:[%s1254 + $0x5a8] sm:$0xff]
        %v1485 = vld [vmem:[%s1254 + $0x5b0] sm:$0xff]
        %v1486 = vld [vmem:[%s1254 + $0x5b8] sm:$0xff]
        %v1487 = vld [vmem:[%s1254 + $0x5c0] sm:$0xff]
        %v1488 = vld [vmem:[%s1254 + $0x5c8] sm:$0xff]
        %v1489 = vld [vmem:[%s1254 + $0x5d0] sm:$0xff]
        %v1490 = vld [vmem:[%s1254 + $0x5d8] sm:$0xff]
        %v1491 = vld [vmem:[%s1254 + $0x5e0] sm:$0xff]
        %v1492 = vld [vmem:[%s1254 + $0x5e8] sm:$0xff]
        %v1493 = vld [vmem:[%s1254 + $0x5f0] sm:$0xff]
        %v1494 = vld [vmem:[%s1254 + $0x5f8] sm:$0xff]
        %v1495 = vld [vmem:[%s1254 + $0x600] sm:$0xff]
        %v1496 = vld [vmem:[%s1254 + $0x608] sm:$0xff]
        %v1497 = vld [vmem:[%s1254 + $0x610] sm:$0xff]
        %v1498 = vld [vmem:[%s1254 + $0x618] sm:$0xff]
        %v1499 = vld [vmem:[%s1254 + $0x620] sm:$0xff]
        %v1500 = vld [vmem:[%s1254 + $0x628] sm:$0xff]
        %v1501 = vld [vmem:[%s1254 + $0x630] sm:$0xff]
        %v1502 = vld [vmem:[%s1254 + $0x638] sm:$0xff]
        %v1503 = vld [vmem:[%s1254 + $0x640] sm:$0xff]
        %v1504 = vld [vmem:[%s1254 + $0x648] sm:$0xff]
        %v1505 = vld [vmem:[%s1254 + $0x650] sm:$0xff]
        %v1506 = vld [vmem:[%s1254 + $0x658] sm:$0xff]
        %v1507 = vld [vmem:[%s1254 + $0x660] sm:$0xff]
        %v1508 = vld [vmem:[%s1254 + $0x668] sm:$0xff]
        %v1509 = vld [vmem:[%s1254 + $0x670] sm:$0xff]
        %v1510 = vld [vmem:[%s1254 + $0x678] sm:$0xff]
        %v1511 = vld [vmem:[%s1254 + $0x680] sm:$0xff]
        %v1512 = vld [vmem:[%s1254 + $0x688] sm:$0xff]
        %v1513 = vld [vmem:[%s1254 + $0x690] sm:$0xff]
        %v1514 = vld [vmem:[%s1254 + $0x698] sm:$0xff]
        %v1515 = vld [vmem:[%s1254 + $0x6a0] sm:$0xff]
        %v1516 = vld [vmem:[%s1254 + $0x6a8] sm:$0xff]
        %v1517 = vld [vmem:[%s1254 + $0x6b0] sm:$0xff]
        %v1518 = vld [vmem:[%s1254 + $0x6b8] sm:$0xff]
        %v1519 = vld [vmem:[%s1254 + $0x6c0] sm:$0xff]
        %v1520 = vld [vmem:[%s1254 + $0x6c8] sm:$0xff]
        %v1521 = vld [vmem:[%s1254 + $0x6d0] sm:$0xff]
        %v1522 = vld [vmem:[%s1254 + $0x6d8] sm:$0xff]
        %v1523 = vld [vmem:[%s1254 + $0x6e0] sm:$0xff]
        %v1524 = vld [vmem:[%s1254 + $0x6e8] sm:$0xff]
        %v1525 = vld [vmem:[%s1254 + $0x6f0] sm:$0xff]
        %v1526 = vld [vmem:[%s1254 + $0x6f8] sm:$0xff]
        %v1527 = vld [vmem:[%s1254 + $0x700] sm:$0xff]
        %v1528 = vld [vmem:[%s1254 + $0x708] sm:$0xff]
        %v1529 = vld [vmem:[%s1254 + $0x710] sm:$0xff]
        %v1530 = vld [vmem:[%s1254 + $0x718] sm:$0xff]
        %v1531 = vld [vmem:[%s1254 + $0x720] sm:$0xff]
        %v1532 = vld [vmem:[%s1254 + $0x728] sm:$0xff]
        %v1533 = vld [vmem:[%s1254 + $0x730] sm:$0xff]
        %v1534 = vld [vmem:[%s1254 + $0x738] sm:$0xff]
        %v1535 = vld [vmem:[%s1254 + $0x740] sm:$0xff]
        %v1536 = vld [vmem:[%s1254 + $0x748] sm:$0xff]
        %v1537 = vld [vmem:[%s1254 + $0x750] sm:$0xff]
        %v1538 = vld [vmem:[%s1254 + $0x758] sm:$0xff]
        %v1539 = vld [vmem:[%s1254 + $0x760] sm:$0xff]
        %v1540 = vld [vmem:[%s1254 + $0x768] sm:$0xff]
        %v1541 = vld [vmem:[%s1254 + $0x770] sm:$0xff]
        %v1542 = vld [vmem:[%s1254 + $0x778] sm:$0xff]
        %v1543 = vld [vmem:[%s1254 + $0x780] sm:$0xff]
        %v1544 = vld [vmem:[%s1254 + $0x788] sm:$0xff]
        %v1545 = vld [vmem:[%s1254 + $0x790] sm:$0xff]
        %v1546 = vld [vmem:[%s1254 + $0x798] sm:$0xff]
        %v1547 = vld [vmem:[%s1254 + $0x7a0] sm:$0xff]
        %v1548 = vld [vmem:[%s1254 + $0x7a8] sm:$0xff]
        %v1549 = vld [vmem:[%s1254 + $0x7b0] sm:$0xff]
        %v1550 = vld [vmem:[%s1254 + $0x7b8] sm:$0xff]
        %v1551 = vld [vmem:[%s1254 + $0x7c0] sm:$0xff]
        %v1552 = vld [vmem:[%s1254 + $0x7c8] sm:$0xff]
        %v1553 = vld [vmem:[%s1254 + $0x7d0] sm:$0xff]
        %v1554 = vld [vmem:[%s1254 + $0x7d8] sm:$0xff]
        %v1555 = vld [vmem:[%s1254 + $0x7e0] sm:$0xff]
        %v1556 = vld [vmem:[%s1254 + $0x7e8] sm:$0xff]
        %v1557 = vld [vmem:[%s1254 + $0x7f0] sm:$0xff]
        %v1558 = vld [vmem:[%s1254 + $0x7f8] sm:$0xff]
        %v1559 = vld [vmem:[%s1254 + $0x800] sm:$0xff]
        %v1560 = vld [vmem:[%s1254 + $0x808] sm:$0xff]
        %v1561 = vld [vmem:[%s1254 + $0x810] sm:$0xff]
        %v1562 = vld [vmem:[%s1254 + $0x818] sm:$0xff]
        %v1563 = vld [vmem:[%s1254 + $0x820] sm:$0xff]
        %v1564 = vld [vmem:[%s1254 + $0x828] sm:$0xff]
        %v1565 = vld [vmem:[%s1254 + $0x830] sm:$0xff]
        %v1566 = vld [vmem:[%s1254 + $0x838] sm:$0xff]
        %v1567 = vld [vmem:[%s1254 + $0x840] sm:$0xff]
        %v1568 = vld [vmem:[%s1254 + $0x848] sm:$0xff]
        %v1569 = vld [vmem:[%s1254 + $0x850] sm:$0xff]
        %v1570 = vld [vmem:[%s1254 + $0x858] sm:$0xff]
        %v1571 = vld [vmem:[%s1254 + $0x860] sm:$0xff]
        %v1572 = vld [vmem:[%s1254 + $0x868] sm:$0xff]
        %v1573 = vld [vmem:[%s1254 + $0x870] sm:$0xff]
        %v1574 = vld [vmem:[%s1254 + $0x878] sm:$0xff]
        %v1575 = vld [vmem:[%s1254 + $0x880] sm:$0xff]
        %v1576 = vld [vmem:[%s1254 + $0x888] sm:$0xff]
        %v1577 = vld [vmem:[%s1254 + $0x890] sm:$0xff]
        %v1578 = vld [vmem:[%s1254 + $0x898] sm:$0xff]
        %v1579 = vld [vmem:[%s1254 + $0x8a0] sm:$0xff]
        %v1580 = vld [vmem:[%s1254 + $0x8a8] sm:$0xff]
        %v1581 = vld [vmem:[%s1254 + $0x8b0] sm:$0xff]
        %v1582 = vld [vmem:[%s1254 + $0x8b8] sm:$0xff]
        %v1583 = vld [vmem:[%s1254 + $0x8c0] sm:$0xff]
        %v1584 = vld [vmem:[%s1254 + $0x8c8] sm:$0xff]
        %v1585 = vld [vmem:[%s1254 + $0x8d0] sm:$0xff]
        %v1586 = vld [vmem:[%s1254 + $0x8d8] sm:$0xff]
        %v1587 = vld [vmem:[%s1254 + $0x8e0] sm:$0xff]
        %v1588 = vld [vmem:[%s1254 + $0x8e8] sm:$0xff]
        %v1589 = vld [vmem:[%s1254 + $0x8f0] sm:$0xff]
        %v1590 = vld [vmem:[%s1254 + $0x8f8] sm:$0xff]
        %v1591 = vld [vmem:[%s1254 + $0x900] sm:$0xff]
        %v1592 = vld [vmem:[%s1254 + $0x908] sm:$0xff]
        %v1593 = vld [vmem:[%s1254 + $0x910] sm:$0xff]
        %v1594 = vld [vmem:[%s1254 + $0x918] sm:$0xff]
        %v1595 = vld [vmem:[%s1254 + $0x920] sm:$0xff]
        %v1596 = vld [vmem:[%s1254 + $0x928] sm:$0xff]
        %v1597 = vld [vmem:[%s1254 + $0x930] sm:$0xff]
        %v1598 = vld [vmem:[%s1254 + $0x938] sm:$0xff]
        %v1599 = vld [vmem:[%s1254 + $0x940] sm:$0xff]
        %v1600 = vld [vmem:[%s1254 + $0x948] sm:$0xff]
        %v1601 = vld [vmem:[%s1254 + $0x950] sm:$0xff]
        %v1602 = vld [vmem:[%s1254 + $0x958] sm:$0xff]
        %v1603 = vld [vmem:[%s1254 + $0x960] sm:$0xff]
        %v1604 = vld [vmem:[%s1254 + $0x968] sm:$0xff]
        %v1605 = vld [vmem:[%s1254 + $0x970] sm:$0xff]
        %v1606 = vld [vmem:[%s1254 + $0x978] sm:$0xff]
        %v1607 = vld [vmem:[%s1254 + $0x980] sm:$0xff]
        %v1608 = vld [vmem:[%s1254 + $0x988] sm:$0xff]
        %v1609 = vld [vmem:[%s1254 + $0x990] sm:$0xff]
        %v1610 = vld [vmem:[%s1254 + $0x998] sm:$0xff]
        %v1611 = vld [vmem:[%s1254 + $0x9a0] sm:$0xff]
        %v1612 = vld [vmem:[%s1254 + $0x9a8] sm:$0xff]
        %v1613 = vld [vmem:[%s1254 + $0x9b0] sm:$0xff]
        %v1614 = vld [vmem:[%s1254 + $0x9b8] sm:$0xff]
        %v1615 = vld [vmem:[%s1254 + $0x9c0] sm:$0xff]
        %v1616 = vld [vmem:[%s1254 + $0x9c8] sm:$0xff]
        %v1617 = vld [vmem:[%s1254 + $0x9d0] sm:$0xff]
        %v1618 = vld [vmem:[%s1254 + $0x9d8] sm:$0xff]
        %v1619 = vld [vmem:[%s1254 + $0x9e0] sm:$0xff]
        %v1620 = vld [vmem:[%s1254 + $0x9e8] sm:$0xff]
        %v1621 = vld [vmem:[%s1254 + $0x9f0] sm:$0xff]
        %v1622 = vld [vmem:[%s1254 + $0x9f8] sm:$0xff]
        %v1623 = vld [vmem:[%s1254 + $0xa00] sm:$0xff]
        %v1624 = vld [vmem:[%s1254 + $0xa08] sm:$0xff]
        %v1625 = vld [vmem:[%s1254 + $0xa10] sm:$0xff]
        %v1626 = vld [vmem:[%s1254 + $0xa18] sm:$0xff]
        %v1627 = vld [vmem:[%s1254 + $0xa20] sm:$0xff]
        %v1628 = vld [vmem:[%s1254 + $0xa28] sm:$0xff]
        %v1629 = vld [vmem:[%s1254 + $0xa30] sm:$0xff]
        %v1630 = vld [vmem:[%s1254 + $0xa38] sm:$0xff]
        %v1631 = vld [vmem:[%s1254 + $0xa40] sm:$0xff]
        %v1632 = vld [vmem:[%s1254 + $0xa48] sm:$0xff]
        %v1633 = vld [vmem:[%s1254 + $0xa50] sm:$0xff]
        %v1634 = vld [vmem:[%s1254 + $0xa58] sm:$0xff]
        %v1635 = vld [vmem:[%s1254 + $0xa60] sm:$0xff]
        %v1636 = vld [vmem:[%s1254 + $0xa68] sm:$0xff]
        %v1637 = vld [vmem:[%s1254 + $0xa70] sm:$0xff]
        %v1638 = vld [vmem:[%s1254 + $0xa78] sm:$0xff]
        %v1639 = vld [vmem:[%s1254 + $0xa80] sm:$0xff]
        %v1640 = vld [vmem:[%s1254 + $0xa88] sm:$0xff]
        %v1641 = vld [vmem:[%s1254 + $0xa90] sm:$0xff]
        %v1642 = vld [vmem:[%s1254 + $0xa98] sm:$0xff]
        %v1643 = vld [vmem:[%s1254 + $0xaa0] sm:$0xff]
        %v1644 = vld [vmem:[%s1254 + $0xaa8] sm:$0xff]
        %v1645 = vld [vmem:[%s1254 + $0xab0] sm:$0xff]
        %v1646 = vld [vmem:[%s1254 + $0xab8] sm:$0xff]
        %v1647 = vld [vmem:[%s1254 + $0xac0] sm:$0xff]
        %v1648 = vld [vmem:[%s1254 + $0xac8] sm:$0xff]
        %v1649 = vld [vmem:[%s1254 + $0xad0] sm:$0xff]
        %v1650 = vld [vmem:[%s1254 + $0xad8] sm:$0xff]
        %v1651 = vld [vmem:[%s1254 + $0xae0] sm:$0xff]
        %v1652 = vld [vmem:[%s1254 + $0xae8] sm:$0xff]
        %v1653 = vld [vmem:[%s1254 + $0xaf0] sm:$0xff]
        %v1654 = vld [vmem:[%s1254 + $0xaf8] sm:$0xff]
        %v1655 = vld [vmem:[%s1254 + $0xb00] sm:$0xff]
        %v1656 = vld [vmem:[%s1254 + $0xb08] sm:$0xff]
        %v1657 = vld [vmem:[%s1254 + $0xb10] sm:$0xff]
        %v1658 = vld [vmem:[%s1254 + $0xb18] sm:$0xff]
        %v1659 = vld [vmem:[%s1254 + $0xb20] sm:$0xff]
        %v1660 = vld [vmem:[%s1254 + $0xb28] sm:$0xff]
        %v1661 = vld [vmem:[%s1254 + $0xb30] sm:$0xff]
        %v1662 = vld [vmem:[%s1254 + $0xb38] sm:$0xff]
        %v1663 = vld [vmem:[%s1254 + $0xb40] sm:$0xff]
        %v1664 = vld [vmem:[%s1254 + $0xb48] sm:$0xff]
        %v1665 = vld [vmem:[%s1254 + $0xb50] sm:$0xff]
        %v1666 = vld [vmem:[%s1254 + $0xb58] sm:$0xff]
        %v1667 = vld [vmem:[%s1254 + $0xb60] sm:$0xff]
        %v1668 = vld [vmem:[%s1254 + $0xb68] sm:$0xff]
        %v1669 = vld [vmem:[%s1254 + $0xb70] sm:$0xff]
        %v1670 = vld [vmem:[%s1254 + $0xb78] sm:$0xff]
        %v1671 = vld [vmem:[%s1254 + $0xb80] sm:$0xff]
        %v1672 = vld [vmem:[%s1254 + $0xb88] sm:$0xff]
        %v1673 = vld [vmem:[%s1254 + $0xb90] sm:$0xff]
        %v1674 = vld [vmem:[%s1254 + $0xb98] sm:$0xff]
        %v1675 = vld [vmem:[%s1254 + $0xba0] sm:$0xff]
        %v1676 = vld [vmem:[%s1254 + $0xba8] sm:$0xff]
        %v1677 = vld [vmem:[%s1254 + $0xbb0] sm:$0xff]
        %v1678 = vld [vmem:[%s1254 + $0xbb8] sm:$0xff]
        %v1679 = vld [vmem:[%s1254 + $0xbc0] sm:$0xff]
        %v1680 = vld [vmem:[%s1254 + $0xbc8] sm:$0xff]
        %v1681 = vld [vmem:[%s1254 + $0xbd0] sm:$0xff]
        %v1682 = vld [vmem:[%s1254 + $0xbd8] sm:$0xff]
        %v1683 = vld [vmem:[%s1254 + $0xbe0] sm:$0xff]
        %v1684 = vld [vmem:[%s1254 + $0xbe8] sm:$0xff]
        %v1685 = vld [vmem:[%s1254 + $0xbf0] sm:$0xff]
        %v1686 = vld [vmem:[%s1254 + $0xbf8] sm:$0xff]
        %v1687 = vld [vmem:[%s1254 + $0xc00] sm:$0xff]
        %v1688 = vld [vmem:[%s1254 + $0xc08] sm:$0xff]
        %v1689 = vld [vmem:[%s1254 + $0xc10] sm:$0xff]
        %v1690 = vld [vmem:[%s1254 + $0xc18] sm:$0xff]
        %v1691 = vld [vmem:[%s1254 + $0xc20] sm:$0xff]
        %v1692 = vld [vmem:[%s1254 + $0xc28] sm:$0xff]
        %v1693 = vld [vmem:[%s1254 + $0xc30] sm:$0xff]
        %v1694 = vld [vmem:[%s1254 + $0xc38] sm:$0xff]
        %v1695 = vld [vmem:[%s1254 + $0xc40] sm:$0xff]
        %v1696 = vld [vmem:[%s1254 + $0xc48] sm:$0xff]
        %v1697 = vld [vmem:[%s1254 + $0xc50] sm:$0xff]
        %v1698 = vld [vmem:[%s1254 + $0xc58] sm:$0xff]
        %v1699 = vld [vmem:[%s1254 + $0xc60] sm:$0xff]
        %v1700 = vld [vmem:[%s1254 + $0xc68] sm:$0xff]
        %v1701 = vld [vmem:[%s1254 + $0xc70] sm:$0xff]
        %v1702 = vld [vmem:[%s1254 + $0xc78] sm:$0xff]
        %v1703 = vld [vmem:[%s1254 + $0xc80] sm:$0xff]
        %v1704 = vld [vmem:[%s1254 + $0xc88] sm:$0xff]
        %v1705 = vld [vmem:[%s1254 + $0xc90] sm:$0xff]
        %v1706 = vld [vmem:[%s1254 + $0xc98] sm:$0xff]
        %v1707 = vld [vmem:[%s1254 + $0xca0] sm:$0xff]
        %v1708 = vld [vmem:[%s1254 + $0xca8] sm:$0xff]
        %v1709 = vld [vmem:[%s1254 + $0xcb0] sm:$0xff]
        %v1710 = vld [vmem:[%s1254 + $0xcb8] sm:$0xff]
        %v1711 = vld [vmem:[%s1254 + $0xcc0] sm:$0xff]
        %v1712 = vld [vmem:[%s1254 + $0xcc8] sm:$0xff]
        %v1713 = vld [vmem:[%s1254 + $0xcd0] sm:$0xff]
        %v1714 = vld [vmem:[%s1254 + $0xcd8] sm:$0xff]
        %v1715 = vld [vmem:[%s1254 + $0xce0] sm:$0xff]
        %v1716 = vld [vmem:[%s1254 + $0xce8] sm:$0xff]
        %v1717 = vld [vmem:[%s1254 + $0xcf0] sm:$0xff]
        %v1718 = vld [vmem:[%s1254 + $0xcf8] sm:$0xff]
        %v1719 = vld [vmem:[%s1254 + $0xd00] sm:$0xff]
        %v1720 = vld [vmem:[%s1254 + $0xd08] sm:$0xff]
        %v1721 = vld [vmem:[%s1254 + $0xd10] sm:$0xff]
        %v1722 = vld [vmem:[%s1254 + $0xd18] sm:$0xff]
        %v1723 = vld [vmem:[%s1254 + $0xd20] sm:$0xff]
        %v1724 = vld [vmem:[%s1254 + $0xd28] sm:$0xff]
        %v1725 = vld [vmem:[%s1254 + $0xd30] sm:$0xff]
        %v1726 = vld [vmem:[%s1254 + $0xd38] sm:$0xff]
        %v1727 = vld [vmem:[%s1254 + $0xd40] sm:$0xff]
        %v1728 = vld [vmem:[%s1254 + $0xd48] sm:$0xff]
        %v1729 = vld [vmem:[%s1254 + $0xd50] sm:$0xff]
        %v1730 = vld [vmem:[%s1254 + $0xd58] sm:$0xff]
        %v1731 = vld [vmem:[%s1254 + $0xd60] sm:$0xff]
        %v1732 = vld [vmem:[%s1254 + $0xd68] sm:$0xff]
        %v1733 = vld [vmem:[%s1254 + $0xd70] sm:$0xff]
        %v1734 = vld [vmem:[%s1254 + $0xd78] sm:$0xff]
        %v1735 = vld [vmem:[%s1254 + $0xd80] sm:$0xff]
        %v1736 = vld [vmem:[%s1254 + $0xd88] sm:$0xff]
        %v1737 = vld [vmem:[%s1254 + $0xd90] sm:$0xff]
        %v1738 = vld [vmem:[%s1254 + $0xd98] sm:$0xff]
        %v1739 = vld [vmem:[%s1254 + $0xda0] sm:$0xff]
        %v1740 = vld [vmem:[%s1254 + $0xda8] sm:$0xff]
        %v1741 = vld [vmem:[%s1254 + $0xdb0] sm:$0xff]
        %v1742 = vld [vmem:[%s1254 + $0xdb8] sm:$0xff]
        %v1743 = vld [vmem:[%s1254 + $0xdc0] sm:$0xff]
        %v1744 = vld [vmem:[%s1254 + $0xdc8] sm:$0xff]
        %v1745 = vld [vmem:[%s1254 + $0xdd0] sm:$0xff]
        %v1746 = vld [vmem:[%s1254 + $0xdd8] sm:$0xff]
        %v1747 = vld [vmem:[%s1254 + $0xde0] sm:$0xff]
        %v1748 = vld [vmem:[%s1254 + $0xde8] sm:$0xff]
        %v1749 = vld [vmem:[%s1254 + $0xdf0] sm:$0xff]
        %v1750 = vld [vmem:[%s1254 + $0xdf8] sm:$0xff]
        %v1751 = vld [vmem:[%s1254 + $0xe00] sm:$0xff]
        %v1752 = vld [vmem:[%s1254 + $0xe08] sm:$0xff]
        %v1753 = vld [vmem:[%s1254 + $0xe10] sm:$0xff]
        %v1754 = vld [vmem:[%s1254 + $0xe18] sm:$0xff]
        %v1755 = vld [vmem:[%s1254 + $0xe20] sm:$0xff]
        %v1756 = vld [vmem:[%s1254 + $0xe28] sm:$0xff]
        %v1757 = vld [vmem:[%s1254 + $0xe30] sm:$0xff]
        %v1758 = vld [vmem:[%s1254 + $0xe38] sm:$0xff]
        %v1759 = vld [vmem:[%s1254 + $0xe40] sm:$0xff]
        %v1760 = vld [vmem:[%s1254 + $0xe48] sm:$0xff]
        %v1761 = vld [vmem:[%s1254 + $0xe50] sm:$0xff]
        %v1762 = vld [vmem:[%s1254 + $0xe58] sm:$0xff]
        %v1763 = vld [vmem:[%s1254 + $0xe60] sm:$0xff]
        %v1764 = vld [vmem:[%s1254 + $0xe68] sm:$0xff]
        %v1765 = vld [vmem:[%s1254 + $0xe70] sm:$0xff]
        %v1766 = vld [vmem:[%s1254 + $0xe78] sm:$0xff]
        %v1767 = vld [vmem:[%s1254 + $0xe80] sm:$0xff]
        %v1768 = vld [vmem:[%s1254 + $0xe88] sm:$0xff]
        %v1769 = vld [vmem:[%s1254 + $0xe90] sm:$0xff]
        %v1770 = vld [vmem:[%s1254 + $0xe98] sm:$0xff]
        %v1771 = vld [vmem:[%s1254 + $0xea0] sm:$0xff]
        %v1772 = vld [vmem:[%s1254 + $0xea8] sm:$0xff]
        %v1773 = vld [vmem:[%s1254 + $0xeb0] sm:$0xff]
        %v1774 = vld [vmem:[%s1254 + $0xeb8] sm:$0xff]
        %v1775 = vld [vmem:[%s1254 + $0xec0] sm:$0xff]
        %v1776 = vld [vmem:[%s1254 + $0xec8] sm:$0xff]
        %v1777 = vld [vmem:[%s1254 + $0xed0] sm:$0xff]
        %v1778 = vld [vmem:[%s1254 + $0xed8] sm:$0xff]
        %v1779 = vld [vmem:[%s1254 + $0xee0] sm:$0xff]
        %v1780 = vld [vmem:[%s1254 + $0xee8] sm:$0xff]
        %v1781 = vld [vmem:[%s1254 + $0xef0] sm:$0xff]
        %v1782 = vld [vmem:[%s1254 + $0xef8] sm:$0xff]
        %v1783 = vld [vmem:[%s1254 + $0xf00] sm:$0xff]
        %v1784 = vld [vmem:[%s1254 + $0xf08] sm:$0xff]
        %v1785 = vld [vmem:[%s1254 + $0xf10] sm:$0xff]
        %v1786 = vld [vmem:[%s1254 + $0xf18] sm:$0xff]
        %v1787 = vld [vmem:[%s1254 + $0xf20] sm:$0xff]
        %v1788 = vld [vmem:[%s1254 + $0xf28] sm:$0xff]
        %v1789 = vld [vmem:[%s1254 + $0xf30] sm:$0xff]
        %v1790 = vld [vmem:[%s1254 + $0xf38] sm:$0xff]
        %v1791 = vld [vmem:[%s1254 + $0xf40] sm:$0xff]
        %v1792 = vld [vmem:[%s1254 + $0xf48] sm:$0xff]
        %v1793 = vld [vmem:[%s1254 + $0xf50] sm:$0xff]
        %v1794 = vld [vmem:[%s1254 + $0xf58] sm:$0xff]
        %v1795 = vld [vmem:[%s1254 + $0xf60] sm:$0xff]
        %v1796 = vld [vmem:[%s1254 + $0xf68] sm:$0xff]
        %v1797 = vld [vmem:[%s1254 + $0xf70] sm:$0xff]
        %v1798 = vld [vmem:[%s1254 + $0xf78] sm:$0xff]
        %v1799 = vld [vmem:[%s1254 + $0xf80] sm:$0xff]
        %v1800 = vld [vmem:[%s1254 + $0xf88] sm:$0xff]
        %v1801 = vld [vmem:[%s1254 + $0xf90] sm:$0xff]
        %v1802 = vld [vmem:[%s1254 + $0xf98] sm:$0xff]
        %v1803 = vld [vmem:[%s1254 + $0xfa0] sm:$0xff]
        %v1804 = vld [vmem:[%s1254 + $0xfa8] sm:$0xff]
        %v1805 = vld [vmem:[%s1254 + $0xfb0] sm:$0xff]
        %v1806 = vld [vmem:[%s1254 + $0xfb8] sm:$0xff]
        %v1807 = vld [vmem:[%s1254 + $0xfc0] sm:$0xff]
        %v1808 = vld [vmem:[%s1254 + $0xfc8] sm:$0xff]
        %v1809 = vld [vmem:[%s1254 + $0xfd0] sm:$0xff]
        %v1810 = vld [vmem:[%s1254 + $0xfd8] sm:$0xff]
        %v1811 = vld [vmem:[%s1254 + $0xfe0] sm:$0xff]
        %v1812 = vld [vmem:[%s1254 + $0xfe8] sm:$0xff]
        %v1813 = vld [vmem:[%s1254 + $0xff0] sm:$0xff]
        %v1814 = vld [vmem:[%s1254 + $0xff8] sm:$0xff]
        %v1815 = vld [vmem:[%s1287] sm:$0xf]
        %v1817 = vperm.slane %v1815, 0
        %v1818 = vperm.slane %v1815, 1
        %v1819 = vperm.slane %v1815, 2
        %v1820 = vperm.slane %v1815, 3
        %1827 = vst [vmem:[#allocation1] ss:$4 sm:$0xff] %v1301
        %s1828 = scalar_lea.vmem [#allocation1], 32
        %1829 = vst [vmem:[%s1828] ss:$4 sm:$0xff] %v1302
        %v1830 = vld.sshfl [vmem:[#allocation1] sm:$0xff pattern:$0x73625140]
        %v1831 = vld.sshfl [vmem:[#allocation1 + $0x8] sm:$0xff pattern:$0x73625140]
        %v1832 = vld.sshfl [vmem:[#allocation1 + $0x10] sm:$0xff pattern:$0x73625140]
        %v1833 = vld.sshfl [vmem:[#allocation1 + $0x18] sm:$0xff pattern:$0x73625140]
        %v1834 = vld.sshfl [vmem:[#allocation1 + $0x20] sm:$0xff pattern:$0x73625140]
        %v1835 = vld.sshfl [vmem:[#allocation1 + $0x28] sm:$0xff pattern:$0x73625140]
        %v1836 = vld.sshfl [vmem:[#allocation1 + $0x30] sm:$0xff pattern:$0x73625140]
        %v1837 = vld.sshfl [vmem:[#allocation1 + $0x38] sm:$0xff pattern:$0x73625140]
        %1846 = vmatpush.msra.mxu0 %v1363
        %1847 = vmatpush.msra.mxu0 %v1359
        %1848 = vmatpush.msra.mxu0 %v1355
        %1849 = vmatpush.msra.mxu0 %v1351
        %1850 = vmatpush.msra.mxu0 %v1347
        %1851 = vmatpush.msra.mxu0 %v1343
        %1852 = vmatpush.msra.mxu0 %v1339
        %1853 = vmatpush.msra.mxu0 %v1335
        %1854 = vmatpush.msra.mxu0 %v1331
        %1855 = vmatpush.msra.mxu0 %v1327
        %1856 = vmatpush.msra.mxu0 %v1323
        %1857 = vmatpush.msra.mxu0 %v1319
        %1858 = vmatpush.msra.mxu0 %v1315
        %1859 = vmatpush.msra.mxu0 %v1311
        %1860 = vmatpush.msra.mxu0 %v1307
        %1861 = vmatpush.msra.mxu0 %v1303
        %1862 = vmatmul.f32.gmra.mxu0 %v1830
        %v1863 = vpop.f32.mrf.mxu0
        %v1864 = vadd.f32 %v1817, %v1863
        %1865 = vdwg.mxu0
        %1866 = vmatpush.msra.mxu0 %v1427
        %1867 = vmatpush.msra.mxu0 %v1423
        %1868 = vmatpush.msra.mxu0 %v1419
        %1869 = vmatpush.msra.mxu0 %v1415
        %1870 = vmatpush.msra.mxu0 %v1411
        %1871 = vmatpush.msra.mxu0 %v1407
        %1872 = vmatpush.msra.mxu0 %v1403
        %1873 = vmatpush.msra.mxu0 %v1399
        %1874 = vmatpush.msra.mxu0 %v1395
        %1875 = vmatpush.msra.mxu0 %v1391
        %1876 = vmatpush.msra.mxu0 %v1387
        %1877 = vmatpush.msra.mxu0 %v1383
        %1878 = vmatpush.msra.mxu0 %v1379
        %1879 = vmatpush.msra.mxu0 %v1375
        %1880 = vmatpush.msra.mxu0 %v1371
        %1881 = vmatpush.msra.mxu0 %v1367
        %1882 = vmatmul.f32.gmra.mxu0 %v1831
        %v1883 = vpop.f32.mrf.mxu0
        %v1884 = vadd.f32 %v1864, %v1883
        %1885 = vdwg.mxu0
        %1886 = vmatpush.msra.mxu0 %v1491
        %1887 = vmatpush.msra.mxu0 %v1487
        %1888 = vmatpush.msra.mxu0 %v1483
        %1889 = vmatpush.msra.mxu0 %v1479
        %1890 = vmatpush.msra.mxu0 %v1475
        %1891 = vmatpush.msra.mxu0 %v1471
        %1892 = vmatpush.msra.mxu0 %v1467
        %1893 = vmatpush.msra.mxu0 %v1463
        %1894 = vmatpush.msra.mxu0 %v1459
        %1895 = vmatpush.msra.mxu0 %v1455
        %1896 = vmatpush.msra.mxu0 %v1451
        %1897 = vmatpush.msra.mxu0 %v1447
        %1898 = vmatpush.msra.mxu0 %v1443
        %1899 = vmatpush.msra.mxu0 %v1439
        %1900 = vmatpush.msra.mxu0 %v1435
        %1901 = vmatpush.msra.mxu0 %v1431
        %1902 = vmatmul.f32.gmra.mxu0 %v1832
        %v1903 = vpop.f32.mrf.mxu0
        %v1904 = vadd.f32 %v1884, %v1903
        %1905 = vdwg.mxu0
        %1906 = vmatpush.msra.mxu0 %v1555
        %1907 = vmatpush.msra.mxu0 %v1551
        %1908 = vmatpush.msra.mxu0 %v1547
        %1909 = vmatpush.msra.mxu0 %v1543
        %1910 = vmatpush.msra.mxu0 %v1539
        %1911 = vmatpush.msra.mxu0 %v1535
        %1912 = vmatpush.msra.mxu0 %v1531
        %1913 = vmatpush.msra.mxu0 %v1527
        %1914 = vmatpush.msra.mxu0 %v1523
        %1915 = vmatpush.msra.mxu0 %v1519
        %1916 = vmatpush.msra.mxu0 %v1515
        %1917 = vmatpush.msra.mxu0 %v1511
        %1918 = vmatpush.msra.mxu0 %v1507
        %1919 = vmatpush.msra.mxu0 %v1503
        %1920 = vmatpush.msra.mxu0 %v1499
        %1921 = vmatpush.msra.mxu0 %v1495
        %1922 = vmatmul.f32.gmra.mxu0 %v1833
        %v1923 = vpop.f32.mrf.mxu0
        %v1924 = vadd.f32 %v1904, %v1923
        %1925 = vdwg.mxu0
        %1926 = vmatpush.msra.mxu0 %v1619
        %1927 = vmatpush.msra.mxu0 %v1615
        %1928 = vmatpush.msra.mxu0 %v1611
        %1929 = vmatpush.msra.mxu0 %v1607
        %1930 = vmatpush.msra.mxu0 %v1603
        %1931 = vmatpush.msra.mxu0 %v1599
        %1932 = vmatpush.msra.mxu0 %v1595
        %1933 = vmatpush.msra.mxu0 %v1591
        %1934 = vmatpush.msra.mxu0 %v1587
        %1935 = vmatpush.msra.mxu0 %v1583
        %1936 = vmatpush.msra.mxu0 %v1579
        %1937 = vmatpush.msra.mxu0 %v1575
        %1938 = vmatpush.msra.mxu0 %v1571
        %1939 = vmatpush.msra.mxu0 %v1567
        %1940 = vmatpush.msra.mxu0 %v1563
        %1941 = vmatpush.msra.mxu0 %v1559
        %1942 = vmatmul.f32.gmra.mxu0 %v1834
        %v1943 = vpop.f32.mrf.mxu0
        %v1944 = vadd.f32 %v1924, %v1943
        %1945 = vdwg.mxu0
        %1946 = vmatpush.msra.mxu0 %v1683
        %1947 = vmatpush.msra.mxu0 %v1679
        %1948 = vmatpush.msra.mxu0 %v1675
        %1949 = vmatpush.msra.mxu0 %v1671
        %1950 = vmatpush.msra.mxu0 %v1667
        %1951 = vmatpush.msra.mxu0 %v1663
        %1952 = vmatpush.msra.mxu0 %v1659
        %1953 = vmatpush.msra.mxu0 %v1655
        %1954 = vmatpush.msra.mxu0 %v1651
        %1955 = vmatpush.msra.mxu0 %v1647
        %1956 = vmatpush.msra.mxu0 %v1643
        %1957 = vmatpush.msra.mxu0 %v1639
        %1958 = vmatpush.msra.mxu0 %v1635
        %1959 = vmatpush.msra.mxu0 %v1631
        %1960 = vmatpush.msra.mxu0 %v1627
        %1961 = vmatpush.msra.mxu0 %v1623
        %1962 = vmatmul.f32.gmra.mxu0 %v1835
        %v1963 = vpop.f32.mrf.mxu0
        %v1964 = vadd.f32 %v1944, %v1963
        %1965 = vdwg.mxu0
        %1966 = vmatpush.msra.mxu0 %v1747
        %1967 = vmatpush.msra.mxu0 %v1743
        %1968 = vmatpush.msra.mxu0 %v1739
        %1969 = vmatpush.msra.mxu0 %v1735
        %1970 = vmatpush.msra.mxu0 %v1731
        %1971 = vmatpush.msra.mxu0 %v1727
        %1972 = vmatpush.msra.mxu0 %v1723
        %1973 = vmatpush.msra.mxu0 %v1719
        %1974 = vmatpush.msra.mxu0 %v1715
        %1975 = vmatpush.msra.mxu0 %v1711
        %1976 = vmatpush.msra.mxu0 %v1707
        %1977 = vmatpush.msra.mxu0 %v1703
        %1978 = vmatpush.msra.mxu0 %v1699
        %1979 = vmatpush.msra.mxu0 %v1695
        %1980 = vmatpush.msra.mxu0 %v1691
        %1981 = vmatpush.msra.mxu0 %v1687
        %1982 = vmatmul.f32.gmra.mxu0 %v1836
        %v1983 = vpop.f32.mrf.mxu0
        %v1984 = vadd.f32 %v1964, %v1983
        %1985 = vdwg.mxu0
        %1986 = vmatpush.msra.mxu0 %v1811
        %1987 = vmatpush.msra.mxu0 %v1807
        %1988 = vmatpush.msra.mxu0 %v1803
        %1989 = vmatpush.msra.mxu0 %v1799
        %1990 = vmatpush.msra.mxu0 %v1795
        %1991 = vmatpush.msra.mxu0 %v1791
        %1992 = vmatpush.msra.mxu0 %v1787
        %1993 = vmatpush.msra.mxu0 %v1783
        %1994 = vmatpush.msra.mxu0 %v1779
        %1995 = vmatpush.msra.mxu0 %v1775
        %1996 = vmatpush.msra.mxu0 %v1771
        %1997 = vmatpush.msra.mxu0 %v1767
        %1998 = vmatpush.msra.mxu0 %v1763
        %1999 = vmatpush.msra.mxu0 %v1759
        %2000 = vmatpush.msra.mxu0 %v1755
        %2001 = vmatpush.msra.mxu0 %v1751
        %2002 = vmatmul.f32.gmra.mxu0 %v1837
        %v2003 = vpop.f32.mrf.mxu0
        %v2004 = vadd.f32 %v1984, %v2003
        %2005 = vdwg.mxu0
        %2006 = vmatpush.msra.mxu0 %v1364
        %2007 = vmatpush.msra.mxu0 %v1360
        %2008 = vmatpush.msra.mxu0 %v1356
        %2009 = vmatpush.msra.mxu0 %v1352
        %2010 = vmatpush.msra.mxu0 %v1348
        %2011 = vmatpush.msra.mxu0 %v1344
        %2012 = vmatpush.msra.mxu0 %v1340
        %2013 = vmatpush.msra.mxu0 %v1336
        %2014 = vmatpush.msra.mxu0 %v1332
        %2015 = vmatpush.msra.mxu0 %v1328
        %2016 = vmatpush.msra.mxu0 %v1324
        %2017 = vmatpush.msra.mxu0 %v1320
        %2018 = vmatpush.msra.mxu0 %v1316
        %2019 = vmatpush.msra.mxu0 %v1312
        %2020 = vmatpush.msra.mxu0 %v1308
        %2021 = vmatpush.msra.mxu0 %v1304
        %2022 = vmatmul.f32.gmra.mxu0 %v1830
        %v2023 = vpop.f32.mrf.mxu0
        %v2024 = vadd.f32 %v1818, %v2023
        %2025 = vdwg.mxu0
        %2026 = vmatpush.msra.mxu0 %v1428
        %2027 = vmatpush.msra.mxu0 %v1424
        %2028 = vmatpush.msra.mxu0 %v1420
        %2029 = vmatpush.msra.mxu0 %v1416
        %2030 = vmatpush.msra.mxu0 %v1412
        %2031 = vmatpush.msra.mxu0 %v1408
        %2032 = vmatpush.msra.mxu0 %v1404
        %2033 = vmatpush.msra.mxu0 %v1400
        %2034 = vmatpush.msra.mxu0 %v1396
        %2035 = vmatpush.msra.mxu0 %v1392
        %2036 = vmatpush.msra.mxu0 %v1388
        %2037 = vmatpush.msra.mxu0 %v1384
        %2038 = vmatpush.msra.mxu0 %v1380
        %2039 = vmatpush.msra.mxu0 %v1376
        %2040 = vmatpush.msra.mxu0 %v1372
        %2041 = vmatpush.msra.mxu0 %v1368
        %2042 = vmatmul.f32.gmra.mxu0 %v1831
        %v2043 = vpop.f32.mrf.mxu0
        %v2044 = vadd.f32 %v2024, %v2043
        %2045 = vdwg.mxu0
        %2046 = vmatpush.msra.mxu0 %v1492
        %2047 = vmatpush.msra.mxu0 %v1488
        %2048 = vmatpush.msra.mxu0 %v1484
        %2049 = vmatpush.msra.mxu0 %v1480
        %2050 = vmatpush.msra.mxu0 %v1476
        %2051 = vmatpush.msra.mxu0 %v1472
        %2052 = vmatpush.msra.mxu0 %v1468
        %2053 = vmatpush.msra.mxu0 %v1464
        %2054 = vmatpush.msra.mxu0 %v1460
        %2055 = vmatpush.msra.mxu0 %v1456
        %2056 = vmatpush.msra.mxu0 %v1452
        %2057 = vmatpush.msra.mxu0 %v1448
        %2058 = vmatpush.msra.mxu0 %v1444
        %2059 = vmatpush.msra.mxu0 %v1440
        %2060 = vmatpush.msra.mxu0 %v1436
        %2061 = vmatpush.msra.mxu0 %v1432
        %2062 = vmatmul.f32.gmra.mxu0 %v1832
        %v2063 = vpop.f32.mrf.mxu0
        %v2064 = vadd.f32 %v2044, %v2063
        %2065 = vdwg.mxu0
        %2066 = vmatpush.msra.mxu0 %v1556
        %2067 = vmatpush.msra.mxu0 %v1552
        %2068 = vmatpush.msra.mxu0 %v1548
        %2069 = vmatpush.msra.mxu0 %v1544
        %2070 = vmatpush.msra.mxu0 %v1540
        %2071 = vmatpush.msra.mxu0 %v1536
        %2072 = vmatpush.msra.mxu0 %v1532
        %2073 = vmatpush.msra.mxu0 %v1528
        %2074 = vmatpush.msra.mxu0 %v1524
        %2075 = vmatpush.msra.mxu0 %v1520
        %2076 = vmatpush.msra.mxu0 %v1516
        %2077 = vmatpush.msra.mxu0 %v1512
        %2078 = vmatpush.msra.mxu0 %v1508
        %2079 = vmatpush.msra.mxu0 %v1504
        %2080 = vmatpush.msra.mxu0 %v1500
        %2081 = vmatpush.msra.mxu0 %v1496
        %2082 = vmatmul.f32.gmra.mxu0 %v1833
        %v2083 = vpop.f32.mrf.mxu0
        %v2084 = vadd.f32 %v2064, %v2083
        %2085 = vdwg.mxu0
        %2086 = vmatpush.msra.mxu0 %v1620
        %2087 = vmatpush.msra.mxu0 %v1616
        %2088 = vmatpush.msra.mxu0 %v1612
        %2089 = vmatpush.msra.mxu0 %v1608
        %2090 = vmatpush.msra.mxu0 %v1604
        %2091 = vmatpush.msra.mxu0 %v1600
        %2092 = vmatpush.msra.mxu0 %v1596
        %2093 = vmatpush.msra.mxu0 %v1592
        %2094 = vmatpush.msra.mxu0 %v1588
        %2095 = vmatpush.msra.mxu0 %v1584
        %2096 = vmatpush.msra.mxu0 %v1580
        %2097 = vmatpush.msra.mxu0 %v1576
        %2098 = vmatpush.msra.mxu0 %v1572
        %2099 = vmatpush.msra.mxu0 %v1568
        %2100 = vmatpush.msra.mxu0 %v1564
        %2101 = vmatpush.msra.mxu0 %v1560
        %2102 = vmatmul.f32.gmra.mxu0 %v1834
        %v2103 = vpop.f32.mrf.mxu0
        %v2104 = vadd.f32 %v2084, %v2103
        %2105 = vdwg.mxu0
        %2106 = vmatpush.msra.mxu0 %v1684
        %2107 = vmatpush.msra.mxu0 %v1680
        %2108 = vmatpush.msra.mxu0 %v1676
        %2109 = vmatpush.msra.mxu0 %v1672
        %2110 = vmatpush.msra.mxu0 %v1668
        %2111 = vmatpush.msra.mxu0 %v1664
        %2112 = vmatpush.msra.mxu0 %v1660
        %2113 = vmatpush.msra.mxu0 %v1656
        %2114 = vmatpush.msra.mxu0 %v1652
        %2115 = vmatpush.msra.mxu0 %v1648
        %2116 = vmatpush.msra.mxu0 %v1644
        %2117 = vmatpush.msra.mxu0 %v1640
        %2118 = vmatpush.msra.mxu0 %v1636
        %2119 = vmatpush.msra.mxu0 %v1632
        %2120 = vmatpush.msra.mxu0 %v1628
        %2121 = vmatpush.msra.mxu0 %v1624
        %2122 = vmatmul.f32.gmra.mxu0 %v1835
        %v2123 = vpop.f32.mrf.mxu0
        %v2124 = vadd.f32 %v2104, %v2123
        %2125 = vdwg.mxu0
        %2126 = vmatpush.msra.mxu0 %v1748
        %2127 = vmatpush.msra.mxu0 %v1744
        %2128 = vmatpush.msra.mxu0 %v1740
        %2129 = vmatpush.msra.mxu0 %v1736
        %2130 = vmatpush.msra.mxu0 %v1732
        %2131 = vmatpush.msra.mxu0 %v1728
        %2132 = vmatpush.msra.mxu0 %v1724
        %2133 = vmatpush.msra.mxu0 %v1720
        %2134 = vmatpush.msra.mxu0 %v1716
        %2135 = vmatpush.msra.mxu0 %v1712
        %2136 = vmatpush.msra.mxu0 %v1708
        %2137 = vmatpush.msra.mxu0 %v1704
        %2138 = vmatpush.msra.mxu0 %v1700
        %2139 = vmatpush.msra.mxu0 %v1696
        %2140 = vmatpush.msra.mxu0 %v1692
        %2141 = vmatpush.msra.mxu0 %v1688
        %2142 = vmatmul.f32.gmra.mxu0 %v1836
        %v2143 = vpop.f32.mrf.mxu0
        %v2144 = vadd.f32 %v2124, %v2143
        %2145 = vdwg.mxu0
        %2146 = vmatpush.msra.mxu0 %v1812
        %2147 = vmatpush.msra.mxu0 %v1808
        %2148 = vmatpush.msra.mxu0 %v1804
        %2149 = vmatpush.msra.mxu0 %v1800
        %2150 = vmatpush.msra.mxu0 %v1796
        %2151 = vmatpush.msra.mxu0 %v1792
        %2152 = vmatpush.msra.mxu0 %v1788
        %2153 = vmatpush.msra.mxu0 %v1784
        %2154 = vmatpush.msra.mxu0 %v1780
        %2155 = vmatpush.msra.mxu0 %v1776
        %2156 = vmatpush.msra.mxu0 %v1772
        %2157 = vmatpush.msra.mxu0 %v1768
        %2158 = vmatpush.msra.mxu0 %v1764
        %2159 = vmatpush.msra.mxu0 %v1760
        %2160 = vmatpush.msra.mxu0 %v1756
        %2161 = vmatpush.msra.mxu0 %v1752
        %2162 = vmatmul.f32.gmra.mxu0 %v1837
        %v2163 = vpop.f32.mrf.mxu0
        %v2164 = vadd.f32 %v2144, %v2163
        %2165 = vdwg.mxu0
        %2166 = vmatpush.msra.mxu0 %v1365
        %2167 = vmatpush.msra.mxu0 %v1361
        %2168 = vmatpush.msra.mxu0 %v1357
        %2169 = vmatpush.msra.mxu0 %v1353
        %2170 = vmatpush.msra.mxu0 %v1349
        %2171 = vmatpush.msra.mxu0 %v1345
        %2172 = vmatpush.msra.mxu0 %v1341
        %2173 = vmatpush.msra.mxu0 %v1337
        %2174 = vmatpush.msra.mxu0 %v1333
        %2175 = vmatpush.msra.mxu0 %v1329
        %2176 = vmatpush.msra.mxu0 %v1325
        %2177 = vmatpush.msra.mxu0 %v1321
        %2178 = vmatpush.msra.mxu0 %v1317
        %2179 = vmatpush.msra.mxu0 %v1313
        %2180 = vmatpush.msra.mxu0 %v1309
        %2181 = vmatpush.msra.mxu0 %v1305
        %2182 = vmatmul.f32.gmra.mxu0 %v1830
        %v2183 = vpop.f32.mrf.mxu0
        %v2184 = vadd.f32 %v1819, %v2183
        %2185 = vdwg.mxu0
        %2186 = vmatpush.msra.mxu0 %v1429
        %2187 = vmatpush.msra.mxu0 %v1425
        %2188 = vmatpush.msra.mxu0 %v1421
        %2189 = vmatpush.msra.mxu0 %v1417
        %2190 = vmatpush.msra.mxu0 %v1413
        %2191 = vmatpush.msra.mxu0 %v1409
        %2192 = vmatpush.msra.mxu0 %v1405
        %2193 = vmatpush.msra.mxu0 %v1401
        %2194 = vmatpush.msra.mxu0 %v1397
        %2195 = vmatpush.msra.mxu0 %v1393
        %2196 = vmatpush.msra.mxu0 %v1389
        %2197 = vmatpush.msra.mxu0 %v1385
        %2198 = vmatpush.msra.mxu0 %v1381
        %2199 = vmatpush.msra.mxu0 %v1377
        %2200 = vmatpush.msra.mxu0 %v1373
        %2201 = vmatpush.msra.mxu0 %v1369
        %2202 = vmatmul.f32.gmra.mxu0 %v1831
        %v2203 = vpop.f32.mrf.mxu0
        %v2204 = vadd.f32 %v2184, %v2203
        %2205 = vdwg.mxu0
        %2206 = vmatpush.msra.mxu0 %v1493
        %2207 = vmatpush.msra.mxu0 %v1489
        %2208 = vmatpush.msra.mxu0 %v1485
        %2209 = vmatpush.msra.mxu0 %v1481
        %2210 = vmatpush.msra.mxu0 %v1477
        %2211 = vmatpush.msra.mxu0 %v1473
        %2212 = vmatpush.msra.mxu0 %v1469
        %2213 = vmatpush.msra.mxu0 %v1465
        %2214 = vmatpush.msra.mxu0 %v1461
        %2215 = vmatpush.msra.mxu0 %v1457
        %2216 = vmatpush.msra.mxu0 %v1453
        %2217 = vmatpush.msra.mxu0 %v1449
        %2218 = vmatpush.msra.mxu0 %v1445
        %2219 = vmatpush.msra.mxu0 %v1441
        %2220 = vmatpush.msra.mxu0 %v1437
        %2221 = vmatpush.msra.mxu0 %v1433
        %2222 = vmatmul.f32.gmra.mxu0 %v1832
        %v2223 = vpop.f32.mrf.mxu0
        %v2224 = vadd.f32 %v2204, %v2223
        %2225 = vdwg.mxu0
        %2226 = vmatpush.msra.mxu0 %v1557
        %2227 = vmatpush.msra.mxu0 %v1553
        %2228 = vmatpush.msra.mxu0 %v1549
        %2229 = vmatpush.msra.mxu0 %v1545
        %2230 = vmatpush.msra.mxu0 %v1541
        %2231 = vmatpush.msra.mxu0 %v1537
        %2232 = vmatpush.msra.mxu0 %v1533
        %2233 = vmatpush.msra.mxu0 %v1529
        %2234 = vmatpush.msra.mxu0 %v1525
        %2235 = vmatpush.msra.mxu0 %v1521
        %2236 = vmatpush.msra.mxu0 %v1517
        %2237 = vmatpush.msra.mxu0 %v1513
        %2238 = vmatpush.msra.mxu0 %v1509
        %2239 = vmatpush.msra.mxu0 %v1505
        %2240 = vmatpush.msra.mxu0 %v1501
        %2241 = vmatpush.msra.mxu0 %v1497
        %2242 = vmatmul.f32.gmra.mxu0 %v1833
        %v2243 = vpop.f32.mrf.mxu0
        %v2244 = vadd.f32 %v2224, %v2243
        %2245 = vdwg.mxu0
        %2246 = vmatpush.msra.mxu0 %v1621
        %2247 = vmatpush.msra.mxu0 %v1617
        %2248 = vmatpush.msra.mxu0 %v1613
        %2249 = vmatpush.msra.mxu0 %v1609
        %2250 = vmatpush.msra.mxu0 %v1605
        %2251 = vmatpush.msra.mxu0 %v1601
        %2252 = vmatpush.msra.mxu0 %v1597
        %2253 = vmatpush.msra.mxu0 %v1593
        %2254 = vmatpush.msra.mxu0 %v1589
        %2255 = vmatpush.msra.mxu0 %v1585
        %2256 = vmatpush.msra.mxu0 %v1581
        %2257 = vmatpush.msra.mxu0 %v1577
        %2258 = vmatpush.msra.mxu0 %v1573
        %2259 = vmatpush.msra.mxu0 %v1569
        %2260 = vmatpush.msra.mxu0 %v1565
        %2261 = vmatpush.msra.mxu0 %v1561
        %2262 = vmatmul.f32.gmra.mxu0 %v1834
        %v2263 = vpop.f32.mrf.mxu0
        %v2264 = vadd.f32 %v2244, %v2263
        %2265 = vdwg.mxu0
        %2266 = vmatpush.msra.mxu0 %v1685
        %2267 = vmatpush.msra.mxu0 %v1681
        %2268 = vmatpush.msra.mxu0 %v1677
        %2269 = vmatpush.msra.mxu0 %v1673
        %2270 = vmatpush.msra.mxu0 %v1669
        %2271 = vmatpush.msra.mxu0 %v1665
        %2272 = vmatpush.msra.mxu0 %v1661
        %2273 = vmatpush.msra.mxu0 %v1657
        %2274 = vmatpush.msra.mxu0 %v1653
        %2275 = vmatpush.msra.mxu0 %v1649
        %2276 = vmatpush.msra.mxu0 %v1645
        %2277 = vmatpush.msra.mxu0 %v1641
        %2278 = vmatpush.msra.mxu0 %v1637
        %2279 = vmatpush.msra.mxu0 %v1633
        %2280 = vmatpush.msra.mxu0 %v1629
        %2281 = vmatpush.msra.mxu0 %v1625
        %2282 = vmatmul.f32.gmra.mxu0 %v1835
        %v2283 = vpop.f32.mrf.mxu0
        %v2284 = vadd.f32 %v2264, %v2283
        %2285 = vdwg.mxu0
        %2286 = vmatpush.msra.mxu0 %v1749
        %2287 = vmatpush.msra.mxu0 %v1745
        %2288 = vmatpush.msra.mxu0 %v1741
        %2289 = vmatpush.msra.mxu0 %v1737
        %2290 = vmatpush.msra.mxu0 %v1733
        %2291 = vmatpush.msra.mxu0 %v1729
        %2292 = vmatpush.msra.mxu0 %v1725
        %2293 = vmatpush.msra.mxu0 %v1721
        %2294 = vmatpush.msra.mxu0 %v1717
        %2295 = vmatpush.msra.mxu0 %v1713
        %2296 = vmatpush.msra.mxu0 %v1709
        %2297 = vmatpush.msra.mxu0 %v1705
        %2298 = vmatpush.msra.mxu0 %v1701
        %2299 = vmatpush.msra.mxu0 %v1697
        %2300 = vmatpush.msra.mxu0 %v1693
        %2301 = vmatpush.msra.mxu0 %v1689
        %2302 = vmatmul.f32.gmra.mxu0 %v1836
        %v2303 = vpop.f32.mrf.mxu0
        %v2304 = vadd.f32 %v2284, %v2303
        %2305 = vdwg.mxu0
        %2306 = vmatpush.msra.mxu0 %v1813
        %2307 = vmatpush.msra.mxu0 %v1809
        %2308 = vmatpush.msra.mxu0 %v1805
        %2309 = vmatpush.msra.mxu0 %v1801
        %2310 = vmatpush.msra.mxu0 %v1797
        %2311 = vmatpush.msra.mxu0 %v1793
        %2312 = vmatpush.msra.mxu0 %v1789
        %2313 = vmatpush.msra.mxu0 %v1785
        %2314 = vmatpush.msra.mxu0 %v1781
        %2315 = vmatpush.msra.mxu0 %v1777
        %2316 = vmatpush.msra.mxu0 %v1773
        %2317 = vmatpush.msra.mxu0 %v1769
        %2318 = vmatpush.msra.mxu0 %v1765
        %2319 = vmatpush.msra.mxu0 %v1761
        %2320 = vmatpush.msra.mxu0 %v1757
        %2321 = vmatpush.msra.mxu0 %v1753
        %2322 = vmatmul.f32.gmra.mxu0 %v1837
        %v2323 = vpop.f32.mrf.mxu0
        %v2324 = vadd.f32 %v2304, %v2323
        %2325 = vdwg.mxu0
        %2326 = vmatpush.msra.mxu0 %v1366
        %2327 = vmatpush.msra.mxu0 %v1362
        %2328 = vmatpush.msra.mxu0 %v1358
        %2329 = vmatpush.msra.mxu0 %v1354
        %2330 = vmatpush.msra.mxu0 %v1350
        %2331 = vmatpush.msra.mxu0 %v1346
        %2332 = vmatpush.msra.mxu0 %v1342
        %2333 = vmatpush.msra.mxu0 %v1338
        %2334 = vmatpush.msra.mxu0 %v1334
        %2335 = vmatpush.msra.mxu0 %v1330
        %2336 = vmatpush.msra.mxu0 %v1326
        %2337 = vmatpush.msra.mxu0 %v1322
        %2338 = vmatpush.msra.mxu0 %v1318
        %2339 = vmatpush.msra.mxu0 %v1314
        %2340 = vmatpush.msra.mxu0 %v1310
        %2341 = vmatpush.msra.mxu0 %v1306
        %2342 = vmatmul.f32.gmra.mxu0 %v1830
        %v2343 = vpop.f32.mrf.mxu0
        %v2344 = vadd.f32 %v1820, %v2343
        %2345 = vdwg.mxu0
        %2346 = vmatpush.msra.mxu0 %v1430
        %2347 = vmatpush.msra.mxu0 %v1426
        %2348 = vmatpush.msra.mxu0 %v1422
        %2349 = vmatpush.msra.mxu0 %v1418
        %2350 = vmatpush.msra.mxu0 %v1414
        %2351 = vmatpush.msra.mxu0 %v1410
        %2352 = vmatpush.msra.mxu0 %v1406
        %2353 = vmatpush.msra.mxu0 %v1402
        %2354 = vmatpush.msra.mxu0 %v1398
        %2355 = vmatpush.msra.mxu0 %v1394
        %2356 = vmatpush.msra.mxu0 %v1390
        %2357 = vmatpush.msra.mxu0 %v1386
        %2358 = vmatpush.msra.mxu0 %v1382
        %2359 = vmatpush.msra.mxu0 %v1378
        %2360 = vmatpush.msra.mxu0 %v1374
        %2361 = vmatpush.msra.mxu0 %v1370
        %2362 = vmatmul.f32.gmra.mxu0 %v1831
        %v2363 = vpop.f32.mrf.mxu0
        %v2364 = vadd.f32 %v2344, %v2363
        %2365 = vdwg.mxu0
        %2366 = vmatpush.msra.mxu0 %v1494
        %2367 = vmatpush.msra.mxu0 %v1490
        %2368 = vmatpush.msra.mxu0 %v1486
        %2369 = vmatpush.msra.mxu0 %v1482
        %2370 = vmatpush.msra.mxu0 %v1478
        %2371 = vmatpush.msra.mxu0 %v1474
        %2372 = vmatpush.msra.mxu0 %v1470
        %2373 = vmatpush.msra.mxu0 %v1466
        %2374 = vmatpush.msra.mxu0 %v1462
        %2375 = vmatpush.msra.mxu0 %v1458
        %2376 = vmatpush.msra.mxu0 %v1454
        %2377 = vmatpush.msra.mxu0 %v1450
        %2378 = vmatpush.msra.mxu0 %v1446
        %2379 = vmatpush.msra.mxu0 %v1442
        %2380 = vmatpush.msra.mxu0 %v1438
        %2381 = vmatpush.msra.mxu0 %v1434
        %2382 = vmatmul.f32.gmra.mxu0 %v1832
        %v2383 = vpop.f32.mrf.mxu0
        %v2384 = vadd.f32 %v2364, %v2383
        %2385 = vdwg.mxu0
        %2386 = vmatpush.msra.mxu0 %v1558
        %2387 = vmatpush.msra.mxu0 %v1554
        %2388 = vmatpush.msra.mxu0 %v1550
        %2389 = vmatpush.msra.mxu0 %v1546
        %2390 = vmatpush.msra.mxu0 %v1542
        %2391 = vmatpush.msra.mxu0 %v1538
        %2392 = vmatpush.msra.mxu0 %v1534
        %2393 = vmatpush.msra.mxu0 %v1530
        %2394 = vmatpush.msra.mxu0 %v1526
        %2395 = vmatpush.msra.mxu0 %v1522
        %2396 = vmatpush.msra.mxu0 %v1518
        %2397 = vmatpush.msra.mxu0 %v1514
        %2398 = vmatpush.msra.mxu0 %v1510
        %2399 = vmatpush.msra.mxu0 %v1506
        %2400 = vmatpush.msra.mxu0 %v1502
        %2401 = vmatpush.msra.mxu0 %v1498
        %2402 = vmatmul.f32.gmra.mxu0 %v1833
        %v2403 = vpop.f32.mrf.mxu0
        %v2404 = vadd.f32 %v2384, %v2403
        %2405 = vdwg.mxu0
        %2406 = vmatpush.msra.mxu0 %v1622
        %2407 = vmatpush.msra.mxu0 %v1618
        %2408 = vmatpush.msra.mxu0 %v1614
        %2409 = vmatpush.msra.mxu0 %v1610
        %2410 = vmatpush.msra.mxu0 %v1606
        %2411 = vmatpush.msra.mxu0 %v1602
        %2412 = vmatpush.msra.mxu0 %v1598
        %2413 = vmatpush.msra.mxu0 %v1594
        %2414 = vmatpush.msra.mxu0 %v1590
        %2415 = vmatpush.msra.mxu0 %v1586
        %2416 = vmatpush.msra.mxu0 %v1582
        %2417 = vmatpush.msra.mxu0 %v1578
        %2418 = vmatpush.msra.mxu0 %v1574
        %2419 = vmatpush.msra.mxu0 %v1570
        %2420 = vmatpush.msra.mxu0 %v1566
        %2421 = vmatpush.msra.mxu0 %v1562
        %2422 = vmatmul.f32.gmra.mxu0 %v1834
        %v2423 = vpop.f32.mrf.mxu0
        %v2424 = vadd.f32 %v2404, %v2423
        %2425 = vdwg.mxu0
        %2426 = vmatpush.msra.mxu0 %v1686
        %2427 = vmatpush.msra.mxu0 %v1682
        %2428 = vmatpush.msra.mxu0 %v1678
        %2429 = vmatpush.msra.mxu0 %v1674
        %2430 = vmatpush.msra.mxu0 %v1670
        %2431 = vmatpush.msra.mxu0 %v1666
        %2432 = vmatpush.msra.mxu0 %v1662
        %2433 = vmatpush.msra.mxu0 %v1658
        %2434 = vmatpush.msra.mxu0 %v1654
        %2435 = vmatpush.msra.mxu0 %v1650
        %2436 = vmatpush.msra.mxu0 %v1646
        %2437 = vmatpush.msra.mxu0 %v1642
        %2438 = vmatpush.msra.mxu0 %v1638
        %2439 = vmatpush.msra.mxu0 %v1634
        %2440 = vmatpush.msra.mxu0 %v1630
        %2441 = vmatpush.msra.mxu0 %v1626
        %2442 = vmatmul.f32.gmra.mxu0 %v1835
        %v2443 = vpop.f32.mrf.mxu0
        %v2444 = vadd.f32 %v2424, %v2443
        %2445 = vdwg.mxu0
        %2446 = vmatpush.msra.mxu0 %v1750
        %2447 = vmatpush.msra.mxu0 %v1746
        %2448 = vmatpush.msra.mxu0 %v1742
        %2449 = vmatpush.msra.mxu0 %v1738
        %2450 = vmatpush.msra.mxu0 %v1734
        %2451 = vmatpush.msra.mxu0 %v1730
        %2452 = vmatpush.msra.mxu0 %v1726
        %2453 = vmatpush.msra.mxu0 %v1722
        %2454 = vmatpush.msra.mxu0 %v1718
        %2455 = vmatpush.msra.mxu0 %v1714
        %2456 = vmatpush.msra.mxu0 %v1710
        %2457 = vmatpush.msra.mxu0 %v1706
        %2458 = vmatpush.msra.mxu0 %v1702
        %2459 = vmatpush.msra.mxu0 %v1698
        %2460 = vmatpush.msra.mxu0 %v1694
        %2461 = vmatpush.msra.mxu0 %v1690
        %2462 = vmatmul.f32.gmra.mxu0 %v1836
        %v2463 = vpop.f32.mrf.mxu0
        %v2464 = vadd.f32 %v2444, %v2463
        %2465 = vdwg.mxu0
        %2466 = vmatpush.msra.mxu0 %v1814
        %2467 = vmatpush.msra.mxu0 %v1810
        %2468 = vmatpush.msra.mxu0 %v1806
        %2469 = vmatpush.msra.mxu0 %v1802
        %2470 = vmatpush.msra.mxu0 %v1798
        %2471 = vmatpush.msra.mxu0 %v1794
        %2472 = vmatpush.msra.mxu0 %v1790
        %2473 = vmatpush.msra.mxu0 %v1786
        %2474 = vmatpush.msra.mxu0 %v1782
        %2475 = vmatpush.msra.mxu0 %v1778
        %2476 = vmatpush.msra.mxu0 %v1774
        %2477 = vmatpush.msra.mxu0 %v1770
        %2478 = vmatpush.msra.mxu0 %v1766
        %2479 = vmatpush.msra.mxu0 %v1762
        %2480 = vmatpush.msra.mxu0 %v1758
        %2481 = vmatpush.msra.mxu0 %v1754
        %2482 = vmatmul.f32.gmra.mxu0 %v1837
        %v2483 = vpop.f32.mrf.mxu0
        %v2484 = vadd.f32 %v2464, %v2483
        %2485 = vdwg.mxu0
        %v2486 = vmax.f32 %v2004, 0.0
        %v2487 = vmax.f32 %v2164, 0.0
        %v2488 = vmax.f32 %v2324, 0.0
        %v2489 = vmax.f32 %v2484, 0.0
        %v2490 = vld [vmem:[#allocation3] sm:$0x3]
        %v2491 = vld [vmem:[%s1293] sm:$0xff]
        %v2492 = vld [vmem:[%s1293 + $0x8] sm:$0xff]
        %v2493 = vld [vmem:[%s1293 + $0x10] sm:$0xff]
        %v2494 = vld [vmem:[%s1293 + $0x18] sm:$0xff]
        %v2495 = vld [vmem:[%s1293 + $0x20] sm:$0xff]
        %v2496 = vld [vmem:[%s1293 + $0x28] sm:$0xff]
        %v2497 = vld [vmem:[%s1293 + $0x30] sm:$0xff]
        %v2498 = vld [vmem:[%s1293 + $0x38] sm:$0xff]
        %v2499 = vld [vmem:[%s1293 + $0x40] sm:$0xff]
        %v2500 = vld [vmem:[%s1293 + $0x48] sm:$0xff]
        %v2501 = vld [vmem:[%s1293 + $0x50] sm:$0xff]
        %v2502 = vld [vmem:[%s1293 + $0x58] sm:$0xff]
        %v2503 = vld [vmem:[%s1293 + $0x60] sm:$0xff]
        %v2504 = vld [vmem:[%s1293 + $0x68] sm:$0xff]
        %v2505 = vld [vmem:[%s1293 + $0x70] sm:$0xff]
        %v2506 = vld [vmem:[%s1293 + $0x78] sm:$0xff]
        %v2507 = vld [vmem:[%s1293 + $0x80] sm:$0xff]
        %v2508 = vld [vmem:[%s1293 + $0x88] sm:$0xff]
        %v2509 = vld [vmem:[%s1293 + $0x90] sm:$0xff]
        %v2510 = vld [vmem:[%s1293 + $0x98] sm:$0xff]
        %v2511 = vld [vmem:[%s1293 + $0xa0] sm:$0xff]
        %v2512 = vld [vmem:[%s1293 + $0xa8] sm:$0xff]
        %v2513 = vld [vmem:[%s1293 + $0xb0] sm:$0xff]
        %v2514 = vld [vmem:[%s1293 + $0xb8] sm:$0xff]
        %v2515 = vld [vmem:[%s1293 + $0xc0] sm:$0xff]
        %v2516 = vld [vmem:[%s1293 + $0xc8] sm:$0xff]
        %v2517 = vld [vmem:[%s1293 + $0xd0] sm:$0xff]
        %v2518 = vld [vmem:[%s1293 + $0xd8] sm:$0xff]
        %v2519 = vld [vmem:[%s1293 + $0xe0] sm:$0xff]
        %v2520 = vld [vmem:[%s1293 + $0xe8] sm:$0xff]
        %v2521 = vld [vmem:[%s1293 + $0xf0] sm:$0xff]
        %v2522 = vld [vmem:[%s1293 + $0xf8] sm:$0xff]
        %v2523 = vld [vmem:[%s1293 + $0x100] sm:$0xff]
        %v2524 = vld [vmem:[%s1293 + $0x108] sm:$0xff]
        %v2525 = vld [vmem:[%s1293 + $0x110] sm:$0xff]
        %v2526 = vld [vmem:[%s1293 + $0x118] sm:$0xff]
        %v2527 = vld [vmem:[%s1293 + $0x120] sm:$0xff]
        %v2528 = vld [vmem:[%s1293 + $0x128] sm:$0xff]
        %v2529 = vld [vmem:[%s1293 + $0x130] sm:$0xff]
        %v2530 = vld [vmem:[%s1293 + $0x138] sm:$0xff]
        %v2531 = vld [vmem:[%s1293 + $0x140] sm:$0xff]
        %v2532 = vld [vmem:[%s1293 + $0x148] sm:$0xff]
        %v2533 = vld [vmem:[%s1293 + $0x150] sm:$0xff]
        %v2534 = vld [vmem:[%s1293 + $0x158] sm:$0xff]
        %v2535 = vld [vmem:[%s1293 + $0x160] sm:$0xff]
        %v2536 = vld [vmem:[%s1293 + $0x168] sm:$0xff]
        %v2537 = vld [vmem:[%s1293 + $0x170] sm:$0xff]
        %v2538 = vld [vmem:[%s1293 + $0x178] sm:$0xff]
        %v2539 = vld [vmem:[%s1293 + $0x180] sm:$0xff]
        %v2540 = vld [vmem:[%s1293 + $0x188] sm:$0xff]
        %v2541 = vld [vmem:[%s1293 + $0x190] sm:$0xff]
        %v2542 = vld [vmem:[%s1293 + $0x198] sm:$0xff]
        %v2543 = vld [vmem:[%s1293 + $0x1a0] sm:$0xff]
        %v2544 = vld [vmem:[%s1293 + $0x1a8] sm:$0xff]
        %v2545 = vld [vmem:[%s1293 + $0x1b0] sm:$0xff]
        %v2546 = vld [vmem:[%s1293 + $0x1b8] sm:$0xff]
        %v2547 = vld [vmem:[%s1293 + $0x1c0] sm:$0xff]
        %v2548 = vld [vmem:[%s1293 + $0x1c8] sm:$0xff]
        %v2549 = vld [vmem:[%s1293 + $0x1d0] sm:$0xff]
        %v2550 = vld [vmem:[%s1293 + $0x1d8] sm:$0xff]
        %v2551 = vld [vmem:[%s1293 + $0x1e0] sm:$0xff]
        %v2552 = vld [vmem:[%s1293 + $0x1e8] sm:$0xff]
        %v2553 = vld [vmem:[%s1293 + $0x1f0] sm:$0xff]
        %v2554 = vld [vmem:[%s1293 + $0x1f8] sm:$0xff]
        %2555 = vmatpush.msra.mxu0 %v2506
        %2556 = vmatpush.msra.mxu0 %v2505
        %2557 = vmatpush.msra.mxu0 %v2504
        %2558 = vmatpush.msra.mxu0 %v2503
        %2559 = vmatpush.msra.mxu0 %v2502
        %2560 = vmatpush.msra.mxu0 %v2501
        %2561 = vmatpush.msra.mxu0 %v2500
        %2562 = vmatpush.msra.mxu0 %v2499
        %2563 = vmatpush.msra.mxu0 %v2498
        %2564 = vmatpush.msra.mxu0 %v2497
        %2565 = vmatpush.msra.mxu0 %v2496
        %2566 = vmatpush.msra.mxu0 %v2495
        %2567 = vmatpush.msra.mxu0 %v2494
        %2568 = vmatpush.msra.mxu0 %v2493
        %2569 = vmatpush.msra.mxu0 %v2492
        %2570 = vmatpush.msra.mxu0 %v2491
        %2571 = vmatmul.f32.gmra.mxu0 %v2486
        %v2572 = vpop.f32.mrf.mxu0
        %v2573 = vadd.f32 0.0, %v2572
        %2574 = vdwg.mxu0
        %2575 = vmatpush.msra.mxu0 %v2522
        %2576 = vmatpush.msra.mxu0 %v2521
        %2577 = vmatpush.msra.mxu0 %v2520
        %2578 = vmatpush.msra.mxu0 %v2519
        %2579 = vmatpush.msra.mxu0 %v2518
        %2580 = vmatpush.msra.mxu0 %v2517
        %2581 = vmatpush.msra.mxu0 %v2516
        %2582 = vmatpush.msra.mxu0 %v2515
        %2583 = vmatpush.msra.mxu0 %v2514
        %2584 = vmatpush.msra.mxu0 %v2513
        %2585 = vmatpush.msra.mxu0 %v2512
        %2586 = vmatpush.msra.mxu0 %v2511
        %2587 = vmatpush.msra.mxu0 %v2510
        %2588 = vmatpush.msra.mxu0 %v2509
        %2589 = vmatpush.msra.mxu0 %v2508
        %2590 = vmatpush.msra.mxu0 %v2507
        %2591 = vmatmul.f32.gmra.mxu0 %v2487
        %v2592 = vpop.f32.mrf.mxu0
        %v2593 = vadd.f32 %v2573, %v2592
        %2594 = vdwg.mxu0
        %2595 = vmatpush.msra.mxu0 %v2538
        %2596 = vmatpush.msra.mxu0 %v2537
        %2597 = vmatpush.msra.mxu0 %v2536
        %2598 = vmatpush.msra.mxu0 %v2535
        %2599 = vmatpush.msra.mxu0 %v2534
        %2600 = vmatpush.msra.mxu0 %v2533
        %2601 = vmatpush.msra.mxu0 %v2532
        %2602 = vmatpush.msra.mxu0 %v2531
        %2603 = vmatpush.msra.mxu0 %v2530
        %2604 = vmatpush.msra.mxu0 %v2529
        %2605 = vmatpush.msra.mxu0 %v2528
        %2606 = vmatpush.msra.mxu0 %v2527
        %2607 = vmatpush.msra.mxu0 %v2526
        %2608 = vmatpush.msra.mxu0 %v2525
        %2609 = vmatpush.msra.mxu0 %v2524
        %2610 = vmatpush.msra.mxu0 %v2523
        %2611 = vmatmul.f32.gmra.mxu0 %v2488
        %v2612 = vpop.f32.mrf.mxu0
        %v2613 = vadd.f32 %v2593, %v2612
        %2614 = vdwg.mxu0
        %2615 = vmatpush.msra.mxu0 %v2554
        %2616 = vmatpush.msra.mxu0 %v2553
        %2617 = vmatpush.msra.mxu0 %v2552
        %2618 = vmatpush.msra.mxu0 %v2551
        %2619 = vmatpush.msra.mxu0 %v2550
        %2620 = vmatpush.msra.mxu0 %v2549
        %2621 = vmatpush.msra.mxu0 %v2548
        %2622 = vmatpush.msra.mxu0 %v2547
        %2623 = vmatpush.msra.mxu0 %v2546
        %2624 = vmatpush.msra.mxu0 %v2545
        %2625 = vmatpush.msra.mxu0 %v2544
        %2626 = vmatpush.msra.mxu0 %v2543
        %2627 = vmatpush.msra.mxu0 %v2542
        %2628 = vmatpush.msra.mxu0 %v2541
        %2629 = vmatpush.msra.mxu0 %v2540
        %2630 = vmatpush.msra.mxu0 %v2539
        %2631 = vmatmul.f32.gmra.mxu0 %v2489
        %v2632 = vpop.f32.mrf.mxu0
        %v2633 = vadd.f32 %v2613, %v2632
        %2634 = vdwg.mxu0
        %v2635 = vadd.f32 %v2490, %v2633
        %vm2636 = vcmask 74752
        %2637 = vst.msk [vmem:[#allocation3] sm:$0x3] %vm2636, %v2635
        %p2638 = scmp.eq.s32.totalorder %s17, 3
        // Predicated region
        $region68: #{net_forward.5} parent=58 // pred_check
          %p2639 = pneg %p2638
        $region69: #{net_forward.5} parent=58 // pred_check_branch
          %2641 = sbr.rel (%p2639) target = $region71
        $region70: #{net_forward.5} parent=58 // pred_region
          %v2642 = vld [vmem:[#allocation3] sm:$0x3]
          %v2643 = vld [vmem:[%s4] sm:$0x1]
          %v2645 = vperm.slane %v2643, 0
          %v2647 = vadd.f32 %v2642, %v2645
          %2648 = vst.msk [vmem:[#allocation3] sm:$0x3] %vm2636, %v2647
        $region71: #{net_forward.5} parent=58 // pred_fallthru
          _
        // Predicated region
        $region72: #{net_forward.5} parent=58 // pred_check
          %p2649 = pneg %p150
        $region73: #{net_forward.5} parent=58 // pred_check_branch
          %2651 = sbr.rel (%p2649) target = $region75
        $region74: #{net_forward.5} parent=58 // pred_region
          %2653 = vsyncadd [#allocation4], 0
          %s2655 = sshll.u32 [#allocation3], 4
          %s2656 = int_to_ptr.vmem [resolvable:$true] %s2655
          %s2657 = sshll.u32 %s5, 4
          %s2658 = int_to_ptr.hbm [resolvable:$true] %s2657
          %2660 = dma.vmem_to_hbm [thread:$0]  %s2656, 32, %s2658, [#allocation4]
        $region75: #{net_forward.5} parent=58 // pred_fallthru
          _
        // Predicated region
        $region76: #{net_forward.5} parent=58 // pred_check
          %p2661 = pneg %p150
        $region77: #{net_forward.5} parent=58 // pred_check_branch
          %2663 = sbr.rel (%p2661) target = $region79
        $region78: #{net_forward.5} parent=58 // pred_region
          %2665 = dma.done [#allocation4], 32
        $region79: #{net_forward.5} parent=58 // pred_fallthru
          _
      $region59: #{net_forward.5} parent=5 // pred_fallthru
        _
      %p2666 = scmp.le.s32.totalorder 2, %s12
      // Predicated region
      $region80: #{net_forward.5} parent=5 // pred_check
        %p2667 = pneg %p2666
      $region81: #{net_forward.5} parent=5 // pred_check_branch
        %2669 = sbr.rel (%p2667) target = $region83
      $region82: #{net_forward.5} parent=5 // pred_region
        %s2670 = ssub.s32 %s12, 2
      $region83: #{net_forward.5} parent=5 // pred_fallthru
        _
    $region6: #{net_forward.5} parent=1 // loop_footer
      %s16 = sadd.s32 1, %s12
    $region7: #{net_forward.5} parent=1 // loop_footer_branch
      %11 = sbr.rel target = $region3
    $region8: #{net_forward.5} parent=1 // loop_exit
      _
    %2671 = vsyncpa [#allocation4], 1
    %s2672 = scalar_lea.sflag [#allocation4], 1
    %2673 = vsyncpa %s2672, 1

</llo_original>
